<compile_context>
chip_gen: v7x
topology: tpu7x:2x2x1
jax: 0.10.0
libtpu: 0.0.40
codegen_flags: <defaults>
</compile_context>

<pallas_src>
import functools
from math import exp

import jax
import jax.numpy as jnp
from jax.experimental import pallas as pl
from jax.experimental.pallas import tpu as pltpu


def gaussian_1d(window_size: int, sigma: float):
    """Same as the PyTorch `gaussian` helper: normalized 1D Gaussian taps."""
    g = [exp(-((x - window_size // 2) ** 2) / float(2 * sigma ** 2))
         for x in range(window_size)]
    s = sum(g)
    return [v / s for v in g]


def _toeplitz_band(n: int, gauss, pad: int):
    """T[a, b] = g[b - a + pad] for |b - a| <= pad else 0.  Shape (n, n) f32.

    Applying T on the left (T @ x) equals the 1D zero-padded Gaussian
    cross-correlation along the first axis of x.
    """
    g = jnp.asarray(gauss, dtype=jnp.float32)
    idx = jnp.arange(n)
    diff = idx[None, :] - idx[:, None] + pad
    valid = (diff >= 0) & (diff < len(gauss))
    return jnp.where(valid, g[jnp.clip(diff, 0, len(gauss) - 1)], 0.0)


def _ssim_kernel(img1_ref, img2_ref, gv_ref, gh_ref, omap_ref, *, C):
    """One grid step = one (batch, channel) plane.

    img1_ref / img2_ref : (H, W) f32  un-padded channel plane
    gv_ref              : (H, H) f32  row-blur banded Toeplitz operator
    gh_ref              : (W, W) f32  col-blur banded Toeplitz operator
    omap_ref            : (H, W) f32  channel-mean SSIM map, accumulated over c
    """
    c = pl.program_id(1)

    x1 = img1_ref[...]
    x2 = img2_ref[...]
    gv = gv_ref[...]
    gh = gh_ref[...]

    def blur(p):
        # Separable zero-padded Gaussian blur as two MXU matmuls.
        t = jnp.dot(gv, p, preferred_element_type=jnp.float32,
                    precision=jax.lax.Precision.HIGHEST)
        return jnp.dot(t, gh, preferred_element_type=jnp.float32,
                       precision=jax.lax.Precision.HIGHEST)

    mu1 = blur(x1)
    mu2 = blur(x2)
    m11 = blur(x1 * x1)
    m22 = blur(x2 * x2)
    m12 = blur(x1 * x2)

    mu1_sq = mu1 * mu1
    mu2_sq = mu2 * mu2
    mu1_mu2 = mu1 * mu2
    sigma1_sq = m11 - mu1_sq
    sigma2_sq = m22 - mu2_sq
    sigma12 = m12 - mu1_mu2

    C1 = 0.01 ** 2
    C2 = 0.03 ** 2
    ssim_map = ((2.0 * mu1_mu2 + C1) * (2.0 * sigma12 + C2)) / (
        (mu1_sq + mu2_sq + C1) * (sigma1_sq + sigma2_sq + C2))

    # Channel-mean accumulator held in the VMEM-resident output block.
    @pl.when(c == 0)
    def _():
        omap_ref[...] = jnp.zeros_like(omap_ref)

    omap_ref[...] += ssim_map

    @pl.when(c == C - 1)
    def _():
        omap_ref[...] = omap_ref[...] * (1.0 / C)


def ssim_pallas(img1, img2, window_size: int = 11, sigma: float = 1.5):
    """SSIM forward (size_average=True path of the PyTorch module)."""
    assert img1.shape == img2.shape
    B, C, H, W = img1.shape
    pad = window_size // 2
    gauss = gaussian_1d(window_size, sigma)

    img1 = img1.astype(jnp.float32)
    img2 = img2.astype(jnp.float32)

    # Zero-padded depthwise Gaussian conv == gv @ x @ gh with banded Toeplitz
    # operators (the Gaussian is symmetric; matrices built explicitly anyway).
    gv = _toeplitz_band(H, gauss, pad)       # rows: out = gv @ x
    gh = _toeplitz_band(W, gauss, pad).T     # cols: out = x @ gh

    kernel = functools.partial(_ssim_kernel, C=C)

    # VMEM budget: double-buffered input planes + resident Gaussian operators
    # + output block + blurred planes / elementwise temps, with headroom.
    plane_bytes = H * W * 4
    vmem_need = (4 * plane_bytes
                 + 2 * (H * H + W * W) * 4
                 + 2 * plane_bytes
                 + 16 * plane_bytes)
    vmem_limit = int(min(max(2 * vmem_need, 16 * 1024 * 1024),
                         48 * 1024 * 1024))  # safe on v5e/v6e/v7x

    omap = pl.pallas_call(
        kernel,
        out_shape=jax.ShapeDtypeStruct((B, 1, H, W), jnp.float32),
        grid=(B, C),
        in_specs=[
            pl.BlockSpec((None, None, H, W), lambda b, c: (b, c, 0, 0)),
            pl.BlockSpec((None, None, H, W), lambda b, c: (b, c, 0, 0)),
            pl.BlockSpec((H, H), lambda b, c: (0, 0)),
            pl.BlockSpec((W, W), lambda b, c: (0, 0)),
        ],
        out_specs=pl.BlockSpec((None, None, H, W), lambda b, c: (b, 0, 0, 0)),
        compiler_params=pltpu.CompilerParams(
            dimension_semantics=("parallel", "arbitrary"),
            vmem_limit_bytes=vmem_limit,
        ),
    )(img1, img2, gv, gh)

    # size_average=True scalar: global mean of the channel-averaged map
    # (equal-sized batches -> identical to .view(B,-1).mean(-1).mean()).
    mean_ssim = jnp.mean(omap)

    # TODO(synk): size_average=False branch (prints 'no running', returns
    # per-batch means) is not implemented; only the default path is reproduced.
    return mean_ssim, omap


if __name__ == "__main__":
    key = jax.random.PRNGKey(0)
    k1, k2 = jax.random.split(key)
    B, C, H, W = 2, 4, 16, 16
    img1 = jax.random.uniform(k1, (B, C, H, W), dtype=jnp.float32)
    img2 = jax.random.uniform(k2, (B, C, H, W), dtype=jnp.float32)

    mean_ssim, ssim_map = ssim_pallas(img1, img2)
    jax.block_until_ready((mean_ssim, ssim_map))

    assert ssim_map.shape == (B, 1, H, W)
    assert mean_ssim.shape == ()
    print("KERNEL_OK")
</pallas_src>

<mosaic_0001>
module attributes {stable_mosaic.version = 11 : i64} {
  func.func @_ssim_kernel(%arg0: i32, %arg1: i32, %arg2: memref<1x1x16x16xf32, #tpu.memory_space<vmem>>, %arg3: memref<1x1x16x16xf32, #tpu.memory_space<vmem>>, %arg4: memref<16x16xf32, #tpu.memory_space<vmem>>, %arg5: memref<16x16xf32, #tpu.memory_space<vmem>>, %arg6: memref<1x1x16x16xf32, #tpu.memory_space<vmem>>) attributes {dimension_semantics = [#tpu.dimension_semantics<parallel>, #tpu.dimension_semantics<arbitrary>], iteration_bounds = array<i64: 2, 4>, scalar_prefetch = 0 : i64, scratch_operands = 0 : i64, tpu.core_type = #tpu.core_type<tc>, window_params = [{transform_indices = @transform_0, window_bounds = array<i64: 1, 1, 16, 16>}, {transform_indices = @transform_1, window_bounds = array<i64: 1, 1, 16, 16>}, {pipeline_mode = #tpu.pipeline_mode<synchronous>, transform_indices = @transform_2, window_bounds = array<i64: 16, 16>}, {pipeline_mode = #tpu.pipeline_mode<synchronous>, transform_indices = @transform_3, window_bounds = array<i64: 16, 16>}, {transform_indices = @transform_4, window_bounds = array<i64: 1, 1, 16, 16>}]} {
    %c0 = arith.constant 0 : index
    %c0_0 = arith.constant 0 : index
    %c0_1 = arith.constant 0 : index
    %c0_2 = arith.constant 0 : index
    %0 = vector.load %arg2[%c0, %c0_0, %c0_1, %c0_2] : memref<1x1x16x16xf32, #tpu.memory_space<vmem>>, vector<1x1x16x16xf32>
    %1 = vector.shape_cast %0 : vector<1x1x16x16xf32> to vector<16x16xf32>
    %c0_3 = arith.constant 0 : index
    %c0_4 = arith.constant 0 : index
    %c0_5 = arith.constant 0 : index
    %c0_6 = arith.constant 0 : index
    %2 = vector.load %arg3[%c0_3, %c0_4, %c0_5, %c0_6] : memref<1x1x16x16xf32, #tpu.memory_space<vmem>>, vector<1x1x16x16xf32>
    %3 = vector.shape_cast %2 : vector<1x1x16x16xf32> to vector<16x16xf32>
    %c0_7 = arith.constant 0 : index
    %c0_8 = arith.constant 0 : index
    %4 = vector.load %arg4[%c0_7, %c0_8] : memref<16x16xf32, #tpu.memory_space<vmem>>, vector<16x16xf32>
    %c0_9 = arith.constant 0 : index
    %c0_10 = arith.constant 0 : index
    %5 = vector.load %arg5[%c0_9, %c0_10] : memref<16x16xf32, #tpu.memory_space<vmem>>, vector<16x16xf32>
    %cst = arith.constant dense<0.000000e+00> : vector<16x16xf32>
    %6 = tpu.matmul %4, %1, %cst {dimension_numbers = #tpu.dot_dimension_numbers<[1], [0], [0], [1], [0, 0, 1, 1], [], []>, precision = #tpu.contract_precision<fp32>} : vector<16x16xf32>, vector<16x16xf32>, vector<16x16xf32> -> vector<16x16xf32>
    %cst_11 = arith.constant dense<0.000000e+00> : vector<16x16xf32>
    %7 = tpu.matmul %6, %5, %cst_11 {dimension_numbers = #tpu.dot_dimension_numbers<[1], [0], [0], [1], [0, 0, 1, 1], [], []>, precision = #tpu.contract_precision<fp32>} : vector<16x16xf32>, vector<16x16xf32>, vector<16x16xf32> -> vector<16x16xf32>
    %cst_12 = arith.constant dense<0.000000e+00> : vector<16x16xf32>
    %8 = tpu.matmul %4, %3, %cst_12 {dimension_numbers = #tpu.dot_dimension_numbers<[1], [0], [0], [1], [0, 0, 1, 1], [], []>, precision = #tpu.contract_precision<fp32>} : vector<16x16xf32>, vector<16x16xf32>, vector<16x16xf32> -> vector<16x16xf32>
    %cst_13 = arith.constant dense<0.000000e+00> : vector<16x16xf32>
    %9 = tpu.matmul %8, %5, %cst_13 {dimension_numbers = #tpu.dot_dimension_numbers<[1], [0], [0], [1], [0, 0, 1, 1], [], []>, precision = #tpu.contract_precision<fp32>} : vector<16x16xf32>, vector<16x16xf32>, vector<16x16xf32> -> vector<16x16xf32>
    %10 = arith.mulf %1, %1 : vector<16x16xf32>
    %cst_14 = arith.constant dense<0.000000e+00> : vector<16x16xf32>
    %11 = tpu.matmul %4, %10, %cst_14 {dimension_numbers = #tpu.dot_dimension_numbers<[1], [0], [0], [1], [0, 0, 1, 1], [], []>, precision = #tpu.contract_precision<fp32>} : vector<16x16xf32>, vector<16x16xf32>, vector<16x16xf32> -> vector<16x16xf32>
    %cst_15 = arith.constant dense<0.000000e+00> : vector<16x16xf32>
    %12 = tpu.matmul %11, %5, %cst_15 {dimension_numbers = #tpu.dot_dimension_numbers<[1], [0], [0], [1], [0, 0, 1, 1], [], []>, precision = #tpu.contract_precision<fp32>} : vector<16x16xf32>, vector<16x16xf32>, vector<16x16xf32> -> vector<16x16xf32>
    %13 = arith.mulf %3, %3 : vector<16x16xf32>
    %cst_16 = arith.constant dense<0.000000e+00> : vector<16x16xf32>
    %14 = tpu.matmul %4, %13, %cst_16 {dimension_numbers = #tpu.dot_dimension_numbers<[1], [0], [0], [1], [0, 0, 1, 1], [], []>, precision = #tpu.contract_precision<fp32>} : vector<16x16xf32>, vector<16x16xf32>, vector<16x16xf32> -> vector<16x16xf32>
    %cst_17 = arith.constant dense<0.000000e+00> : vector<16x16xf32>
    %15 = tpu.matmul %14, %5, %cst_17 {dimension_numbers = #tpu.dot_dimension_numbers<[1], [0], [0], [1], [0, 0, 1, 1], [], []>, precision = #tpu.contract_precision<fp32>} : vector<16x16xf32>, vector<16x16xf32>, vector<16x16xf32> -> vector<16x16xf32>
    %16 = arith.mulf %1, %3 : vector<16x16xf32>
    %cst_18 = arith.constant dense<0.000000e+00> : vector<16x16xf32>
    %17 = tpu.matmul %4, %16, %cst_18 {dimension_numbers = #tpu.dot_dimension_numbers<[1], [0], [0], [1], [0, 0, 1, 1], [], []>, precision = #tpu.contract_precision<fp32>} : vector<16x16xf32>, vector<16x16xf32>, vector<16x16xf32> -> vector<16x16xf32>
    %cst_19 = arith.constant dense<0.000000e+00> : vector<16x16xf32>
    %18 = tpu.matmul %17, %5, %cst_19 {dimension_numbers = #tpu.dot_dimension_numbers<[1], [0], [0], [1], [0, 0, 1, 1], [], []>, precision = #tpu.contract_precision<fp32>} : vector<16x16xf32>, vector<16x16xf32>, vector<16x16xf32> -> vector<16x16xf32>
    %19 = arith.mulf %7, %7 : vector<16x16xf32>
    %20 = arith.mulf %9, %9 : vector<16x16xf32>
    %21 = arith.mulf %7, %9 : vector<16x16xf32>
    %22 = arith.subf %12, %19 : vector<16x16xf32>
    %23 = arith.subf %15, %20 : vector<16x16xf32>
    %24 = arith.subf %18, %21 : vector<16x16xf32>
    %cst_20 = arith.constant 2.000000e+00 : f32
    %25 = vector.broadcast %cst_20 : f32 to vector<16x16xf32>
    %26 = arith.mulf %25, %21 : vector<16x16xf32>
    %cst_21 = arith.constant 9.99999974E-5 : f32
    %27 = vector.broadcast %cst_21 : f32 to vector<16x16xf32>
    %28 = arith.addf %26, %27 : vector<16x16xf32>
    %cst_22 = arith.constant 2.000000e+00 : f32
    %29 = vector.broadcast %cst_22 : f32 to vector<16x16xf32>
    %30 = arith.mulf %29, %24 : vector<16x16xf32>
    %cst_23 = arith.constant 8.99999984E-4 : f32
    %31 = vector.broadcast %cst_23 : f32 to vector<16x16xf32>
    %32 = arith.addf %30, %31 : vector<16x16xf32>
    %33 = arith.mulf %28, %32 : vector<16x16xf32>
    %34 = arith.addf %19, %20 : vector<16x16xf32>
    %cst_24 = arith.constant 9.99999974E-5 : f32
    %35 = vector.broadcast %cst_24 : f32 to vector<16x16xf32>
    %36 = arith.addf %34, %35 : vector<16x16xf32>
    %37 = arith.addf %22, %23 : vector<16x16xf32>
    %cst_25 = arith.constant 8.99999984E-4 : f32
    %38 = vector.broadcast %cst_25 : f32 to vector<16x16xf32>
    %39 = arith.addf %37, %38 : vector<16x16xf32>
    %40 = arith.mulf %36, %39 : vector<16x16xf32>
    %41 = arith.divf %33, %40 : vector<16x16xf32>
    %c0_i32 = arith.constant 0 : i32
    %42 = arith.cmpi eq, %arg1, %c0_i32 : i32
    %43 = arith.extui %42 : i1 to i32
    %c0_i32_26 = arith.constant 0 : i32
    %44 = arith.cmpi ne, %43, %c0_i32_26 : i32
    scf.if %44 {
      %cst_36 = arith.constant 0.000000e+00 : f32
      %54 = vector.broadcast %cst_36 : f32 to vector<16x16xf32>
      %c0_37 = arith.constant 0 : index
      %c0_38 = arith.constant 0 : index
      %c0_39 = arith.constant 0 : index
      %c0_40 = arith.constant 0 : index
      %55 = vector.load %arg6[%c0_37, %c0_38, %c0_39, %c0_40] : memref<1x1x16x16xf32, #tpu.memory_space<vmem>>, vector<1x1x16x16xf32>
      %56 = vector.shape_cast %55 : vector<1x1x16x16xf32> to vector<16x16xf32>
      %57 = vector.shape_cast %54 : vector<16x16xf32> to vector<1x1x16x16xf32>
      tpu.vector_store %arg6[%c0_37, %c0_38, %c0_39, %c0_40], %57 {strides = array<i32>} : memref<1x1x16x16xf32, #tpu.memory_space<vmem>>, vector<1x1x16x16xf32>,
    } else {
    }
    %c0_27 = arith.constant 0 : index
    %c0_28 = arith.constant 0 : index
    %c0_29 = arith.constant 0 : index
    %c0_30 = arith.constant 0 : index
    %45 = vector.load %arg6[%c0_27, %c0_28, %c0_29, %c0_30] : memref<1x1x16x16xf32, #tpu.memory_space<vmem>>, vector<1x1x16x16xf32>
    %46 = vector.shape_cast %45 : vector<1x1x16x16xf32> to vector<16x16xf32>
    %47 = arith.addf %46, %41 : vector<16x16xf32>
    %c0_31 = arith.constant 0 : index
    %c0_32 = arith.constant 0 : index
    %c0_33 = arith.constant 0 : index
    %c0_34 = arith.constant 0 : index
    %48 = vector.load %arg6[%c0_31, %c0_32, %c0_33, %c0_34] : memref<1x1x16x16xf32, #tpu.memory_space<vmem>>, vector<1x1x16x16xf32>
    %49 = vector.shape_cast %48 : vector<1x1x16x16xf32> to vector<16x16xf32>
    %50 = vector.shape_cast %47 : vector<16x16xf32> to vector<1x1x16x16xf32>
    tpu.vector_store %arg6[%c0_31, %c0_32, %c0_33, %c0_34], %50 {strides = array<i32>} : memref<1x1x16x16xf32, #tpu.memory_space<vmem>>, vector<1x1x16x16xf32>,
    %c3_i32 = arith.constant 3 : i32
    %51 = arith.cmpi eq, %arg1, %c3_i32 : i32
    %52 = arith.extui %51 : i1 to i32
    %c0_i32_35 = arith.constant 0 : i32
    %53 = arith.cmpi ne, %52, %c0_i32_35 : i32
    scf.if %53 {
      %c0_36 = arith.constant 0 : index
      %c0_37 = arith.constant 0 : index
      %c0_38 = arith.constant 0 : index
      %c0_39 = arith.constant 0 : index
      %54 = vector.load %arg6[%c0_36, %c0_37, %c0_38, %c0_39] : memref<1x1x16x16xf32, #tpu.memory_space<vmem>>, vector<1x1x16x16xf32>
      %55 = vector.shape_cast %54 : vector<1x1x16x16xf32> to vector<16x16xf32>
      %cst_40 = arith.constant 2.500000e-01 : f32
      %56 = vector.broadcast %cst_40 : f32 to vector<16x16xf32>
      %57 = arith.mulf %55, %56 : vector<16x16xf32>
      %c0_41 = arith.constant 0 : index
      %c0_42 = arith.constant 0 : index
      %c0_43 = arith.constant 0 : index
      %c0_44 = arith.constant 0 : index
      %58 = vector.load %arg6[%c0_41, %c0_42, %c0_43, %c0_44] : memref<1x1x16x16xf32, #tpu.memory_space<vmem>>, vector<1x1x16x16xf32>
      %59 = vector.shape_cast %58 : vector<1x1x16x16xf32> to vector<16x16xf32>
      %60 = vector.shape_cast %57 : vector<16x16xf32> to vector<1x1x16x16xf32>
      tpu.vector_store %arg6[%c0_41, %c0_42, %c0_43, %c0_44], %60 {strides = array<i32>} : memref<1x1x16x16xf32, #tpu.memory_space<vmem>>, vector<1x1x16x16xf32>,
    } else {
    }
    return
  }
  func.func @transform_0(%arg0: i32, %arg1: i32) -> (i32, i32, i32, i32) {
    %c0_i32 = arith.constant 0 : i32
    %c0_i32_0 = arith.constant 0 : i32
    %c0_i32_1 = arith.constant 0 : i32
    return %arg0, %arg1, %c0_i32, %c0_i32_0 : i32, i32, i32, i32
  }
  func.func @transform_1(%arg0: i32, %arg1: i32) -> (i32, i32, i32, i32) {
    %c0_i32 = arith.constant 0 : i32
    %c0_i32_0 = arith.constant 0 : i32
    %c0_i32_1 = arith.constant 0 : i32
    return %arg0, %arg1, %c0_i32, %c0_i32_0 : i32, i32, i32, i32
  }
  func.func @transform_2(%arg0: i32, %arg1: i32) -> (i32, i32) {
    %c0_i32 = arith.constant 0 : i32
    %c0_i32_0 = arith.constant 0 : i32
    %c0_i32_1 = arith.constant 0 : i32
    return %c0_i32, %c0_i32_0 : i32, i32
  }
  func.func @transform_3(%arg0: i32, %arg1: i32) -> (i32, i32) {
    %c0_i32 = arith.constant 0 : i32
    %c0_i32_0 = arith.constant 0 : i32
    %c0_i32_1 = arith.constant 0 : i32
    return %c0_i32, %c0_i32_0 : i32, i32
  }
  func.func @transform_4(%arg0: i32, %arg1: i32) -> (i32, i32, i32, i32) {
    %c0_i32 = arith.constant 0 : i32
    %c0_i32_0 = arith.constant 0 : i32
    %c0_i32_1 = arith.constant 0 : i32
    %c0_i32_2 = arith.constant 0 : i32
    return %arg0, %c0_i32, %c0_i32_0, %c0_i32_1 : i32, i32, i32, i32
  }
}

</mosaic_0001>

<llo_original>
// kernel: tpu_custom_call.1
$region0: #{tpu_custom_call.1}
  #allocation0 [shape = 'u32[]', space=smem, size = 0x4, offset = 0x4, fixed_abs, tag = 'smem constant byte address 0x4 - core index']
  #allocation1 [shape = 'u32[144,128]{1,0:T(1,128)}', space=vmem, size = 0x12000, scoped, tag = 'internal scratch']
  %s0 = inlined_call_operand.hbm [shape: f32[2,4,16,16], index: 0, kind: input, shape index: {}]
  %s1 = inlined_call_operand.hbm [shape: f32[2,4,16,16], index: 1, kind: input, shape index: {}]
  %s2 = inlined_call_operand.hbm [shape: f32[16,16], index: 2, kind: input, shape index: {}]
  %s3 = inlined_call_operand.hbm [shape: f32[16,16], index: 3, kind: input, shape index: {}]
  %s4 = inlined_call_operand.hbm [shape: f32[2,1,16,16], index: 4, kind: output, shape index: {}]
  %s5 = sld [smem:[#allocation0]]
  $region73: #{tpu_custom_call.1} parent=0
    _
  %s7 = ssub.s32 1, %s5
  %s8 = scalar_select 0, %s7, %s5
  $region1: #{tpu_custom_call.1} parent=0
    #allocation2 [shape = 'u8[16384]{0}', space=vmem, size = 0x4000, scoped, tag = 'input window, operand 0']
    #allocation3 [shape = 's32[2]{0}', space=sflag, size = 0x8, scoped, tag = 'scoped memory for tpu_custom_call.1']
    #allocation4 [shape = 's32[2]{0}', space=sflag, size = 0x8, scoped, tag = 'scoped memory for tpu_custom_call.1']
    #allocation5 [shape = 'u8[16384]{0}', space=vmem, size = 0x4000, scoped, tag = 'input window, operand 1']
    #allocation6 [shape = 's32[2]{0}', space=sflag, size = 0x8, scoped, tag = 'scoped memory for tpu_custom_call.1']
    #allocation7 [shape = 'u8[8192]{0}', space=vmem, size = 0x2000, scoped, tag = 'input window, operand 2, single buffered']
    #allocation8 [shape = 'u8[8192]{0}', space=vmem, size = 0x2000, scoped, tag = 'input window, operand 3, single buffered']
    #allocation9 [shape = 's32[1]{0}', space=sflag, size = 0x4, scoped, tag = 'scoped memory for tpu_custom_call.1']
    #allocation10 [shape = 'u8[16384]{0}', space=vmem, size = 0x4000, scoped, tag = 'output window, operand 0']
    %9 = vsyncpa [#allocation3], 0
    %s10 = scalar_lea.sflag [#allocation3], 1
    %11 = vsyncpa %s10, 0
    %12 = vsyncpa [#allocation6], 0
    %s13 = scalar_lea.sflag [#allocation6], 1
    %14 = vsyncpa %s13, 0
    %15 = vsyncpa [#allocation9], 0
    %16 = vsyncpa [#allocation4], 0
    %s17 = scalar_lea.sflag [#allocation4], 1
    %18 = vsyncpa %s17, 0
    loop: start=0, step=1, limit=10
    $region2: #{tpu_custom_call.1} parent=1 // loop_pre_header
      _
    $region3: #{tpu_custom_call.1} parent=1 // loop_header
      %s20 = sphi 0, %s24
      %p21 = scmp.ge.s32.totalorder %s20, 10
      %s27 = sphi 0, %s39
      %s28 = sphi 0, %s35
      %s29 = sphi 0, %s27
      %s30 = sphi 0, %s28
      %s31 = sphi 0, %s29
      %s32 = sphi 0, %s30
      %s44 = sphi 0, %s46
      %s47 = sphi 0, %s44
      %s48 = sphi 0, %s47
      %s64 = sphi 0, %s48
      %s72 = sphi 0, %s74
      %s75 = sphi 0, %s72
      %s76 = sphi 0, %s75
      %s92 = sphi 0, %s76
      %s96 = sphi 0, %s96
      %s98 = sphi 0, %s96
      %s99 = sphi 0, %s98
      %s113 = sphi 0, %s99
      %s117 = sphi 0, %s117
      %s119 = sphi 0, %s117
      %s120 = sphi 0, %s119
      %s134 = sphi 0, %s120
      %s140 = sphi 0, %s142
      %s143 = sphi 0, %s140
      %s144 = sphi 0, %s143
      %s160 = sphi 0, %s144
    $region4: #{tpu_custom_call.1} parent=1 // loop_header_branch
      %23 = sbr.rel (%p21) target = $region8
    $region5: #{tpu_custom_call.1} parent=1 // loop_body
      %s25 = ssub.s32 %s20, 1
      %s26 = ssub.s32 %s20, 2
      %s33 = sadd.s32 1, %s28
      %p34 = scmp.ge.s32.totalorder %s33, 4
      %s35 = scalar_select %p34, 0, %s33
      %s36 = sadd.s32 1, %s27
      %s37 = scalar_select %p34, %s36, %s27
      %p38 = scmp.ge.s32.totalorder %s37, 2
      %s39 = scalar_select %p38, 0, %s37
      %s40 = ssub.s32 %s27, %s39
      %s41 = ssub.s32 %s28, %s35
      %s42 = sor.u32 %s40, %s41
      %p43 = scmp.eq.s32.totalorder %s42, 0
      %s45 = sadd.s32 %s44, 1
      %s46 = scalar_select %p43, %s44, %s45
      %p49 = pneg %p43
      %p50 = scmp.eq.s32.totalorder %s20, 7
      %p51 = por %p49, %p50
      %p52 = scmp.ne.s32.totalorder %s44, %s47
      %p53 = scmp.eq.s32.totalorder %s20, 0
      %p54 = por %p52, %p53
      %p55 = scmp.ne.s32.totalorder %s44, %s47
      %p56 = scmp.eq.s32.totalorder %s25, 7
      %p57 = por %p55, %p56
      %p58 = scmp.ne.s32.totalorder %s47, %s48
      %p59 = scmp.eq.s32.totalorder %s25, 0
      %p60 = por %p58, %p59
      %p61 = scmp.ne.s32.totalorder %s47, %s48
      %p62 = scmp.eq.s32.totalorder %s26, 7
      %p63 = por %p61, %p62
      %p65 = scmp.ne.s32.totalorder %s48, %s64
      %p66 = scmp.eq.s32.totalorder %s26, 0
      %p67 = por %p65, %p66
      %s68 = ssub.s32 %s27, %s39
      %s69 = ssub.s32 %s28, %s35
      %s70 = sor.u32 %s68, %s69
      %p71 = scmp.eq.s32.totalorder %s70, 0
      %s73 = sadd.s32 %s72, 1
      %s74 = scalar_select %p71, %s72, %s73
      %p77 = pneg %p71
      %p78 = scmp.eq.s32.totalorder %s20, 7
      %p79 = por %p77, %p78
      %p80 = scmp.ne.s32.totalorder %s72, %s75
      %p81 = scmp.eq.s32.totalorder %s20, 0
      %p82 = por %p80, %p81
      %p83 = scmp.ne.s32.totalorder %s72, %s75
      %p84 = scmp.eq.s32.totalorder %s25, 7
      %p85 = por %p83, %p84
      %p86 = scmp.ne.s32.totalorder %s75, %s76
      %p87 = scmp.eq.s32.totalorder %s25, 0
      %p88 = por %p86, %p87
      %p89 = scmp.ne.s32.totalorder %s75, %s76
      %p90 = scmp.eq.s32.totalorder %s26, 7
      %p91 = por %p89, %p90
      %p93 = scmp.ne.s32.totalorder %s76, %s92
      %p94 = scmp.eq.s32.totalorder %s26, 0
      %p95 = por %p93, %p94
      %s97 = sadd.s32 %s96, 1
      %p100 = scmp.eq.s32.totalorder %s20, 7
      %p101 = scmp.ne.s32.totalorder %s96, %s98
      %p102 = scmp.eq.s32.totalorder %s20, 0
      %p103 = por %p101, %p102
      %p104 = scmp.ne.s32.totalorder %s96, %s98
      %p105 = scmp.eq.s32.totalorder %s25, 7
      %p106 = por %p104, %p105
      %p107 = scmp.ne.s32.totalorder %s98, %s99
      %p108 = scmp.eq.s32.totalorder %s25, 0
      %p109 = por %p107, %p108
      %p110 = scmp.ne.s32.totalorder %s98, %s99
      %p111 = scmp.eq.s32.totalorder %s26, 7
      %p112 = por %p110, %p111
      %p114 = scmp.ne.s32.totalorder %s99, %s113
      %p115 = scmp.eq.s32.totalorder %s26, 0
      %p116 = por %p114, %p115
      %s118 = sadd.s32 %s117, 1
      %p121 = scmp.eq.s32.totalorder %s20, 7
      %p122 = scmp.ne.s32.totalorder %s117, %s119
      %p123 = scmp.eq.s32.totalorder %s20, 0
      %p124 = por %p122, %p123
      %p125 = scmp.ne.s32.totalorder %s117, %s119
      %p126 = scmp.eq.s32.totalorder %s25, 7
      %p127 = por %p125, %p126
      %p128 = scmp.ne.s32.totalorder %s119, %s120
      %p129 = scmp.eq.s32.totalorder %s25, 0
      %p130 = por %p128, %p129
      %p131 = scmp.ne.s32.totalorder %s119, %s120
      %p132 = scmp.eq.s32.totalorder %s26, 7
      %p133 = por %p131, %p132
      %p135 = scmp.ne.s32.totalorder %s120, %s134
      %p136 = scmp.eq.s32.totalorder %s26, 0
      %p137 = por %p135, %p136
      %s138 = ssub.s32 %s27, %s39
      %p139 = scmp.eq.s32.totalorder %s138, 0
      %s141 = sadd.s32 %s140, 1
      %s142 = scalar_select %p139, %s140, %s141
      %p145 = pneg %p139
      %p146 = scmp.eq.s32.totalorder %s20, 7
      %p147 = por %p145, %p146
      %p148 = scmp.ne.s32.totalorder %s140, %s143
      %p149 = scmp.eq.s32.totalorder %s20, 0
      %p150 = por %p148, %p149
      %p151 = scmp.ne.s32.totalorder %s140, %s143
      %p152 = scmp.eq.s32.totalorder %s25, 7
      %p153 = por %p151, %p152
      %p154 = scmp.ne.s32.totalorder %s143, %s144
      %p155 = scmp.eq.s32.totalorder %s25, 0
      %p156 = por %p154, %p155
      %p157 = scmp.ne.s32.totalorder %s143, %s144
      %p158 = scmp.eq.s32.totalorder %s26, 7
      %p159 = por %p157, %p158
      %p161 = scmp.ne.s32.totalorder %s144, %s160
      %p162 = scmp.eq.s32.totalorder %s26, 0
      %p163 = por %p161, %p162
      %p164 = scmp.le.s32.totalorder 1, %s20
      %p165 = scmp.lt.s32.totalorder %s20, 9
      %p166 = pnand %p164, %p165
      %p167 = pneg %p166
      // Predicated region
      $region9: #{tpu_custom_call.1} parent=5 // pred_check
        _
      $region10: #{tpu_custom_call.1} parent=5 // pred_check_branch
        %169 = sbr.rel (%p166) target = $region12
      $region11: #{tpu_custom_call.1} parent=5 // pred_region
        %s170 = ssub.s32 %s20, 1
        // Predicated region
        $region13: #{tpu_custom_call.1} parent=11 // pred_check
          %p171 = pneg %p109
        $region14: #{tpu_custom_call.1} parent=11 // pred_check_branch
          %173 = sbr.rel (%p171) target = $region16
        $region15: #{tpu_custom_call.1} parent=11 // pred_region
          %s175 = ssub.s32 256, 256
          %176 = vsyncadd [#allocation6], %s175
          %s177 = sshll.u32 [#allocation7], 4
          %s178 = int_to_ptr.vmem [resolvable:$true] %s177
          %183 = dma.hbm_to_vmem [thread:$0]  %s2, 256, %s178, [#allocation6], 128, 128, 8
        $region16: #{tpu_custom_call.1} parent=11 // pred_fallthru
          _
        // Predicated region
        $region17: #{tpu_custom_call.1} parent=11 // pred_check
          %p184 = pneg %p130
        $region18: #{tpu_custom_call.1} parent=11 // pred_check_branch
          %186 = sbr.rel (%p184) target = $region20
        $region19: #{tpu_custom_call.1} parent=11 // pred_region
          %s188 = ssub.s32 256, 256
          %189 = vsyncadd [#allocation9], %s188
          %s190 = sshll.u32 [#allocation8], 4
          %s191 = int_to_ptr.vmem [resolvable:$true] %s190
          %196 = dma.hbm_to_vmem [thread:$0]  %s3, 256, %s191, [#allocation9], 128, 128, 8
        $region20: #{tpu_custom_call.1} parent=11 // pred_fallthru
          _
      $region12: #{tpu_custom_call.1} parent=5 // pred_fallthru
        _
      %p197 = scmp.lt.s32.totalorder %s20, 8
      // Predicated region
      $region21: #{tpu_custom_call.1} parent=5 // pred_check
        %p198 = pneg %p197
      $region22: #{tpu_custom_call.1} parent=5 // pred_check_branch
        %200 = sbr.rel (%p198) target = $region24
      $region23: #{tpu_custom_call.1} parent=5 // pred_region
        // Predicated region
        $region25: #{tpu_custom_call.1} parent=23 // pred_check
          %p201 = pneg %p54
        $region26: #{tpu_custom_call.1} parent=23 // pred_check_branch
          %203 = sbr.rel (%p201) target = $region28
        $region27: #{tpu_custom_call.1} parent=23 // pred_region
          %s204 = sand.u32 %s44, 1
          %s205 = scalar_lea.sflag [#allocation3], %s204
          %s206 = sand.u32 %s44, 1
          %s207 = smul.addr %s206, 16
          %s208 = scalar_lea.vmem [#allocation2], %s207
          %s210 = ssub.s32 256, 256
          %211 = vsyncadd %s205, %s210
          %s212 = smul.addr %s28, 2
          %s213 = smul.addr %s27, 8
          %s214 = sadd.s32 %s212, %s213
          %s215 = smul.addr %s214, 128
          %s216 = scalar_lea.hbm %s0, %s215
          %s217 = sshll.u32 %s208, 4
          %s218 = int_to_ptr.vmem [resolvable:$true] %s217
          %223 = dma.hbm_to_vmem [thread:$0]  %s216, 256, %s218, %s205, 128, 128, 8
        $region28: #{tpu_custom_call.1} parent=23 // pred_fallthru
          _
        // Predicated region
        $region29: #{tpu_custom_call.1} parent=23 // pred_check
          %p224 = pneg %p82
        $region30: #{tpu_custom_call.1} parent=23 // pred_check_branch
          %226 = sbr.rel (%p224) target = $region32
        $region31: #{tpu_custom_call.1} parent=23 // pred_region
          %s227 = sand.u32 %s20, 1
          %s228 = scalar_lea.sflag [#allocation6], %s227
          %s229 = sand.u32 %s72, 1
          %s230 = smul.addr %s229, 16
          %s231 = scalar_lea.vmem [#allocation5], %s230
          %s233 = ssub.s32 256, 256
          %234 = vsyncadd %s228, %s233
          %s235 = smul.addr %s28, 2
          %s236 = smul.addr %s27, 8
          %s237 = sadd.s32 %s235, %s236
          %s238 = smul.addr %s237, 128
          %s239 = scalar_lea.hbm %s1, %s238
          %s240 = sshll.u32 %s231, 4
          %s241 = int_to_ptr.vmem [resolvable:$true] %s240
          %246 = dma.hbm_to_vmem [thread:$0]  %s239, 256, %s241, %s228, 128, 128, 8
        $region32: #{tpu_custom_call.1} parent=23 // pred_fallthru
          _
      $region24: #{tpu_custom_call.1} parent=5 // pred_fallthru
        _
      %p247 = scmp.le.s32.totalorder 1, %s20
      %p248 = scmp.lt.s32.totalorder %s20, 9
      %p249 = pnand %p247, %p248
      %p250 = pneg %p249
      // Predicated region
      $region33: #{tpu_custom_call.1} parent=5 // pred_check
        _
      $region34: #{tpu_custom_call.1} parent=5 // pred_check_branch
        %252 = sbr.rel (%p249) target = $region36
      $region35: #{tpu_custom_call.1} parent=5 // pred_region
        %s253 = ssub.s32 %s20, 1
        %s254 = sand.u32 %s47, 1
        %s255 = scalar_lea.sflag [#allocation3], %s254
        %s256 = sand.u32 %s47, 1
        %s257 = smul.addr %s256, 16
        %s258 = scalar_lea.vmem [#allocation2], %s257
        // Predicated region
        $region37: #{tpu_custom_call.1} parent=35 // pred_check
          %p259 = pneg %p60
        $region38: #{tpu_custom_call.1} parent=35 // pred_check_branch
          %261 = sbr.rel (%p259) target = $region40
        $region39: #{tpu_custom_call.1} parent=35 // pred_region
          %262 = dma.done %s255, 256
        $region40: #{tpu_custom_call.1} parent=35 // pred_fallthru
          _
        %s263 = sand.u32 %s25, 1
        %s264 = scalar_lea.sflag [#allocation6], %s263
        %s265 = sand.u32 %s75, 1
        %s266 = smul.addr %s265, 16
        %s267 = scalar_lea.vmem [#allocation5], %s266
        // Predicated region
        $region41: #{tpu_custom_call.1} parent=35 // pred_check
          %p268 = pneg %p88
        $region42: #{tpu_custom_call.1} parent=35 // pred_check_branch
          %270 = sbr.rel (%p268) target = $region44
        $region43: #{tpu_custom_call.1} parent=35 // pred_region
          %271 = dma.done %s264, 256
        $region44: #{tpu_custom_call.1} parent=35 // pred_fallthru
          _
        // Predicated region
        $region45: #{tpu_custom_call.1} parent=35 // pred_check
          %p272 = pneg %p109
        $region46: #{tpu_custom_call.1} parent=35 // pred_check_branch
          %274 = sbr.rel (%p272) target = $region48
        $region47: #{tpu_custom_call.1} parent=35 // pred_region
          %275 = dma.done [#allocation6], 256
        $region48: #{tpu_custom_call.1} parent=35 // pred_fallthru
          _
        // Predicated region
        $region49: #{tpu_custom_call.1} parent=35 // pred_check
          %p276 = pneg %p130
        $region50: #{tpu_custom_call.1} parent=35 // pred_check_branch
          %278 = sbr.rel (%p276) target = $region52
        $region51: #{tpu_custom_call.1} parent=35 // pred_region
          %279 = dma.done [#allocation9], 256
        $region52: #{tpu_custom_call.1} parent=35 // pred_fallthru
          _
        %s280 = sand.u32 %s47, 1
        %s281 = scalar_lea.sflag [#allocation3], %s280
        %s282 = sand.u32 %s47, 1
        %s283 = smul.addr %s282, 16
        %s284 = scalar_lea.vmem [#allocation2], %s283
        %p285 = pneg %p60
        %p286 = pneg %p57
        %s287 = sand.u32 %s25, 1
        %s288 = scalar_lea.sflag [#allocation6], %s287
        %s289 = sand.u32 %s75, 1
        %s290 = smul.addr %s289, 16
        %s291 = scalar_lea.vmem [#allocation5], %s290
        %p292 = pneg %p88
        %p293 = pneg %p85
        %p294 = pneg %p109
        %p295 = pneg %p106
        %p296 = pneg %p130
        %p297 = pneg %p127
        %p298 = pneg %p156
        %p299 = pneg %p153
        %s300 = sand.u32 %s143, 1
        %s301 = scalar_lea.sflag [#allocation4], %s300
        %s302 = sand.u32 %s143, 1
        %s303 = smul.addr %s302, 16
        %s304 = scalar_lea.vmem [#allocation10], %s303
        %v305 = vld [vmem:[%s258] sm:$0xff]
        %v306 = vld [vmem:[%s258 + $0x8] sm:$0xff]
        %v307 = vld [vmem:[%s267] sm:$0xff]
        %v308 = vld [vmem:[%s267 + $0x8] sm:$0xff]
        %v309 = vld [vmem:[#allocation7] sm:$0xff]
        %v310 = vld [vmem:[#allocation7 + $0x8] sm:$0xff]
        %v311 = vld [vmem:[#allocation8] sm:$0xff]
        %v312 = vld [vmem:[#allocation8 + $0x8] sm:$0xff]
        %vm313 = vcmask 130048
        %v315 = vsel %vm313, %v309, 0
        %v318 = vsel %vm313, %v310, 0
        %320 = vmatprep.subr.mxu0 0.0
        %v321 = vand.u32 %v305, 4294901760
        %322 = vmatpush1.msra.mxu0 %v321
        %323 = vmatprep.subr.mxu0 0.0
        %v324 = vand.u32 %v306, 4294901760
        %325 = vmatpush1.msra.mxu0 %v324
        %326 = vmatprep.subr.mxu0 0.0
        %327 = vmatpush1.msra.mxu0 0.0
        %328 = vmatprep.subr.mxu0 0.0
        %329 = vmatpush1.msra.mxu0 0.0
        %330 = vmatprep.subr.mxu0 0.0
        %331 = vmatpush1.msra.mxu0 0.0
        %332 = vmatprep.subr.mxu0 0.0
        %333 = vmatpush1.msra.mxu0 0.0
        %334 = vmatprep.subr.mxu0 0.0
        %335 = vmatpush1.msra.mxu0 0.0
        %336 = vmatprep.subr.mxu0 0.0
        %337 = vmatpush1.msra.mxu0 0.0
        %338 = vmatprep.subr.mxu0 0.0
        %339 = vmatpush1.msra.mxu0 0.0
        %340 = vmatprep.subr.mxu0 0.0
        %341 = vmatpush1.msra.mxu0 0.0
        %342 = vmatprep.subr.mxu0 0.0
        %343 = vmatpush1.msra.mxu0 0.0
        %344 = vmatprep.subr.mxu0 0.0
        %345 = vmatpush1.msra.mxu0 0.0
        %346 = vmatprep.subr.mxu0 0.0
        %347 = vmatpush1.msra.mxu0 0.0
        %348 = vmatprep.subr.mxu0 0.0
        %349 = vmatpush1.msra.mxu0 0.0
        %350 = vmatprep.subr.mxu0 0.0
        %351 = vmatpush1.msra.mxu0 0.0
        %352 = vmatprep.subr.mxu0 0.0
        %353 = vmatpush1.msra.mxu0 0.0
        %354 = vmatprep.subr.mxu0 0.0
        %355 = vmatpush1.msra.mxu0 0.0
        %356 = vmatprep.subr.mxu0 0.0
        %357 = vmatpush1.msra.mxu0 0.0
        %358 = vmatprep.subr.mxu0 0.0
        %359 = vmatpush1.msra.mxu0 0.0
        %360 = vmatprep.subr.mxu0 0.0
        %361 = vmatpush1.msra.mxu0 0.0
        %362 = vmatprep.subr.mxu0 0.0
        %363 = vmatpush1.msra.mxu0 0.0
        %364 = vmatprep.subr.mxu0 0.0
        %365 = vmatpush1.msra.mxu0 0.0
        %366 = vmatprep.subr.mxu0 0.0
        %367 = vmatpush1.msra.mxu0 0.0
        %368 = vmatprep.subr.mxu0 0.0
        %369 = vmatpush1.msra.mxu0 0.0
        %370 = vmatprep.subr.mxu0 0.0
        %371 = vmatpush1.msra.mxu0 0.0
        %372 = vmatprep.subr.mxu0 0.0
        %373 = vmatpush1.msra.mxu0 0.0
        %374 = vmatprep.subr.mxu0 0.0
        %375 = vmatpush1.msra.mxu0 0.0
        %376 = vmatprep.subr.mxu0 0.0
        %377 = vmatpush1.msra.mxu0 0.0
        %378 = vmatprep.subr.mxu0 0.0
        %379 = vmatpush1.msra.mxu0 0.0
        %380 = vmatprep.subr.mxu0 0.0
        %381 = vmatpush1.msra.mxu0 0.0
        %382 = vmatprep.subr.mxu0 0.0
        %383 = vmatpush1.msra.mxu0 0.0
        %384 = vmatprep.subr.mxu0 0.0
        %385 = vmatpush1.msra.mxu0 0.0
        %386 = vmatprep.mubr.f32.mxu0 0.0
        %v387 = vand.u32 %v315, 4294901760
        %v388 = vsub.f32 %v315, %v387
        %v389 = vand.u32 %v388, 4294901760
        %v390 = vsub.f32 %v388, %v389
        %v391 = vand.u32 %v390, 4294901760
        %392 = vmatmul.mubr.f32.gmra.mrb[0].mxu0 %v391
        %v393 = vpop.f32.mrb[0].mxu0
        %v394 = vadd.f32 0.0, %v393
        %v395 = vpop.f32.mrb[0].mxu0
        %396 = vmatprep.mubr.f32.mxu0 0.0
        %v397 = vand.u32 %v318, 4294901760
        %v398 = vsub.f32 %v318, %v397
        %v399 = vand.u32 %v398, 4294901760
        %v400 = vsub.f32 %v398, %v399
        %v401 = vand.u32 %v400, 4294901760
        %402 = vmatmul.mubr.f32.gmra.mrb[0].mxu0 %v401
        %v403 = vpop.f32.mrb[0].mxu0
        %v404 = vadd.f32 0.0, %v403
        %v405 = vpop.f32.mrb[0].mxu0
        %406 = vdwg.mxu0
        %407 = vmatprep.subr.mxu0 0.0
        %v408 = vand.u32 %v305, 4294901760
        %v409 = vsub.f32 %v305, %v408
        %v410 = vand.u32 %v409, 4294901760
        %v411 = vsub.f32 %v409, %v410
        %v412 = vand.u32 %v411, 4294901760
        %413 = vmatpush1.msra.mxu0 %v412
        %414 = vmatprep.subr.mxu0 0.0
        %v415 = vand.u32 %v306, 4294901760
        %v416 = vsub.f32 %v306, %v415
        %v417 = vand.u32 %v416, 4294901760
        %v418 = vsub.f32 %v416, %v417
        %v419 = vand.u32 %v418, 4294901760
        %420 = vmatpush1.msra.mxu0 %v419
        %421 = vmatprep.subr.mxu0 0.0
        %422 = vmatpush1.msra.mxu0 0.0
        %423 = vmatprep.subr.mxu0 0.0
        %424 = vmatpush1.msra.mxu0 0.0
        %425 = vmatprep.subr.mxu0 0.0
        %426 = vmatpush1.msra.mxu0 0.0
        %427 = vmatprep.subr.mxu0 0.0
        %428 = vmatpush1.msra.mxu0 0.0
        %429 = vmatprep.subr.mxu0 0.0
        %430 = vmatpush1.msra.mxu0 0.0
        %431 = vmatprep.subr.mxu0 0.0
        %432 = vmatpush1.msra.mxu0 0.0
        %433 = vmatprep.subr.mxu0 0.0
        %434 = vmatpush1.msra.mxu0 0.0
        %435 = vmatprep.subr.mxu0 0.0
        %436 = vmatpush1.msra.mxu0 0.0
        %437 = vmatprep.subr.mxu0 0.0
        %438 = vmatpush1.msra.mxu0 0.0
        %439 = vmatprep.subr.mxu0 0.0
        %440 = vmatpush1.msra.mxu0 0.0
        %441 = vmatprep.subr.mxu0 0.0
        %442 = vmatpush1.msra.mxu0 0.0
        %443 = vmatprep.subr.mxu0 0.0
        %444 = vmatpush1.msra.mxu0 0.0
        %445 = vmatprep.subr.mxu0 0.0
        %446 = vmatpush1.msra.mxu0 0.0
        %447 = vmatprep.subr.mxu0 0.0
        %448 = vmatpush1.msra.mxu0 0.0
        %449 = vmatprep.subr.mxu0 0.0
        %450 = vmatpush1.msra.mxu0 0.0
        %451 = vmatprep.subr.mxu0 0.0
        %452 = vmatpush1.msra.mxu0 0.0
        %453 = vmatprep.subr.mxu0 0.0
        %454 = vmatpush1.msra.mxu0 0.0
        %455 = vmatprep.subr.mxu0 0.0
        %456 = vmatpush1.msra.mxu0 0.0
        %457 = vmatprep.subr.mxu0 0.0
        %458 = vmatpush1.msra.mxu0 0.0
        %459 = vmatprep.subr.mxu0 0.0
        %460 = vmatpush1.msra.mxu0 0.0
        %461 = vmatprep.subr.mxu0 0.0
        %462 = vmatpush1.msra.mxu0 0.0
        %463 = vmatprep.subr.mxu0 0.0
        %464 = vmatpush1.msra.mxu0 0.0
        %465 = vmatprep.subr.mxu0 0.0
        %466 = vmatpush1.msra.mxu0 0.0
        %467 = vmatprep.subr.mxu0 0.0
        %468 = vmatpush1.msra.mxu0 0.0
        %469 = vmatprep.subr.mxu0 0.0
        %470 = vmatpush1.msra.mxu0 0.0
        %471 = vmatprep.subr.mxu0 0.0
        %472 = vmatpush1.msra.mxu0 0.0
        %473 = vmatprep.subr.mxu0 0.0
        %474 = vmatpush1.msra.mxu0 0.0
        %475 = vmatprep.subr.mxu0 0.0
        %476 = vmatpush1.msra.mxu0 0.0
        %477 = vmatprep.subr.mxu0 0.0
        %478 = vmatpush1.msra.mxu0 0.0
        %479 = vmatprep.subr.mxu0 0.0
        %480 = vmatpush1.msra.mxu0 0.0
        %481 = vmatprep.mubr.f32.mxu0 0.0
        %v482 = vand.u32 %v315, 4294901760
        %483 = vmatmul.mubr.f32.gmra.mrb[0].mxu0 %v482
        %v484 = vpop.f32.mrb[0].mxu0
        %v485 = vadd.f32 %v394, %v484
        %v486 = vpop.f32.mrb[0].mxu0
        %487 = vmatprep.mubr.f32.mxu0 0.0
        %v488 = vand.u32 %v318, 4294901760
        %489 = vmatmul.mubr.f32.gmra.mrb[0].mxu0 %v488
        %v490 = vpop.f32.mrb[0].mxu0
        %v491 = vadd.f32 %v404, %v490
        %v492 = vpop.f32.mrb[0].mxu0
        %493 = vdwg.mxu0
        %494 = vmatprep.subr.mxu0 0.0
        %v495 = vand.u32 %v305, 4294901760
        %v496 = vsub.f32 %v305, %v495
        %497 = vmatpush1.msra.mxu0 %v496
        %498 = vmatprep.subr.mxu0 0.0
        %v499 = vand.u32 %v306, 4294901760
        %v500 = vsub.f32 %v306, %v499
        %501 = vmatpush1.msra.mxu0 %v500
        %502 = vmatprep.subr.mxu0 0.0
        %503 = vmatpush1.msra.mxu0 0.0
        %504 = vmatprep.subr.mxu0 0.0
        %505 = vmatpush1.msra.mxu0 0.0
        %506 = vmatprep.subr.mxu0 0.0
        %507 = vmatpush1.msra.mxu0 0.0
        %508 = vmatprep.subr.mxu0 0.0
        %509 = vmatpush1.msra.mxu0 0.0
        %510 = vmatprep.subr.mxu0 0.0
        %511 = vmatpush1.msra.mxu0 0.0
        %512 = vmatprep.subr.mxu0 0.0
        %513 = vmatpush1.msra.mxu0 0.0
        %514 = vmatprep.subr.mxu0 0.0
        %515 = vmatpush1.msra.mxu0 0.0
        %516 = vmatprep.subr.mxu0 0.0
        %517 = vmatpush1.msra.mxu0 0.0
        %518 = vmatprep.subr.mxu0 0.0
        %519 = vmatpush1.msra.mxu0 0.0
        %520 = vmatprep.subr.mxu0 0.0
        %521 = vmatpush1.msra.mxu0 0.0
        %522 = vmatprep.subr.mxu0 0.0
        %523 = vmatpush1.msra.mxu0 0.0
        %524 = vmatprep.subr.mxu0 0.0
        %525 = vmatpush1.msra.mxu0 0.0
        %526 = vmatprep.subr.mxu0 0.0
        %527 = vmatpush1.msra.mxu0 0.0
        %528 = vmatprep.subr.mxu0 0.0
        %529 = vmatpush1.msra.mxu0 0.0
        %530 = vmatprep.subr.mxu0 0.0
        %531 = vmatpush1.msra.mxu0 0.0
        %532 = vmatprep.subr.mxu0 0.0
        %533 = vmatpush1.msra.mxu0 0.0
        %534 = vmatprep.subr.mxu0 0.0
        %535 = vmatpush1.msra.mxu0 0.0
        %536 = vmatprep.subr.mxu0 0.0
        %537 = vmatpush1.msra.mxu0 0.0
        %538 = vmatprep.subr.mxu0 0.0
        %539 = vmatpush1.msra.mxu0 0.0
        %540 = vmatprep.subr.mxu0 0.0
        %541 = vmatpush1.msra.mxu0 0.0
        %542 = vmatprep.subr.mxu0 0.0
        %543 = vmatpush1.msra.mxu0 0.0
        %544 = vmatprep.subr.mxu0 0.0
        %545 = vmatpush1.msra.mxu0 0.0
        %546 = vmatprep.subr.mxu0 0.0
        %547 = vmatpush1.msra.mxu0 0.0
        %548 = vmatprep.subr.mxu0 0.0
        %549 = vmatpush1.msra.mxu0 0.0
        %550 = vmatprep.subr.mxu0 0.0
        %551 = vmatpush1.msra.mxu0 0.0
        %552 = vmatprep.subr.mxu0 0.0
        %553 = vmatpush1.msra.mxu0 0.0
        %554 = vmatprep.subr.mxu0 0.0
        %555 = vmatpush1.msra.mxu0 0.0
        %556 = vmatprep.subr.mxu0 0.0
        %557 = vmatpush1.msra.mxu0 0.0
        %558 = vmatprep.subr.mxu0 0.0
        %559 = vmatpush1.msra.mxu0 0.0
        %560 = vmatprep.subr.mxu0 0.0
        %561 = vmatpush1.msra.mxu0 0.0
        %562 = vmatprep.mubr.f32.mxu0 0.0
        %v563 = vand.u32 %v315, 4294901760
        %v564 = vsub.f32 %v315, %v563
        %565 = vmatmul.mubr.f32.gmra.mrb[0].mxu0 %v564
        %v566 = vpop.f32.mrb[0].mxu0
        %v567 = vadd.f32 %v485, %v566
        %v568 = vpop.f32.mrb[0].mxu0
        %569 = vmatprep.mubr.f32.mxu0 0.0
        %v570 = vand.u32 %v318, 4294901760
        %v571 = vsub.f32 %v318, %v570
        %572 = vmatmul.mubr.f32.gmra.mrb[0].mxu0 %v571
        %v573 = vpop.f32.mrb[0].mxu0
        %v574 = vadd.f32 %v491, %v573
        %v575 = vpop.f32.mrb[0].mxu0
        %576 = vdwg.mxu0
        %577 = vmatprep.subr.mxu0 0.0
        %v578 = vand.u32 %v305, 4294901760
        %579 = vmatpush1.msra.mxu0 %v578
        %580 = vmatprep.subr.mxu0 0.0
        %v581 = vand.u32 %v306, 4294901760
        %582 = vmatpush1.msra.mxu0 %v581
        %583 = vmatprep.subr.mxu0 0.0
        %584 = vmatpush1.msra.mxu0 0.0
        %585 = vmatprep.subr.mxu0 0.0
        %586 = vmatpush1.msra.mxu0 0.0
        %587 = vmatprep.subr.mxu0 0.0
        %588 = vmatpush1.msra.mxu0 0.0
        %589 = vmatprep.subr.mxu0 0.0
        %590 = vmatpush1.msra.mxu0 0.0
        %591 = vmatprep.subr.mxu0 0.0
        %592 = vmatpush1.msra.mxu0 0.0
        %593 = vmatprep.subr.mxu0 0.0
        %594 = vmatpush1.msra.mxu0 0.0
        %595 = vmatprep.subr.mxu0 0.0
        %596 = vmatpush1.msra.mxu0 0.0
        %597 = vmatprep.subr.mxu0 0.0
        %598 = vmatpush1.msra.mxu0 0.0
        %599 = vmatprep.subr.mxu0 0.0
        %600 = vmatpush1.msra.mxu0 0.0
        %601 = vmatprep.subr.mxu0 0.0
        %602 = vmatpush1.msra.mxu0 0.0
        %603 = vmatprep.subr.mxu0 0.0
        %604 = vmatpush1.msra.mxu0 0.0
        %605 = vmatprep.subr.mxu0 0.0
        %606 = vmatpush1.msra.mxu0 0.0
        %607 = vmatprep.subr.mxu0 0.0
        %608 = vmatpush1.msra.mxu0 0.0
        %609 = vmatprep.subr.mxu0 0.0
        %610 = vmatpush1.msra.mxu0 0.0
        %611 = vmatprep.subr.mxu0 0.0
        %612 = vmatpush1.msra.mxu0 0.0
        %613 = vmatprep.subr.mxu0 0.0
        %614 = vmatpush1.msra.mxu0 0.0
        %615 = vmatprep.subr.mxu0 0.0
        %616 = vmatpush1.msra.mxu0 0.0
        %617 = vmatprep.subr.mxu0 0.0
        %618 = vmatpush1.msra.mxu0 0.0
        %619 = vmatprep.subr.mxu0 0.0
        %620 = vmatpush1.msra.mxu0 0.0
        %621 = vmatprep.subr.mxu0 0.0
        %622 = vmatpush1.msra.mxu0 0.0
        %623 = vmatprep.subr.mxu0 0.0
        %624 = vmatpush1.msra.mxu0 0.0
        %625 = vmatprep.subr.mxu0 0.0
        %626 = vmatpush1.msra.mxu0 0.0
        %627 = vmatprep.subr.mxu0 0.0
        %628 = vmatpush1.msra.mxu0 0.0
        %629 = vmatprep.subr.mxu0 0.0
        %630 = vmatpush1.msra.mxu0 0.0
        %631 = vmatprep.subr.mxu0 0.0
        %632 = vmatpush1.msra.mxu0 0.0
        %633 = vmatprep.subr.mxu0 0.0
        %634 = vmatpush1.msra.mxu0 0.0
        %635 = vmatprep.subr.mxu0 0.0
        %636 = vmatpush1.msra.mxu0 0.0
        %637 = vmatprep.subr.mxu0 0.0
        %638 = vmatpush1.msra.mxu0 0.0
        %639 = vmatprep.subr.mxu0 0.0
        %640 = vmatpush1.msra.mxu0 0.0
        %641 = vmatprep.subr.mxu0 0.0
        %642 = vmatpush1.msra.mxu0 0.0
        %643 = vmatprep.mubr.f32.mxu0 0.0
        %v644 = vand.u32 %v315, 4294901760
        %v645 = vsub.f32 %v315, %v644
        %v646 = vand.u32 %v645, 4294901760
        %647 = vmatmul.mubr.f32.gmra.mrb[0].mxu0 %v646
        %v648 = vpop.f32.mrb[0].mxu0
        %v649 = vadd.f32 %v567, %v648
        %v650 = vpop.f32.mrb[0].mxu0
        %651 = vmatprep.mubr.f32.mxu0 0.0
        %v652 = vand.u32 %v318, 4294901760
        %v653 = vsub.f32 %v318, %v652
        %v654 = vand.u32 %v653, 4294901760
        %655 = vmatmul.mubr.f32.gmra.mrb[0].mxu0 %v654
        %v656 = vpop.f32.mrb[0].mxu0
        %v657 = vadd.f32 %v574, %v656
        %v658 = vpop.f32.mrb[0].mxu0
        %659 = vdwg.mxu0
        %660 = vmatprep.subr.mxu0 0.0
        %v661 = vand.u32 %v305, 4294901760
        %v662 = vsub.f32 %v305, %v661
        %v663 = vand.u32 %v662, 4294901760
        %664 = vmatpush1.msra.mxu0 %v663
        %665 = vmatprep.subr.mxu0 0.0
        %v666 = vand.u32 %v306, 4294901760
        %v667 = vsub.f32 %v306, %v666
        %v668 = vand.u32 %v667, 4294901760
        %669 = vmatpush1.msra.mxu0 %v668
        %670 = vmatprep.subr.mxu0 0.0
        %671 = vmatpush1.msra.mxu0 0.0
        %672 = vmatprep.subr.mxu0 0.0
        %673 = vmatpush1.msra.mxu0 0.0
        %674 = vmatprep.subr.mxu0 0.0
        %675 = vmatpush1.msra.mxu0 0.0
        %676 = vmatprep.subr.mxu0 0.0
        %677 = vmatpush1.msra.mxu0 0.0
        %678 = vmatprep.subr.mxu0 0.0
        %679 = vmatpush1.msra.mxu0 0.0
        %680 = vmatprep.subr.mxu0 0.0
        %681 = vmatpush1.msra.mxu0 0.0
        %682 = vmatprep.subr.mxu0 0.0
        %683 = vmatpush1.msra.mxu0 0.0
        %684 = vmatprep.subr.mxu0 0.0
        %685 = vmatpush1.msra.mxu0 0.0
        %686 = vmatprep.subr.mxu0 0.0
        %687 = vmatpush1.msra.mxu0 0.0
        %688 = vmatprep.subr.mxu0 0.0
        %689 = vmatpush1.msra.mxu0 0.0
        %690 = vmatprep.subr.mxu0 0.0
        %691 = vmatpush1.msra.mxu0 0.0
        %692 = vmatprep.subr.mxu0 0.0
        %693 = vmatpush1.msra.mxu0 0.0
        %694 = vmatprep.subr.mxu0 0.0
        %695 = vmatpush1.msra.mxu0 0.0
        %696 = vmatprep.subr.mxu0 0.0
        %697 = vmatpush1.msra.mxu0 0.0
        %698 = vmatprep.subr.mxu0 0.0
        %699 = vmatpush1.msra.mxu0 0.0
        %700 = vmatprep.subr.mxu0 0.0
        %701 = vmatpush1.msra.mxu0 0.0
        %702 = vmatprep.subr.mxu0 0.0
        %703 = vmatpush1.msra.mxu0 0.0
        %704 = vmatprep.subr.mxu0 0.0
        %705 = vmatpush1.msra.mxu0 0.0
        %706 = vmatprep.subr.mxu0 0.0
        %707 = vmatpush1.msra.mxu0 0.0
        %708 = vmatprep.subr.mxu0 0.0
        %709 = vmatpush1.msra.mxu0 0.0
        %710 = vmatprep.subr.mxu0 0.0
        %711 = vmatpush1.msra.mxu0 0.0
        %712 = vmatprep.subr.mxu0 0.0
        %713 = vmatpush1.msra.mxu0 0.0
        %714 = vmatprep.subr.mxu0 0.0
        %715 = vmatpush1.msra.mxu0 0.0
        %716 = vmatprep.subr.mxu0 0.0
        %717 = vmatpush1.msra.mxu0 0.0
        %718 = vmatprep.subr.mxu0 0.0
        %719 = vmatpush1.msra.mxu0 0.0
        %720 = vmatprep.subr.mxu0 0.0
        %721 = vmatpush1.msra.mxu0 0.0
        %722 = vmatprep.subr.mxu0 0.0
        %723 = vmatpush1.msra.mxu0 0.0
        %724 = vmatprep.subr.mxu0 0.0
        %725 = vmatpush1.msra.mxu0 0.0
        %726 = vmatprep.subr.mxu0 0.0
        %727 = vmatpush1.msra.mxu0 0.0
        %728 = vmatprep.subr.mxu0 0.0
        %729 = vmatpush1.msra.mxu0 0.0
        %730 = vmatprep.mubr.f32.mxu0 0.0
        %v731 = vand.u32 %v315, 4294901760
        %732 = vmatmul.mubr.f32.gmra.mrb[0].mxu0 %v731
        %v733 = vpop.f32.mrb[0].mxu0
        %v734 = vadd.f32 %v649, %v733
        %v735 = vpop.f32.mrb[0].mxu0
        %736 = vmatprep.mubr.f32.mxu0 0.0
        %v737 = vand.u32 %v318, 4294901760
        %738 = vmatmul.mubr.f32.gmra.mrb[0].mxu0 %v737
        %v739 = vpop.f32.mrb[0].mxu0
        %v740 = vadd.f32 %v657, %v739
        %v741 = vpop.f32.mrb[0].mxu0
        %742 = vdwg.mxu0
        %743 = vmatprep.subr.mxu0 0.0
        %v744 = vand.u32 %v305, 4294901760
        %745 = vmatpush1.msra.mxu0 %v744
        %746 = vmatprep.subr.mxu0 0.0
        %v747 = vand.u32 %v306, 4294901760
        %748 = vmatpush1.msra.mxu0 %v747
        %749 = vmatprep.subr.mxu0 0.0
        %750 = vmatpush1.msra.mxu0 0.0
        %751 = vmatprep.subr.mxu0 0.0
        %752 = vmatpush1.msra.mxu0 0.0
        %753 = vmatprep.subr.mxu0 0.0
        %754 = vmatpush1.msra.mxu0 0.0
        %755 = vmatprep.subr.mxu0 0.0
        %756 = vmatpush1.msra.mxu0 0.0
        %757 = vmatprep.subr.mxu0 0.0
        %758 = vmatpush1.msra.mxu0 0.0
        %759 = vmatprep.subr.mxu0 0.0
        %760 = vmatpush1.msra.mxu0 0.0
        %761 = vmatprep.subr.mxu0 0.0
        %762 = vmatpush1.msra.mxu0 0.0
        %763 = vmatprep.subr.mxu0 0.0
        %764 = vmatpush1.msra.mxu0 0.0
        %765 = vmatprep.subr.mxu0 0.0
        %766 = vmatpush1.msra.mxu0 0.0
        %767 = vmatprep.subr.mxu0 0.0
        %768 = vmatpush1.msra.mxu0 0.0
        %769 = vmatprep.subr.mxu0 0.0
        %770 = vmatpush1.msra.mxu0 0.0
        %771 = vmatprep.subr.mxu0 0.0
        %772 = vmatpush1.msra.mxu0 0.0
        %773 = vmatprep.subr.mxu0 0.0
        %774 = vmatpush1.msra.mxu0 0.0
        %775 = vmatprep.subr.mxu0 0.0
        %776 = vmatpush1.msra.mxu0 0.0
        %777 = vmatprep.subr.mxu0 0.0
        %778 = vmatpush1.msra.mxu0 0.0
        %779 = vmatprep.subr.mxu0 0.0
        %780 = vmatpush1.msra.mxu0 0.0
        %781 = vmatprep.subr.mxu0 0.0
        %782 = vmatpush1.msra.mxu0 0.0
        %783 = vmatprep.subr.mxu0 0.0
        %784 = vmatpush1.msra.mxu0 0.0
        %785 = vmatprep.subr.mxu0 0.0
        %786 = vmatpush1.msra.mxu0 0.0
        %787 = vmatprep.subr.mxu0 0.0
        %788 = vmatpush1.msra.mxu0 0.0
        %789 = vmatprep.subr.mxu0 0.0
        %790 = vmatpush1.msra.mxu0 0.0
        %791 = vmatprep.subr.mxu0 0.0
        %792 = vmatpush1.msra.mxu0 0.0
        %793 = vmatprep.subr.mxu0 0.0
        %794 = vmatpush1.msra.mxu0 0.0
        %795 = vmatprep.subr.mxu0 0.0
        %796 = vmatpush1.msra.mxu0 0.0
        %797 = vmatprep.subr.mxu0 0.0
        %798 = vmatpush1.msra.mxu0 0.0
        %799 = vmatprep.subr.mxu0 0.0
        %800 = vmatpush1.msra.mxu0 0.0
        %801 = vmatprep.subr.mxu0 0.0
        %802 = vmatpush1.msra.mxu0 0.0
        %803 = vmatprep.subr.mxu0 0.0
        %804 = vmatpush1.msra.mxu0 0.0
        %805 = vmatprep.subr.mxu0 0.0
        %806 = vmatpush1.msra.mxu0 0.0
        %807 = vmatprep.subr.mxu0 0.0
        %808 = vmatpush1.msra.mxu0 0.0
        %809 = vmatprep.mubr.f32.mxu0 0.0
        %v810 = vand.u32 %v315, 4294901760
        %811 = vmatmul.mubr.f32.gmra.mrb[0].mxu0 %v810
        %v812 = vpop.f32.mrb[0].mxu0
        %v813 = vadd.f32 %v734, %v812
        %v814 = vpop.f32.mrb[0].mxu0
        %815 = vmatprep.mubr.f32.mxu0 0.0
        %v816 = vand.u32 %v318, 4294901760
        %817 = vmatmul.mubr.f32.gmra.mrb[0].mxu0 %v816
        %v818 = vpop.f32.mrb[0].mxu0
        %v819 = vadd.f32 %v740, %v818
        %v820 = vpop.f32.mrb[0].mxu0
        %821 = vdwg.mxu0
        %v823 = vsel %vm313, %v813, 0
        %v826 = vsel %vm313, %v819, 0
        %828 = vmatprep.subr.mxu0 0.0
        %v829 = vand.u32 %v311, 4294901760
        %830 = vmatpush1.msra.mxu0 %v829
        %831 = vmatprep.subr.mxu0 0.0
        %v832 = vand.u32 %v312, 4294901760
        %833 = vmatpush1.msra.mxu0 %v832
        %834 = vmatprep.subr.mxu0 0.0
        %835 = vmatpush1.msra.mxu0 0.0
        %836 = vmatprep.subr.mxu0 0.0
        %837 = vmatpush1.msra.mxu0 0.0
        %838 = vmatprep.subr.mxu0 0.0
        %839 = vmatpush1.msra.mxu0 0.0
        %840 = vmatprep.subr.mxu0 0.0
        %841 = vmatpush1.msra.mxu0 0.0
        %842 = vmatprep.subr.mxu0 0.0
        %843 = vmatpush1.msra.mxu0 0.0
        %844 = vmatprep.subr.mxu0 0.0
        %845 = vmatpush1.msra.mxu0 0.0
        %846 = vmatprep.subr.mxu0 0.0
        %847 = vmatpush1.msra.mxu0 0.0
        %848 = vmatprep.subr.mxu0 0.0
        %849 = vmatpush1.msra.mxu0 0.0
        %850 = vmatprep.subr.mxu0 0.0
        %851 = vmatpush1.msra.mxu0 0.0
        %852 = vmatprep.subr.mxu0 0.0
        %853 = vmatpush1.msra.mxu0 0.0
        %854 = vmatprep.subr.mxu0 0.0
        %855 = vmatpush1.msra.mxu0 0.0
        %856 = vmatprep.subr.mxu0 0.0
        %857 = vmatpush1.msra.mxu0 0.0
        %858 = vmatprep.subr.mxu0 0.0
        %859 = vmatpush1.msra.mxu0 0.0
        %860 = vmatprep.subr.mxu0 0.0
        %861 = vmatpush1.msra.mxu0 0.0
        %862 = vmatprep.subr.mxu0 0.0
        %863 = vmatpush1.msra.mxu0 0.0
        %864 = vmatprep.subr.mxu0 0.0
        %865 = vmatpush1.msra.mxu0 0.0
        %866 = vmatprep.subr.mxu0 0.0
        %867 = vmatpush1.msra.mxu0 0.0
        %868 = vmatprep.subr.mxu0 0.0
        %869 = vmatpush1.msra.mxu0 0.0
        %870 = vmatprep.subr.mxu0 0.0
        %871 = vmatpush1.msra.mxu0 0.0
        %872 = vmatprep.subr.mxu0 0.0
        %873 = vmatpush1.msra.mxu0 0.0
        %874 = vmatprep.subr.mxu0 0.0
        %875 = vmatpush1.msra.mxu0 0.0
        %876 = vmatprep.subr.mxu0 0.0
        %877 = vmatpush1.msra.mxu0 0.0
        %878 = vmatprep.subr.mxu0 0.0
        %879 = vmatpush1.msra.mxu0 0.0
        %880 = vmatprep.subr.mxu0 0.0
        %881 = vmatpush1.msra.mxu0 0.0
        %882 = vmatprep.subr.mxu0 0.0
        %883 = vmatpush1.msra.mxu0 0.0
        %884 = vmatprep.subr.mxu0 0.0
        %885 = vmatpush1.msra.mxu0 0.0
        %886 = vmatprep.subr.mxu0 0.0
        %887 = vmatpush1.msra.mxu0 0.0
        %888 = vmatprep.subr.mxu0 0.0
        %889 = vmatpush1.msra.mxu0 0.0
        %890 = vmatprep.subr.mxu0 0.0
        %891 = vmatpush1.msra.mxu0 0.0
        %892 = vmatprep.subr.mxu0 0.0
        %893 = vmatpush1.msra.mxu0 0.0
        %894 = vmatprep.mubr.f32.mxu0 0.0
        %v895 = vand.u32 %v823, 4294901760
        %v896 = vsub.f32 %v823, %v895
        %v897 = vand.u32 %v896, 4294901760
        %v898 = vsub.f32 %v896, %v897
        %v899 = vand.u32 %v898, 4294901760
        %900 = vmatmul.mubr.f32.gmra.mrb[0].mxu0 %v899
        %v901 = vpop.f32.mrb[0].mxu0
        %v902 = vadd.f32 0.0, %v901
        %v903 = vpop.f32.mrb[0].mxu0
        %904 = vmatprep.mubr.f32.mxu0 0.0
        %v905 = vand.u32 %v826, 4294901760
        %v906 = vsub.f32 %v826, %v905
        %v907 = vand.u32 %v906, 4294901760
        %v908 = vsub.f32 %v906, %v907
        %v909 = vand.u32 %v908, 4294901760
        %910 = vmatmul.mubr.f32.gmra.mrb[0].mxu0 %v909
        %v911 = vpop.f32.mrb[0].mxu0
        %v912 = vadd.f32 0.0, %v911
        %v913 = vpop.f32.mrb[0].mxu0
        %914 = vdwg.mxu0
        %915 = vmatprep.subr.mxu0 0.0
        %v916 = vand.u32 %v311, 4294901760
        %v917 = vsub.f32 %v311, %v916
        %v918 = vand.u32 %v917, 4294901760
        %v919 = vsub.f32 %v917, %v918
        %v920 = vand.u32 %v919, 4294901760
        %921 = vmatpush1.msra.mxu0 %v920
        %922 = vmatprep.subr.mxu0 0.0
        %v923 = vand.u32 %v312, 4294901760
        %v924 = vsub.f32 %v312, %v923
        %v925 = vand.u32 %v924, 4294901760
        %v926 = vsub.f32 %v924, %v925
        %v927 = vand.u32 %v926, 4294901760
        %928 = vmatpush1.msra.mxu0 %v927
        %929 = vmatprep.subr.mxu0 0.0
        %930 = vmatpush1.msra.mxu0 0.0
        %931 = vmatprep.subr.mxu0 0.0
        %932 = vmatpush1.msra.mxu0 0.0
        %933 = vmatprep.subr.mxu0 0.0
        %934 = vmatpush1.msra.mxu0 0.0
        %935 = vmatprep.subr.mxu0 0.0
        %936 = vmatpush1.msra.mxu0 0.0
        %937 = vmatprep.subr.mxu0 0.0
        %938 = vmatpush1.msra.mxu0 0.0
        %939 = vmatprep.subr.mxu0 0.0
        %940 = vmatpush1.msra.mxu0 0.0
        %941 = vmatprep.subr.mxu0 0.0
        %942 = vmatpush1.msra.mxu0 0.0
        %943 = vmatprep.subr.mxu0 0.0
        %944 = vmatpush1.msra.mxu0 0.0
        %945 = vmatprep.subr.mxu0 0.0
        %946 = vmatpush1.msra.mxu0 0.0
        %947 = vmatprep.subr.mxu0 0.0
        %948 = vmatpush1.msra.mxu0 0.0
        %949 = vmatprep.subr.mxu0 0.0
        %950 = vmatpush1.msra.mxu0 0.0
        %951 = vmatprep.subr.mxu0 0.0
        %952 = vmatpush1.msra.mxu0 0.0
        %953 = vmatprep.subr.mxu0 0.0
        %954 = vmatpush1.msra.mxu0 0.0
        %955 = vmatprep.subr.mxu0 0.0
        %956 = vmatpush1.msra.mxu0 0.0
        %957 = vmatprep.subr.mxu0 0.0
        %958 = vmatpush1.msra.mxu0 0.0
        %959 = vmatprep.subr.mxu0 0.0
        %960 = vmatpush1.msra.mxu0 0.0
        %961 = vmatprep.subr.mxu0 0.0
        %962 = vmatpush1.msra.mxu0 0.0
        %963 = vmatprep.subr.mxu0 0.0
        %964 = vmatpush1.msra.mxu0 0.0
        %965 = vmatprep.subr.mxu0 0.0
        %966 = vmatpush1.msra.mxu0 0.0
        %967 = vmatprep.subr.mxu0 0.0
        %968 = vmatpush1.msra.mxu0 0.0
        %969 = vmatprep.subr.mxu0 0.0
        %970 = vmatpush1.msra.mxu0 0.0
        %971 = vmatprep.subr.mxu0 0.0
        %972 = vmatpush1.msra.mxu0 0.0
        %973 = vmatprep.subr.mxu0 0.0
        %974 = vmatpush1.msra.mxu0 0.0
        %975 = vmatprep.subr.mxu0 0.0
        %976 = vmatpush1.msra.mxu0 0.0
        %977 = vmatprep.subr.mxu0 0.0
        %978 = vmatpush1.msra.mxu0 0.0
        %979 = vmatprep.subr.mxu0 0.0
        %980 = vmatpush1.msra.mxu0 0.0
        %981 = vmatprep.subr.mxu0 0.0
        %982 = vmatpush1.msra.mxu0 0.0
        %983 = vmatprep.subr.mxu0 0.0
        %984 = vmatpush1.msra.mxu0 0.0
        %985 = vmatprep.subr.mxu0 0.0
        %986 = vmatpush1.msra.mxu0 0.0
        %987 = vmatprep.subr.mxu0 0.0
        %988 = vmatpush1.msra.mxu0 0.0
        %989 = vmatprep.mubr.f32.mxu0 0.0
        %v990 = vand.u32 %v823, 4294901760
        %991 = vmatmul.mubr.f32.gmra.mrb[0].mxu0 %v990
        %v992 = vpop.f32.mrb[0].mxu0
        %v993 = vadd.f32 %v902, %v992
        %v994 = vpop.f32.mrb[0].mxu0
        %995 = vmatprep.mubr.f32.mxu0 0.0
        %v996 = vand.u32 %v826, 4294901760
        %997 = vmatmul.mubr.f32.gmra.mrb[0].mxu0 %v996
        %v998 = vpop.f32.mrb[0].mxu0
        %v999 = vadd.f32 %v912, %v998
        %v1000 = vpop.f32.mrb[0].mxu0
        %1001 = vdwg.mxu0
        %1002 = vmatprep.subr.mxu0 0.0
        %v1003 = vand.u32 %v311, 4294901760
        %v1004 = vsub.f32 %v311, %v1003
        %1005 = vmatpush1.msra.mxu0 %v1004
        %1006 = vmatprep.subr.mxu0 0.0
        %v1007 = vand.u32 %v312, 4294901760
        %v1008 = vsub.f32 %v312, %v1007
        %1009 = vmatpush1.msra.mxu0 %v1008
        %1010 = vmatprep.subr.mxu0 0.0
        %1011 = vmatpush1.msra.mxu0 0.0
        %1012 = vmatprep.subr.mxu0 0.0
        %1013 = vmatpush1.msra.mxu0 0.0
        %1014 = vmatprep.subr.mxu0 0.0
        %1015 = vmatpush1.msra.mxu0 0.0
        %1016 = vmatprep.subr.mxu0 0.0
        %1017 = vmatpush1.msra.mxu0 0.0
        %1018 = vmatprep.subr.mxu0 0.0
        %1019 = vmatpush1.msra.mxu0 0.0
        %1020 = vmatprep.subr.mxu0 0.0
        %1021 = vmatpush1.msra.mxu0 0.0
        %1022 = vmatprep.subr.mxu0 0.0
        %1023 = vmatpush1.msra.mxu0 0.0
        %1024 = vmatprep.subr.mxu0 0.0
        %1025 = vmatpush1.msra.mxu0 0.0
        %1026 = vmatprep.subr.mxu0 0.0
        %1027 = vmatpush1.msra.mxu0 0.0
        %1028 = vmatprep.subr.mxu0 0.0
        %1029 = vmatpush1.msra.mxu0 0.0
        %1030 = vmatprep.subr.mxu0 0.0
        %1031 = vmatpush1.msra.mxu0 0.0
        %1032 = vmatprep.subr.mxu0 0.0
        %1033 = vmatpush1.msra.mxu0 0.0
        %1034 = vmatprep.subr.mxu0 0.0
        %1035 = vmatpush1.msra.mxu0 0.0
        %1036 = vmatprep.subr.mxu0 0.0
        %1037 = vmatpush1.msra.mxu0 0.0
        %1038 = vmatprep.subr.mxu0 0.0
        %1039 = vmatpush1.msra.mxu0 0.0
        %1040 = vmatprep.subr.mxu0 0.0
        %1041 = vmatpush1.msra.mxu0 0.0
        %1042 = vmatprep.subr.mxu0 0.0
        %1043 = vmatpush1.msra.mxu0 0.0
        %1044 = vmatprep.subr.mxu0 0.0
        %1045 = vmatpush1.msra.mxu0 0.0
        %1046 = vmatprep.subr.mxu0 0.0
        %1047 = vmatpush1.msra.mxu0 0.0
        %1048 = vmatprep.subr.mxu0 0.0
        %1049 = vmatpush1.msra.mxu0 0.0
        %1050 = vmatprep.subr.mxu0 0.0
        %1051 = vmatpush1.msra.mxu0 0.0
        %1052 = vmatprep.subr.mxu0 0.0
        %1053 = vmatpush1.msra.mxu0 0.0
        %1054 = vmatprep.subr.mxu0 0.0
        %1055 = vmatpush1.msra.mxu0 0.0
        %1056 = vmatprep.subr.mxu0 0.0
        %1057 = vmatpush1.msra.mxu0 0.0
        %1058 = vmatprep.subr.mxu0 0.0
        %1059 = vmatpush1.msra.mxu0 0.0
        %1060 = vmatprep.subr.mxu0 0.0
        %1061 = vmatpush1.msra.mxu0 0.0
        %1062 = vmatprep.subr.mxu0 0.0
        %1063 = vmatpush1.msra.mxu0 0.0
        %1064 = vmatprep.subr.mxu0 0.0
        %1065 = vmatpush1.msra.mxu0 0.0
        %1066 = vmatprep.subr.mxu0 0.0
        %1067 = vmatpush1.msra.mxu0 0.0
        %1068 = vmatprep.subr.mxu0 0.0
        %1069 = vmatpush1.msra.mxu0 0.0
        %1070 = vmatprep.mubr.f32.mxu0 0.0
        %v1071 = vand.u32 %v823, 4294901760
        %v1072 = vsub.f32 %v823, %v1071
        %1073 = vmatmul.mubr.f32.gmra.mrb[0].mxu0 %v1072
        %v1074 = vpop.f32.mrb[0].mxu0
        %v1075 = vadd.f32 %v993, %v1074
        %v1076 = vpop.f32.mrb[0].mxu0
        %1077 = vmatprep.mubr.f32.mxu0 0.0
        %v1078 = vand.u32 %v826, 4294901760
        %v1079 = vsub.f32 %v826, %v1078
        %1080 = vmatmul.mubr.f32.gmra.mrb[0].mxu0 %v1079
        %v1081 = vpop.f32.mrb[0].mxu0
        %v1082 = vadd.f32 %v999, %v1081
        %v1083 = vpop.f32.mrb[0].mxu0
        %1084 = vdwg.mxu0
        %1085 = vmatprep.subr.mxu0 0.0
        %v1086 = vand.u32 %v311, 4294901760
        %1087 = vmatpush1.msra.mxu0 %v1086
        %1088 = vmatprep.subr.mxu0 0.0
        %v1089 = vand.u32 %v312, 4294901760
        %1090 = vmatpush1.msra.mxu0 %v1089
        %1091 = vmatprep.subr.mxu0 0.0
        %1092 = vmatpush1.msra.mxu0 0.0
        %1093 = vmatprep.subr.mxu0 0.0
        %1094 = vmatpush1.msra.mxu0 0.0
        %1095 = vmatprep.subr.mxu0 0.0
        %1096 = vmatpush1.msra.mxu0 0.0
        %1097 = vmatprep.subr.mxu0 0.0
        %1098 = vmatpush1.msra.mxu0 0.0
        %1099 = vmatprep.subr.mxu0 0.0
        %1100 = vmatpush1.msra.mxu0 0.0
        %1101 = vmatprep.subr.mxu0 0.0
        %1102 = vmatpush1.msra.mxu0 0.0
        %1103 = vmatprep.subr.mxu0 0.0
        %1104 = vmatpush1.msra.mxu0 0.0
        %1105 = vmatprep.subr.mxu0 0.0
        %1106 = vmatpush1.msra.mxu0 0.0
        %1107 = vmatprep.subr.mxu0 0.0
        %1108 = vmatpush1.msra.mxu0 0.0
        %1109 = vmatprep.subr.mxu0 0.0
        %1110 = vmatpush1.msra.mxu0 0.0
        %1111 = vmatprep.subr.mxu0 0.0
        %1112 = vmatpush1.msra.mxu0 0.0
        %1113 = vmatprep.subr.mxu0 0.0
        %1114 = vmatpush1.msra.mxu0 0.0
        %1115 = vmatprep.subr.mxu0 0.0
        %1116 = vmatpush1.msra.mxu0 0.0
        %1117 = vmatprep.subr.mxu0 0.0
        %1118 = vmatpush1.msra.mxu0 0.0
        %1119 = vmatprep.subr.mxu0 0.0
        %1120 = vmatpush1.msra.mxu0 0.0
        %1121 = vmatprep.subr.mxu0 0.0
        %1122 = vmatpush1.msra.mxu0 0.0
        %1123 = vmatprep.subr.mxu0 0.0
        %1124 = vmatpush1.msra.mxu0 0.0
        %1125 = vmatprep.subr.mxu0 0.0
        %1126 = vmatpush1.msra.mxu0 0.0
        %1127 = vmatprep.subr.mxu0 0.0
        %1128 = vmatpush1.msra.mxu0 0.0
        %1129 = vmatprep.subr.mxu0 0.0
        %1130 = vmatpush1.msra.mxu0 0.0
        %1131 = vmatprep.subr.mxu0 0.0
        %1132 = vmatpush1.msra.mxu0 0.0
        %1133 = vmatprep.subr.mxu0 0.0
        %1134 = vmatpush1.msra.mxu0 0.0
        %1135 = vmatprep.subr.mxu0 0.0
        %1136 = vmatpush1.msra.mxu0 0.0
        %1137 = vmatprep.subr.mxu0 0.0
        %1138 = vmatpush1.msra.mxu0 0.0
        %1139 = vmatprep.subr.mxu0 0.0
        %1140 = vmatpush1.msra.mxu0 0.0
        %1141 = vmatprep.subr.mxu0 0.0
        %1142 = vmatpush1.msra.mxu0 0.0
        %1143 = vmatprep.subr.mxu0 0.0
        %1144 = vmatpush1.msra.mxu0 0.0
        %1145 = vmatprep.subr.mxu0 0.0
        %1146 = vmatpush1.msra.mxu0 0.0
        %1147 = vmatprep.subr.mxu0 0.0
        %1148 = vmatpush1.msra.mxu0 0.0
        %1149 = vmatprep.subr.mxu0 0.0
        %1150 = vmatpush1.msra.mxu0 0.0
        %1151 = vmatprep.mubr.f32.mxu0 0.0
        %v1152 = vand.u32 %v823, 4294901760
        %v1153 = vsub.f32 %v823, %v1152
        %v1154 = vand.u32 %v1153, 4294901760
        %1155 = vmatmul.mubr.f32.gmra.mrb[0].mxu0 %v1154
        %v1156 = vpop.f32.mrb[0].mxu0
        %v1157 = vadd.f32 %v1075, %v1156
        %v1158 = vpop.f32.mrb[0].mxu0
        %1159 = vmatprep.mubr.f32.mxu0 0.0
        %v1160 = vand.u32 %v826, 4294901760
        %v1161 = vsub.f32 %v826, %v1160
        %v1162 = vand.u32 %v1161, 4294901760
        %1163 = vmatmul.mubr.f32.gmra.mrb[0].mxu0 %v1162
        %v1164 = vpop.f32.mrb[0].mxu0
        %v1165 = vadd.f32 %v1082, %v1164
        %v1166 = vpop.f32.mrb[0].mxu0
        %1167 = vdwg.mxu0
        %1168 = vmatprep.subr.mxu0 0.0
        %v1169 = vand.u32 %v311, 4294901760
        %v1170 = vsub.f32 %v311, %v1169
        %v1171 = vand.u32 %v1170, 4294901760
        %1172 = vmatpush1.msra.mxu0 %v1171
        %1173 = vmatprep.subr.mxu0 0.0
        %v1174 = vand.u32 %v312, 4294901760
        %v1175 = vsub.f32 %v312, %v1174
        %v1176 = vand.u32 %v1175, 4294901760
        %1177 = vmatpush1.msra.mxu0 %v1176
        %1178 = vmatprep.subr.mxu0 0.0
        %1179 = vmatpush1.msra.mxu0 0.0
        %1180 = vmatprep.subr.mxu0 0.0
        %1181 = vmatpush1.msra.mxu0 0.0
        %1182 = vmatprep.subr.mxu0 0.0
        %1183 = vmatpush1.msra.mxu0 0.0
        %1184 = vmatprep.subr.mxu0 0.0
        %1185 = vmatpush1.msra.mxu0 0.0
        %1186 = vmatprep.subr.mxu0 0.0
        %1187 = vmatpush1.msra.mxu0 0.0
        %1188 = vmatprep.subr.mxu0 0.0
        %1189 = vmatpush1.msra.mxu0 0.0
        %1190 = vmatprep.subr.mxu0 0.0
        %1191 = vmatpush1.msra.mxu0 0.0
        %1192 = vmatprep.subr.mxu0 0.0
        %1193 = vmatpush1.msra.mxu0 0.0
        %1194 = vmatprep.subr.mxu0 0.0
        %1195 = vmatpush1.msra.mxu0 0.0
        %1196 = vmatprep.subr.mxu0 0.0
        %1197 = vmatpush1.msra.mxu0 0.0
        %1198 = vmatprep.subr.mxu0 0.0
        %1199 = vmatpush1.msra.mxu0 0.0
        %1200 = vmatprep.subr.mxu0 0.0
        %1201 = vmatpush1.msra.mxu0 0.0
        %1202 = vmatprep.subr.mxu0 0.0
        %1203 = vmatpush1.msra.mxu0 0.0
        %1204 = vmatprep.subr.mxu0 0.0
        %1205 = vmatpush1.msra.mxu0 0.0
        %1206 = vmatprep.subr.mxu0 0.0
        %1207 = vmatpush1.msra.mxu0 0.0
        %1208 = vmatprep.subr.mxu0 0.0
        %1209 = vmatpush1.msra.mxu0 0.0
        %1210 = vmatprep.subr.mxu0 0.0
        %1211 = vmatpush1.msra.mxu0 0.0
        %1212 = vmatprep.subr.mxu0 0.0
        %1213 = vmatpush1.msra.mxu0 0.0
        %1214 = vmatprep.subr.mxu0 0.0
        %1215 = vmatpush1.msra.mxu0 0.0
        %1216 = vmatprep.subr.mxu0 0.0
        %1217 = vmatpush1.msra.mxu0 0.0
        %1218 = vmatprep.subr.mxu0 0.0
        %1219 = vmatpush1.msra.mxu0 0.0
        %1220 = vmatprep.subr.mxu0 0.0
        %1221 = vmatpush1.msra.mxu0 0.0
        %1222 = vmatprep.subr.mxu0 0.0
        %1223 = vmatpush1.msra.mxu0 0.0
        %1224 = vmatprep.subr.mxu0 0.0
        %1225 = vmatpush1.msra.mxu0 0.0
        %1226 = vmatprep.subr.mxu0 0.0
        %1227 = vmatpush1.msra.mxu0 0.0
        %1228 = vmatprep.subr.mxu0 0.0
        %1229 = vmatpush1.msra.mxu0 0.0
        %1230 = vmatprep.subr.mxu0 0.0
        %1231 = vmatpush1.msra.mxu0 0.0
        %1232 = vmatprep.subr.mxu0 0.0
        %1233 = vmatpush1.msra.mxu0 0.0
        %1234 = vmatprep.subr.mxu0 0.0
        %1235 = vmatpush1.msra.mxu0 0.0
        %1236 = vmatprep.subr.mxu0 0.0
        %1237 = vmatpush1.msra.mxu0 0.0
        %1238 = vmatprep.mubr.f32.mxu0 0.0
        %v1239 = vand.u32 %v823, 4294901760
        %1240 = vmatmul.mubr.f32.gmra.mrb[0].mxu0 %v1239
        %v1241 = vpop.f32.mrb[0].mxu0
        %v1242 = vadd.f32 %v1157, %v1241
        %v1243 = vpop.f32.mrb[0].mxu0
        %1244 = vmatprep.mubr.f32.mxu0 0.0
        %v1245 = vand.u32 %v826, 4294901760
        %1246 = vmatmul.mubr.f32.gmra.mrb[0].mxu0 %v1245
        %v1247 = vpop.f32.mrb[0].mxu0
        %v1248 = vadd.f32 %v1165, %v1247
        %v1249 = vpop.f32.mrb[0].mxu0
        %1250 = vdwg.mxu0
        %1251 = vmatprep.subr.mxu0 0.0
        %v1252 = vand.u32 %v311, 4294901760
        %1253 = vmatpush1.msra.mxu0 %v1252
        %1254 = vmatprep.subr.mxu0 0.0
        %v1255 = vand.u32 %v312, 4294901760
        %1256 = vmatpush1.msra.mxu0 %v1255
        %1257 = vmatprep.subr.mxu0 0.0
        %1258 = vmatpush1.msra.mxu0 0.0
        %1259 = vmatprep.subr.mxu0 0.0
        %1260 = vmatpush1.msra.mxu0 0.0
        %1261 = vmatprep.subr.mxu0 0.0
        %1262 = vmatpush1.msra.mxu0 0.0
        %1263 = vmatprep.subr.mxu0 0.0
        %1264 = vmatpush1.msra.mxu0 0.0
        %1265 = vmatprep.subr.mxu0 0.0
        %1266 = vmatpush1.msra.mxu0 0.0
        %1267 = vmatprep.subr.mxu0 0.0
        %1268 = vmatpush1.msra.mxu0 0.0
        %1269 = vmatprep.subr.mxu0 0.0
        %1270 = vmatpush1.msra.mxu0 0.0
        %1271 = vmatprep.subr.mxu0 0.0
        %1272 = vmatpush1.msra.mxu0 0.0
        %1273 = vmatprep.subr.mxu0 0.0
        %1274 = vmatpush1.msra.mxu0 0.0
        %1275 = vmatprep.subr.mxu0 0.0
        %1276 = vmatpush1.msra.mxu0 0.0
        %1277 = vmatprep.subr.mxu0 0.0
        %1278 = vmatpush1.msra.mxu0 0.0
        %1279 = vmatprep.subr.mxu0 0.0
        %1280 = vmatpush1.msra.mxu0 0.0
        %1281 = vmatprep.subr.mxu0 0.0
        %1282 = vmatpush1.msra.mxu0 0.0
        %1283 = vmatprep.subr.mxu0 0.0
        %1284 = vmatpush1.msra.mxu0 0.0
        %1285 = vmatprep.subr.mxu0 0.0
        %1286 = vmatpush1.msra.mxu0 0.0
        %1287 = vmatprep.subr.mxu0 0.0
        %1288 = vmatpush1.msra.mxu0 0.0
        %1289 = vmatprep.subr.mxu0 0.0
        %1290 = vmatpush1.msra.mxu0 0.0
        %1291 = vmatprep.subr.mxu0 0.0
        %1292 = vmatpush1.msra.mxu0 0.0
        %1293 = vmatprep.subr.mxu0 0.0
        %1294 = vmatpush1.msra.mxu0 0.0
        %1295 = vmatprep.subr.mxu0 0.0
        %1296 = vmatpush1.msra.mxu0 0.0
        %1297 = vmatprep.subr.mxu0 0.0
        %1298 = vmatpush1.msra.mxu0 0.0
        %1299 = vmatprep.subr.mxu0 0.0
        %1300 = vmatpush1.msra.mxu0 0.0
        %1301 = vmatprep.subr.mxu0 0.0
        %1302 = vmatpush1.msra.mxu0 0.0
        %1303 = vmatprep.subr.mxu0 0.0
        %1304 = vmatpush1.msra.mxu0 0.0
        %1305 = vmatprep.subr.mxu0 0.0
        %1306 = vmatpush1.msra.mxu0 0.0
        %1307 = vmatprep.subr.mxu0 0.0
        %1308 = vmatpush1.msra.mxu0 0.0
        %1309 = vmatprep.subr.mxu0 0.0
        %1310 = vmatpush1.msra.mxu0 0.0
        %1311 = vmatprep.subr.mxu0 0.0
        %1312 = vmatpush1.msra.mxu0 0.0
        %1313 = vmatprep.subr.mxu0 0.0
        %1314 = vmatpush1.msra.mxu0 0.0
        %1315 = vmatprep.subr.mxu0 0.0
        %1316 = vmatpush1.msra.mxu0 0.0
        %1317 = vmatprep.mubr.f32.mxu0 0.0
        %v1318 = vand.u32 %v823, 4294901760
        %1319 = vmatmul.mubr.f32.gmra.mrb[0].mxu0 %v1318
        %v1320 = vpop.f32.mrb[0].mxu0
        %v1321 = vadd.f32 %v1242, %v1320
        %v1322 = vpop.f32.mrb[0].mxu0
        %1323 = vmatprep.mubr.f32.mxu0 0.0
        %v1324 = vand.u32 %v826, 4294901760
        %1325 = vmatmul.mubr.f32.gmra.mrb[0].mxu0 %v1324
        %v1326 = vpop.f32.mrb[0].mxu0
        %v1327 = vadd.f32 %v1248, %v1326
        %v1328 = vpop.f32.mrb[0].mxu0
        %1329 = vdwg.mxu0
        %1330 = vmatprep.subr.mxu0 0.0
        %v1331 = vand.u32 %v307, 4294901760
        %1332 = vmatpush1.msra.mxu0 %v1331
        %1333 = vmatprep.subr.mxu0 0.0
        %v1334 = vand.u32 %v308, 4294901760
        %1335 = vmatpush1.msra.mxu0 %v1334
        %1336 = vmatprep.subr.mxu0 0.0
        %1337 = vmatpush1.msra.mxu0 0.0
        %1338 = vmatprep.subr.mxu0 0.0
        %1339 = vmatpush1.msra.mxu0 0.0
        %1340 = vmatprep.subr.mxu0 0.0
        %1341 = vmatpush1.msra.mxu0 0.0
        %1342 = vmatprep.subr.mxu0 0.0
        %1343 = vmatpush1.msra.mxu0 0.0
        %1344 = vmatprep.subr.mxu0 0.0
        %1345 = vmatpush1.msra.mxu0 0.0
        %1346 = vmatprep.subr.mxu0 0.0
        %1347 = vmatpush1.msra.mxu0 0.0
        %1348 = vmatprep.subr.mxu0 0.0
        %1349 = vmatpush1.msra.mxu0 0.0
        %1350 = vmatprep.subr.mxu0 0.0
        %1351 = vmatpush1.msra.mxu0 0.0
        %1352 = vmatprep.subr.mxu0 0.0
        %1353 = vmatpush1.msra.mxu0 0.0
        %1354 = vmatprep.subr.mxu0 0.0
        %1355 = vmatpush1.msra.mxu0 0.0
        %1356 = vmatprep.subr.mxu0 0.0
        %1357 = vmatpush1.msra.mxu0 0.0
        %1358 = vmatprep.subr.mxu0 0.0
        %1359 = vmatpush1.msra.mxu0 0.0
        %1360 = vmatprep.subr.mxu0 0.0
        %1361 = vmatpush1.msra.mxu0 0.0
        %1362 = vmatprep.subr.mxu0 0.0
        %1363 = vmatpush1.msra.mxu0 0.0
        %1364 = vmatprep.subr.mxu0 0.0
        %1365 = vmatpush1.msra.mxu0 0.0
        %1366 = vmatprep.subr.mxu0 0.0
        %1367 = vmatpush1.msra.mxu0 0.0
        %1368 = vmatprep.subr.mxu0 0.0
        %1369 = vmatpush1.msra.mxu0 0.0
        %1370 = vmatprep.subr.mxu0 0.0
        %1371 = vmatpush1.msra.mxu0 0.0
        %1372 = vmatprep.subr.mxu0 0.0
        %1373 = vmatpush1.msra.mxu0 0.0
        %1374 = vmatprep.subr.mxu0 0.0
        %1375 = vmatpush1.msra.mxu0 0.0
        %1376 = vmatprep.subr.mxu0 0.0
        %1377 = vmatpush1.msra.mxu0 0.0
        %1378 = vmatprep.subr.mxu0 0.0
        %1379 = vmatpush1.msra.mxu0 0.0
        %1380 = vmatprep.subr.mxu0 0.0
        %1381 = vmatpush1.msra.mxu0 0.0
        %1382 = vmatprep.subr.mxu0 0.0
        %1383 = vmatpush1.msra.mxu0 0.0
        %1384 = vmatprep.subr.mxu0 0.0
        %1385 = vmatpush1.msra.mxu0 0.0
        %1386 = vmatprep.subr.mxu0 0.0
        %1387 = vmatpush1.msra.mxu0 0.0
        %1388 = vmatprep.subr.mxu0 0.0
        %1389 = vmatpush1.msra.mxu0 0.0
        %1390 = vmatprep.subr.mxu0 0.0
        %1391 = vmatpush1.msra.mxu0 0.0
        %1392 = vmatprep.subr.mxu0 0.0
        %1393 = vmatpush1.msra.mxu0 0.0
        %1394 = vmatprep.subr.mxu0 0.0
        %1395 = vmatpush1.msra.mxu0 0.0
        %1396 = vmatprep.mubr.f32.mxu0 0.0
        %v1397 = vand.u32 %v315, 4294901760
        %v1398 = vsub.f32 %v315, %v1397
        %v1399 = vand.u32 %v1398, 4294901760
        %v1400 = vsub.f32 %v1398, %v1399
        %v1401 = vand.u32 %v1400, 4294901760
        %1402 = vmatmul.mubr.f32.gmra.mrb[0].mxu0 %v1401
        %v1403 = vpop.f32.mrb[0].mxu0
        %v1404 = vadd.f32 0.0, %v1403
        %v1405 = vpop.f32.mrb[0].mxu0
        %1406 = vmatprep.mubr.f32.mxu0 0.0
        %v1407 = vand.u32 %v318, 4294901760
        %v1408 = vsub.f32 %v318, %v1407
        %v1409 = vand.u32 %v1408, 4294901760
        %v1410 = vsub.f32 %v1408, %v1409
        %v1411 = vand.u32 %v1410, 4294901760
        %1412 = vmatmul.mubr.f32.gmra.mrb[0].mxu0 %v1411
        %v1413 = vpop.f32.mrb[0].mxu0
        %v1414 = vadd.f32 0.0, %v1413
        %v1415 = vpop.f32.mrb[0].mxu0
        %1416 = vdwg.mxu0
        %1417 = vmatprep.subr.mxu0 0.0
        %v1418 = vand.u32 %v307, 4294901760
        %v1419 = vsub.f32 %v307, %v1418
        %v1420 = vand.u32 %v1419, 4294901760
        %v1421 = vsub.f32 %v1419, %v1420
        %v1422 = vand.u32 %v1421, 4294901760
        %1423 = vmatpush1.msra.mxu0 %v1422
        %1424 = vmatprep.subr.mxu0 0.0
        %v1425 = vand.u32 %v308, 4294901760
        %v1426 = vsub.f32 %v308, %v1425
        %v1427 = vand.u32 %v1426, 4294901760
        %v1428 = vsub.f32 %v1426, %v1427
        %v1429 = vand.u32 %v1428, 4294901760
        %1430 = vmatpush1.msra.mxu0 %v1429
        %1431 = vmatprep.subr.mxu0 0.0
        %1432 = vmatpush1.msra.mxu0 0.0
        %1433 = vmatprep.subr.mxu0 0.0
        %1434 = vmatpush1.msra.mxu0 0.0
        %1435 = vmatprep.subr.mxu0 0.0
        %1436 = vmatpush1.msra.mxu0 0.0
        %1437 = vmatprep.subr.mxu0 0.0
        %1438 = vmatpush1.msra.mxu0 0.0
        %1439 = vmatprep.subr.mxu0 0.0
        %1440 = vmatpush1.msra.mxu0 0.0
        %1441 = vmatprep.subr.mxu0 0.0
        %1442 = vmatpush1.msra.mxu0 0.0
        %1443 = vmatprep.subr.mxu0 0.0
        %1444 = vmatpush1.msra.mxu0 0.0
        %1445 = vmatprep.subr.mxu0 0.0
        %1446 = vmatpush1.msra.mxu0 0.0
        %1447 = vmatprep.subr.mxu0 0.0
        %1448 = vmatpush1.msra.mxu0 0.0
        %1449 = vmatprep.subr.mxu0 0.0
        %1450 = vmatpush1.msra.mxu0 0.0
        %1451 = vmatprep.subr.mxu0 0.0
        %1452 = vmatpush1.msra.mxu0 0.0
        %1453 = vmatprep.subr.mxu0 0.0
        %1454 = vmatpush1.msra.mxu0 0.0
        %1455 = vmatprep.subr.mxu0 0.0
        %1456 = vmatpush1.msra.mxu0 0.0
        %1457 = vmatprep.subr.mxu0 0.0
        %1458 = vmatpush1.msra.mxu0 0.0
        %1459 = vmatprep.subr.mxu0 0.0
        %1460 = vmatpush1.msra.mxu0 0.0
        %1461 = vmatprep.subr.mxu0 0.0
        %1462 = vmatpush1.msra.mxu0 0.0
        %1463 = vmatprep.subr.mxu0 0.0
        %1464 = vmatpush1.msra.mxu0 0.0
        %1465 = vmatprep.subr.mxu0 0.0
        %1466 = vmatpush1.msra.mxu0 0.0
        %1467 = vmatprep.subr.mxu0 0.0
        %1468 = vmatpush1.msra.mxu0 0.0
        %1469 = vmatprep.subr.mxu0 0.0
        %1470 = vmatpush1.msra.mxu0 0.0
        %1471 = vmatprep.subr.mxu0 0.0
        %1472 = vmatpush1.msra.mxu0 0.0
        %1473 = vmatprep.subr.mxu0 0.0
        %1474 = vmatpush1.msra.mxu0 0.0
        %1475 = vmatprep.subr.mxu0 0.0
        %1476 = vmatpush1.msra.mxu0 0.0
        %1477 = vmatprep.subr.mxu0 0.0
        %1478 = vmatpush1.msra.mxu0 0.0
        %1479 = vmatprep.subr.mxu0 0.0
        %1480 = vmatpush1.msra.mxu0 0.0
        %1481 = vmatprep.subr.mxu0 0.0
        %1482 = vmatpush1.msra.mxu0 0.0
        %1483 = vmatprep.subr.mxu0 0.0
        %1484 = vmatpush1.msra.mxu0 0.0
        %1485 = vmatprep.subr.mxu0 0.0
        %1486 = vmatpush1.msra.mxu0 0.0
        %1487 = vmatprep.subr.mxu0 0.0
        %1488 = vmatpush1.msra.mxu0 0.0
        %1489 = vmatprep.subr.mxu0 0.0
        %1490 = vmatpush1.msra.mxu0 0.0
        %1491 = vmatprep.mubr.f32.mxu0 0.0
        %v1492 = vand.u32 %v315, 4294901760
        %1493 = vmatmul.mubr.f32.gmra.mrb[0].mxu0 %v1492
        %v1494 = vpop.f32.mrb[0].mxu0
        %v1495 = vadd.f32 %v1404, %v1494
        %v1496 = vpop.f32.mrb[0].mxu0
        %1497 = vmatprep.mubr.f32.mxu0 0.0
        %v1498 = vand.u32 %v318, 4294901760
        %1499 = vmatmul.mubr.f32.gmra.mrb[0].mxu0 %v1498
        %v1500 = vpop.f32.mrb[0].mxu0
        %v1501 = vadd.f32 %v1414, %v1500
        %v1502 = vpop.f32.mrb[0].mxu0
        %1503 = vdwg.mxu0
        %1504 = vmatprep.subr.mxu0 0.0
        %v1505 = vand.u32 %v307, 4294901760
        %v1506 = vsub.f32 %v307, %v1505
        %1507 = vmatpush1.msra.mxu0 %v1506
        %1508 = vmatprep.subr.mxu0 0.0
        %v1509 = vand.u32 %v308, 4294901760
        %v1510 = vsub.f32 %v308, %v1509
        %1511 = vmatpush1.msra.mxu0 %v1510
        %1512 = vmatprep.subr.mxu0 0.0
        %1513 = vmatpush1.msra.mxu0 0.0
        %1514 = vmatprep.subr.mxu0 0.0
        %1515 = vmatpush1.msra.mxu0 0.0
        %1516 = vmatprep.subr.mxu0 0.0
        %1517 = vmatpush1.msra.mxu0 0.0
        %1518 = vmatprep.subr.mxu0 0.0
        %1519 = vmatpush1.msra.mxu0 0.0
        %1520 = vmatprep.subr.mxu0 0.0
        %1521 = vmatpush1.msra.mxu0 0.0
        %1522 = vmatprep.subr.mxu0 0.0
        %1523 = vmatpush1.msra.mxu0 0.0
        %1524 = vmatprep.subr.mxu0 0.0
        %1525 = vmatpush1.msra.mxu0 0.0
        %1526 = vmatprep.subr.mxu0 0.0
        %1527 = vmatpush1.msra.mxu0 0.0
        %1528 = vmatprep.subr.mxu0 0.0
        %1529 = vmatpush1.msra.mxu0 0.0
        %1530 = vmatprep.subr.mxu0 0.0
        %1531 = vmatpush1.msra.mxu0 0.0
        %1532 = vmatprep.subr.mxu0 0.0
        %1533 = vmatpush1.msra.mxu0 0.0
        %1534 = vmatprep.subr.mxu0 0.0
        %1535 = vmatpush1.msra.mxu0 0.0
        %1536 = vmatprep.subr.mxu0 0.0
        %1537 = vmatpush1.msra.mxu0 0.0
        %1538 = vmatprep.subr.mxu0 0.0
        %1539 = vmatpush1.msra.mxu0 0.0
        %1540 = vmatprep.subr.mxu0 0.0
        %1541 = vmatpush1.msra.mxu0 0.0
        %1542 = vmatprep.subr.mxu0 0.0
        %1543 = vmatpush1.msra.mxu0 0.0
        %1544 = vmatprep.subr.mxu0 0.0
        %1545 = vmatpush1.msra.mxu0 0.0
        %1546 = vmatprep.subr.mxu0 0.0
        %1547 = vmatpush1.msra.mxu0 0.0
        %1548 = vmatprep.subr.mxu0 0.0
        %1549 = vmatpush1.msra.mxu0 0.0
        %1550 = vmatprep.subr.mxu0 0.0
        %1551 = vmatpush1.msra.mxu0 0.0
        %1552 = vmatprep.subr.mxu0 0.0
        %1553 = vmatpush1.msra.mxu0 0.0
        %1554 = vmatprep.subr.mxu0 0.0
        %1555 = vmatpush1.msra.mxu0 0.0
        %1556 = vmatprep.subr.mxu0 0.0
        %1557 = vmatpush1.msra.mxu0 0.0
        %1558 = vmatprep.subr.mxu0 0.0
        %1559 = vmatpush1.msra.mxu0 0.0
        %1560 = vmatprep.subr.mxu0 0.0
        %1561 = vmatpush1.msra.mxu0 0.0
        %1562 = vmatprep.subr.mxu0 0.0
        %1563 = vmatpush1.msra.mxu0 0.0
        %1564 = vmatprep.subr.mxu0 0.0
        %1565 = vmatpush1.msra.mxu0 0.0
        %1566 = vmatprep.subr.mxu0 0.0
        %1567 = vmatpush1.msra.mxu0 0.0
        %1568 = vmatprep.subr.mxu0 0.0
        %1569 = vmatpush1.msra.mxu0 0.0
        %1570 = vmatprep.subr.mxu0 0.0
        %1571 = vmatpush1.msra.mxu0 0.0
        %1572 = vmatprep.mubr.f32.mxu0 0.0
        %v1573 = vand.u32 %v315, 4294901760
        %v1574 = vsub.f32 %v315, %v1573
        %1575 = vmatmul.mubr.f32.gmra.mrb[0].mxu0 %v1574
        %v1576 = vpop.f32.mrb[0].mxu0
        %v1577 = vadd.f32 %v1495, %v1576
        %v1578 = vpop.f32.mrb[0].mxu0
        %1579 = vmatprep.mubr.f32.mxu0 0.0
        %v1580 = vand.u32 %v318, 4294901760
        %v1581 = vsub.f32 %v318, %v1580
        %1582 = vmatmul.mubr.f32.gmra.mrb[0].mxu0 %v1581
        %v1583 = vpop.f32.mrb[0].mxu0
        %v1584 = vadd.f32 %v1501, %v1583
        %v1585 = vpop.f32.mrb[0].mxu0
        %1586 = vdwg.mxu0
        %1587 = vmatprep.subr.mxu0 0.0
        %v1588 = vand.u32 %v307, 4294901760
        %1589 = vmatpush1.msra.mxu0 %v1588
        %1590 = vmatprep.subr.mxu0 0.0
        %v1591 = vand.u32 %v308, 4294901760
        %1592 = vmatpush1.msra.mxu0 %v1591
        %1593 = vmatprep.subr.mxu0 0.0
        %1594 = vmatpush1.msra.mxu0 0.0
        %1595 = vmatprep.subr.mxu0 0.0
        %1596 = vmatpush1.msra.mxu0 0.0
        %1597 = vmatprep.subr.mxu0 0.0
        %1598 = vmatpush1.msra.mxu0 0.0
        %1599 = vmatprep.subr.mxu0 0.0
        %1600 = vmatpush1.msra.mxu0 0.0
        %1601 = vmatprep.subr.mxu0 0.0
        %1602 = vmatpush1.msra.mxu0 0.0
        %1603 = vmatprep.subr.mxu0 0.0
        %1604 = vmatpush1.msra.mxu0 0.0
        %1605 = vmatprep.subr.mxu0 0.0
        %1606 = vmatpush1.msra.mxu0 0.0
        %1607 = vmatprep.subr.mxu0 0.0
        %1608 = vmatpush1.msra.mxu0 0.0
        %1609 = vmatprep.subr.mxu0 0.0
        %1610 = vmatpush1.msra.mxu0 0.0
        %1611 = vmatprep.subr.mxu0 0.0
        %1612 = vmatpush1.msra.mxu0 0.0
        %1613 = vmatprep.subr.mxu0 0.0
        %1614 = vmatpush1.msra.mxu0 0.0
        %1615 = vmatprep.subr.mxu0 0.0
        %1616 = vmatpush1.msra.mxu0 0.0
        %1617 = vmatprep.subr.mxu0 0.0
        %1618 = vmatpush1.msra.mxu0 0.0
        %1619 = vmatprep.subr.mxu0 0.0
        %1620 = vmatpush1.msra.mxu0 0.0
        %1621 = vmatprep.subr.mxu0 0.0
        %1622 = vmatpush1.msra.mxu0 0.0
        %1623 = vmatprep.subr.mxu0 0.0
        %1624 = vmatpush1.msra.mxu0 0.0
        %1625 = vmatprep.subr.mxu0 0.0
        %1626 = vmatpush1.msra.mxu0 0.0
        %1627 = vmatprep.subr.mxu0 0.0
        %1628 = vmatpush1.msra.mxu0 0.0
        %1629 = vmatprep.subr.mxu0 0.0
        %1630 = vmatpush1.msra.mxu0 0.0
        %1631 = vmatprep.subr.mxu0 0.0
        %1632 = vmatpush1.msra.mxu0 0.0
        %1633 = vmatprep.subr.mxu0 0.0
        %1634 = vmatpush1.msra.mxu0 0.0
        %1635 = vmatprep.subr.mxu0 0.0
        %1636 = vmatpush1.msra.mxu0 0.0
        %1637 = vmatprep.subr.mxu0 0.0
        %1638 = vmatpush1.msra.mxu0 0.0
        %1639 = vmatprep.subr.mxu0 0.0
        %1640 = vmatpush1.msra.mxu0 0.0
        %1641 = vmatprep.subr.mxu0 0.0
        %1642 = vmatpush1.msra.mxu0 0.0
        %1643 = vmatprep.subr.mxu0 0.0
        %1644 = vmatpush1.msra.mxu0 0.0
        %1645 = vmatprep.subr.mxu0 0.0
        %1646 = vmatpush1.msra.mxu0 0.0
        %1647 = vmatprep.subr.mxu0 0.0
        %1648 = vmatpush1.msra.mxu0 0.0
        %1649 = vmatprep.subr.mxu0 0.0
        %1650 = vmatpush1.msra.mxu0 0.0
        %1651 = vmatprep.subr.mxu0 0.0
        %1652 = vmatpush1.msra.mxu0 0.0
        %1653 = vmatprep.mubr.f32.mxu0 0.0
        %v1654 = vand.u32 %v315, 4294901760
        %v1655 = vsub.f32 %v315, %v1654
        %v1656 = vand.u32 %v1655, 4294901760
        %1657 = vmatmul.mubr.f32.gmra.mrb[0].mxu0 %v1656
        %v1658 = vpop.f32.mrb[0].mxu0
        %v1659 = vadd.f32 %v1577, %v1658
        %v1660 = vpop.f32.mrb[0].mxu0
        %1661 = vmatprep.mubr.f32.mxu0 0.0
        %v1662 = vand.u32 %v318, 4294901760
        %v1663 = vsub.f32 %v318, %v1662
        %v1664 = vand.u32 %v1663, 4294901760
        %1665 = vmatmul.mubr.f32.gmra.mrb[0].mxu0 %v1664
        %v1666 = vpop.f32.mrb[0].mxu0
        %v1667 = vadd.f32 %v1584, %v1666
        %v1668 = vpop.f32.mrb[0].mxu0
        %1669 = vdwg.mxu0
        %1670 = vmatprep.subr.mxu0 0.0
        %v1671 = vand.u32 %v307, 4294901760
        %v1672 = vsub.f32 %v307, %v1671
        %v1673 = vand.u32 %v1672, 4294901760
        %1674 = vmatpush1.msra.mxu0 %v1673
        %1675 = vmatprep.subr.mxu0 0.0
        %v1676 = vand.u32 %v308, 4294901760
        %v1677 = vsub.f32 %v308, %v1676
        %v1678 = vand.u32 %v1677, 4294901760
        %1679 = vmatpush1.msra.mxu0 %v1678
        %1680 = vmatprep.subr.mxu0 0.0
        %1681 = vmatpush1.msra.mxu0 0.0
        %1682 = vmatprep.subr.mxu0 0.0
        %1683 = vmatpush1.msra.mxu0 0.0
        %1684 = vmatprep.subr.mxu0 0.0
        %1685 = vmatpush1.msra.mxu0 0.0
        %1686 = vmatprep.subr.mxu0 0.0
        %1687 = vmatpush1.msra.mxu0 0.0
        %1688 = vmatprep.subr.mxu0 0.0
        %1689 = vmatpush1.msra.mxu0 0.0
        %1690 = vmatprep.subr.mxu0 0.0
        %1691 = vmatpush1.msra.mxu0 0.0
        %1692 = vmatprep.subr.mxu0 0.0
        %1693 = vmatpush1.msra.mxu0 0.0
        %1694 = vmatprep.subr.mxu0 0.0
        %1695 = vmatpush1.msra.mxu0 0.0
        %1696 = vmatprep.subr.mxu0 0.0
        %1697 = vmatpush1.msra.mxu0 0.0
        %1698 = vmatprep.subr.mxu0 0.0
        %1699 = vmatpush1.msra.mxu0 0.0
        %1700 = vmatprep.subr.mxu0 0.0
        %1701 = vmatpush1.msra.mxu0 0.0
        %1702 = vmatprep.subr.mxu0 0.0
        %1703 = vmatpush1.msra.mxu0 0.0
        %1704 = vmatprep.subr.mxu0 0.0
        %1705 = vmatpush1.msra.mxu0 0.0
        %1706 = vmatprep.subr.mxu0 0.0
        %1707 = vmatpush1.msra.mxu0 0.0
        %1708 = vmatprep.subr.mxu0 0.0
        %1709 = vmatpush1.msra.mxu0 0.0
        %1710 = vmatprep.subr.mxu0 0.0
        %1711 = vmatpush1.msra.mxu0 0.0
        %1712 = vmatprep.subr.mxu0 0.0
        %1713 = vmatpush1.msra.mxu0 0.0
        %1714 = vmatprep.subr.mxu0 0.0
        %1715 = vmatpush1.msra.mxu0 0.0
        %1716 = vmatprep.subr.mxu0 0.0
        %1717 = vmatpush1.msra.mxu0 0.0
        %1718 = vmatprep.subr.mxu0 0.0
        %1719 = vmatpush1.msra.mxu0 0.0
        %1720 = vmatprep.subr.mxu0 0.0
        %1721 = vmatpush1.msra.mxu0 0.0
        %1722 = vmatprep.subr.mxu0 0.0
        %1723 = vmatpush1.msra.mxu0 0.0
        %1724 = vmatprep.subr.mxu0 0.0
        %1725 = vmatpush1.msra.mxu0 0.0
        %1726 = vmatprep.subr.mxu0 0.0
        %1727 = vmatpush1.msra.mxu0 0.0
        %1728 = vmatprep.subr.mxu0 0.0
        %1729 = vmatpush1.msra.mxu0 0.0
        %1730 = vmatprep.subr.mxu0 0.0
        %1731 = vmatpush1.msra.mxu0 0.0
        %1732 = vmatprep.subr.mxu0 0.0
        %1733 = vmatpush1.msra.mxu0 0.0
        %1734 = vmatprep.subr.mxu0 0.0
        %1735 = vmatpush1.msra.mxu0 0.0
        %1736 = vmatprep.subr.mxu0 0.0
        %1737 = vmatpush1.msra.mxu0 0.0
        %1738 = vmatprep.subr.mxu0 0.0
        %1739 = vmatpush1.msra.mxu0 0.0
        %1740 = vmatprep.mubr.f32.mxu0 0.0
        %v1741 = vand.u32 %v315, 4294901760
        %1742 = vmatmul.mubr.f32.gmra.mrb[0].mxu0 %v1741
        %v1743 = vpop.f32.mrb[0].mxu0
        %v1744 = vadd.f32 %v1659, %v1743
        %v1745 = vpop.f32.mrb[0].mxu0
        %1746 = vmatprep.mubr.f32.mxu0 0.0
        %v1747 = vand.u32 %v318, 4294901760
        %1748 = vmatmul.mubr.f32.gmra.mrb[0].mxu0 %v1747
        %v1749 = vpop.f32.mrb[0].mxu0
        %v1750 = vadd.f32 %v1667, %v1749
        %v1751 = vpop.f32.mrb[0].mxu0
        %1752 = vdwg.mxu0
        %1753 = vmatprep.subr.mxu0 0.0
        %v1754 = vand.u32 %v307, 4294901760
        %1755 = vmatpush1.msra.mxu0 %v1754
        %1756 = vmatprep.subr.mxu0 0.0
        %v1757 = vand.u32 %v308, 4294901760
        %1758 = vmatpush1.msra.mxu0 %v1757
        %1759 = vmatprep.subr.mxu0 0.0
        %1760 = vmatpush1.msra.mxu0 0.0
        %1761 = vmatprep.subr.mxu0 0.0
        %1762 = vmatpush1.msra.mxu0 0.0
        %1763 = vmatprep.subr.mxu0 0.0
        %1764 = vmatpush1.msra.mxu0 0.0
        %1765 = vmatprep.subr.mxu0 0.0
        %1766 = vmatpush1.msra.mxu0 0.0
        %1767 = vmatprep.subr.mxu0 0.0
        %1768 = vmatpush1.msra.mxu0 0.0
        %1769 = vmatprep.subr.mxu0 0.0
        %1770 = vmatpush1.msra.mxu0 0.0
        %1771 = vmatprep.subr.mxu0 0.0
        %1772 = vmatpush1.msra.mxu0 0.0
        %1773 = vmatprep.subr.mxu0 0.0
        %1774 = vmatpush1.msra.mxu0 0.0
        %1775 = vmatprep.subr.mxu0 0.0
        %1776 = vmatpush1.msra.mxu0 0.0
        %1777 = vmatprep.subr.mxu0 0.0
        %1778 = vmatpush1.msra.mxu0 0.0
        %1779 = vmatprep.subr.mxu0 0.0
        %1780 = vmatpush1.msra.mxu0 0.0
        %1781 = vmatprep.subr.mxu0 0.0
        %1782 = vmatpush1.msra.mxu0 0.0
        %1783 = vmatprep.subr.mxu0 0.0
        %1784 = vmatpush1.msra.mxu0 0.0
        %1785 = vmatprep.subr.mxu0 0.0
        %1786 = vmatpush1.msra.mxu0 0.0
        %1787 = vmatprep.subr.mxu0 0.0
        %1788 = vmatpush1.msra.mxu0 0.0
        %1789 = vmatprep.subr.mxu0 0.0
        %1790 = vmatpush1.msra.mxu0 0.0
        %1791 = vmatprep.subr.mxu0 0.0
        %1792 = vmatpush1.msra.mxu0 0.0
        %1793 = vmatprep.subr.mxu0 0.0
        %1794 = vmatpush1.msra.mxu0 0.0
        %1795 = vmatprep.subr.mxu0 0.0
        %1796 = vmatpush1.msra.mxu0 0.0
        %1797 = vmatprep.subr.mxu0 0.0
        %1798 = vmatpush1.msra.mxu0 0.0
        %1799 = vmatprep.subr.mxu0 0.0
        %1800 = vmatpush1.msra.mxu0 0.0
        %1801 = vmatprep.subr.mxu0 0.0
        %1802 = vmatpush1.msra.mxu0 0.0
        %1803 = vmatprep.subr.mxu0 0.0
        %1804 = vmatpush1.msra.mxu0 0.0
        %1805 = vmatprep.subr.mxu0 0.0
        %1806 = vmatpush1.msra.mxu0 0.0
        %1807 = vmatprep.subr.mxu0 0.0
        %1808 = vmatpush1.msra.mxu0 0.0
        %1809 = vmatprep.subr.mxu0 0.0
        %1810 = vmatpush1.msra.mxu0 0.0
        %1811 = vmatprep.subr.mxu0 0.0
        %1812 = vmatpush1.msra.mxu0 0.0
        %1813 = vmatprep.subr.mxu0 0.0
        %1814 = vmatpush1.msra.mxu0 0.0
        %1815 = vmatprep.subr.mxu0 0.0
        %1816 = vmatpush1.msra.mxu0 0.0
        %1817 = vmatprep.subr.mxu0 0.0
        %1818 = vmatpush1.msra.mxu0 0.0
        %1819 = vmatprep.mubr.f32.mxu0 0.0
        %v1820 = vand.u32 %v315, 4294901760
        %1821 = vmatmul.mubr.f32.gmra.mrb[0].mxu0 %v1820
        %v1822 = vpop.f32.mrb[0].mxu0
        %v1823 = vadd.f32 %v1744, %v1822
        %v1824 = vpop.f32.mrb[0].mxu0
        %1825 = vmatprep.mubr.f32.mxu0 0.0
        %v1826 = vand.u32 %v318, 4294901760
        %1827 = vmatmul.mubr.f32.gmra.mrb[0].mxu0 %v1826
        %v1828 = vpop.f32.mrb[0].mxu0
        %v1829 = vadd.f32 %v1750, %v1828
        %v1830 = vpop.f32.mrb[0].mxu0
        %1831 = vdwg.mxu0
        %v1833 = vsel %vm313, %v1823, 0
        %v1836 = vsel %vm313, %v1829, 0
        %1838 = vmatprep.subr.mxu0 0.0
        %v1839 = vand.u32 %v311, 4294901760
        %1840 = vmatpush1.msra.mxu0 %v1839
        %1841 = vmatprep.subr.mxu0 0.0
        %v1842 = vand.u32 %v312, 4294901760
        %1843 = vmatpush1.msra.mxu0 %v1842
        %1844 = vmatprep.subr.mxu0 0.0
        %1845 = vmatpush1.msra.mxu0 0.0
        %1846 = vmatprep.subr.mxu0 0.0
        %1847 = vmatpush1.msra.mxu0 0.0
        %1848 = vmatprep.subr.mxu0 0.0
        %1849 = vmatpush1.msra.mxu0 0.0
        %1850 = vmatprep.subr.mxu0 0.0
        %1851 = vmatpush1.msra.mxu0 0.0
        %1852 = vmatprep.subr.mxu0 0.0
        %1853 = vmatpush1.msra.mxu0 0.0
        %1854 = vmatprep.subr.mxu0 0.0
        %1855 = vmatpush1.msra.mxu0 0.0
        %1856 = vmatprep.subr.mxu0 0.0
        %1857 = vmatpush1.msra.mxu0 0.0
        %1858 = vmatprep.subr.mxu0 0.0
        %1859 = vmatpush1.msra.mxu0 0.0
        %1860 = vmatprep.subr.mxu0 0.0
        %1861 = vmatpush1.msra.mxu0 0.0
        %1862 = vmatprep.subr.mxu0 0.0
        %1863 = vmatpush1.msra.mxu0 0.0
        %1864 = vmatprep.subr.mxu0 0.0
        %1865 = vmatpush1.msra.mxu0 0.0
        %1866 = vmatprep.subr.mxu0 0.0
        %1867 = vmatpush1.msra.mxu0 0.0
        %1868 = vmatprep.subr.mxu0 0.0
        %1869 = vmatpush1.msra.mxu0 0.0
        %1870 = vmatprep.subr.mxu0 0.0
        %1871 = vmatpush1.msra.mxu0 0.0
        %1872 = vmatprep.subr.mxu0 0.0
        %1873 = vmatpush1.msra.mxu0 0.0
        %1874 = vmatprep.subr.mxu0 0.0
        %1875 = vmatpush1.msra.mxu0 0.0
        %1876 = vmatprep.subr.mxu0 0.0
        %1877 = vmatpush1.msra.mxu0 0.0
        %1878 = vmatprep.subr.mxu0 0.0
        %1879 = vmatpush1.msra.mxu0 0.0
        %1880 = vmatprep.subr.mxu0 0.0
        %1881 = vmatpush1.msra.mxu0 0.0
        %1882 = vmatprep.subr.mxu0 0.0
        %1883 = vmatpush1.msra.mxu0 0.0
        %1884 = vmatprep.subr.mxu0 0.0
        %1885 = vmatpush1.msra.mxu0 0.0
        %1886 = vmatprep.subr.mxu0 0.0
        %1887 = vmatpush1.msra.mxu0 0.0
        %1888 = vmatprep.subr.mxu0 0.0
        %1889 = vmatpush1.msra.mxu0 0.0
        %1890 = vmatprep.subr.mxu0 0.0
        %1891 = vmatpush1.msra.mxu0 0.0
        %1892 = vmatprep.subr.mxu0 0.0
        %1893 = vmatpush1.msra.mxu0 0.0
        %1894 = vmatprep.subr.mxu0 0.0
        %1895 = vmatpush1.msra.mxu0 0.0
        %1896 = vmatprep.subr.mxu0 0.0
        %1897 = vmatpush1.msra.mxu0 0.0
        %1898 = vmatprep.subr.mxu0 0.0
        %1899 = vmatpush1.msra.mxu0 0.0
        %1900 = vmatprep.subr.mxu0 0.0
        %1901 = vmatpush1.msra.mxu0 0.0
        %1902 = vmatprep.subr.mxu0 0.0
        %1903 = vmatpush1.msra.mxu0 0.0
        %1904 = vmatprep.mubr.f32.mxu0 0.0
        %v1905 = vand.u32 %v1833, 4294901760
        %v1906 = vsub.f32 %v1833, %v1905
        %v1907 = vand.u32 %v1906, 4294901760
        %v1908 = vsub.f32 %v1906, %v1907
        %v1909 = vand.u32 %v1908, 4294901760
        %1910 = vmatmul.mubr.f32.gmra.mrb[0].mxu0 %v1909
        %v1911 = vpop.f32.mrb[0].mxu0
        %v1912 = vadd.f32 0.0, %v1911
        %v1913 = vpop.f32.mrb[0].mxu0
        %1914 = vmatprep.mubr.f32.mxu0 0.0
        %v1915 = vand.u32 %v1836, 4294901760
        %v1916 = vsub.f32 %v1836, %v1915
        %v1917 = vand.u32 %v1916, 4294901760
        %v1918 = vsub.f32 %v1916, %v1917
        %v1919 = vand.u32 %v1918, 4294901760
        %1920 = vmatmul.mubr.f32.gmra.mrb[0].mxu0 %v1919
        %v1921 = vpop.f32.mrb[0].mxu0
        %v1922 = vadd.f32 0.0, %v1921
        %v1923 = vpop.f32.mrb[0].mxu0
        %1924 = vdwg.mxu0
        %1925 = vmatprep.subr.mxu0 0.0
        %v1926 = vand.u32 %v311, 4294901760
        %v1927 = vsub.f32 %v311, %v1926
        %v1928 = vand.u32 %v1927, 4294901760
        %v1929 = vsub.f32 %v1927, %v1928
        %v1930 = vand.u32 %v1929, 4294901760
        %1931 = vmatpush1.msra.mxu0 %v1930
        %1932 = vmatprep.subr.mxu0 0.0
        %v1933 = vand.u32 %v312, 4294901760
        %v1934 = vsub.f32 %v312, %v1933
        %v1935 = vand.u32 %v1934, 4294901760
        %v1936 = vsub.f32 %v1934, %v1935
        %v1937 = vand.u32 %v1936, 4294901760
        %1938 = vmatpush1.msra.mxu0 %v1937
        %1939 = vmatprep.subr.mxu0 0.0
        %1940 = vmatpush1.msra.mxu0 0.0
        %1941 = vmatprep.subr.mxu0 0.0
        %1942 = vmatpush1.msra.mxu0 0.0
        %1943 = vmatprep.subr.mxu0 0.0
        %1944 = vmatpush1.msra.mxu0 0.0
        %1945 = vmatprep.subr.mxu0 0.0
        %1946 = vmatpush1.msra.mxu0 0.0
        %1947 = vmatprep.subr.mxu0 0.0
        %1948 = vmatpush1.msra.mxu0 0.0
        %1949 = vmatprep.subr.mxu0 0.0
        %1950 = vmatpush1.msra.mxu0 0.0
        %1951 = vmatprep.subr.mxu0 0.0
        %1952 = vmatpush1.msra.mxu0 0.0
        %1953 = vmatprep.subr.mxu0 0.0
        %1954 = vmatpush1.msra.mxu0 0.0
        %1955 = vmatprep.subr.mxu0 0.0
        %1956 = vmatpush1.msra.mxu0 0.0
        %1957 = vmatprep.subr.mxu0 0.0
        %1958 = vmatpush1.msra.mxu0 0.0
        %1959 = vmatprep.subr.mxu0 0.0
        %1960 = vmatpush1.msra.mxu0 0.0
        %1961 = vmatprep.subr.mxu0 0.0
        %1962 = vmatpush1.msra.mxu0 0.0
        %1963 = vmatprep.subr.mxu0 0.0
        %1964 = vmatpush1.msra.mxu0 0.0
        %1965 = vmatprep.subr.mxu0 0.0
        %1966 = vmatpush1.msra.mxu0 0.0
        %1967 = vmatprep.subr.mxu0 0.0
        %1968 = vmatpush1.msra.mxu0 0.0
        %1969 = vmatprep.subr.mxu0 0.0
        %1970 = vmatpush1.msra.mxu0 0.0
        %1971 = vmatprep.subr.mxu0 0.0
        %1972 = vmatpush1.msra.mxu0 0.0
        %1973 = vmatprep.subr.mxu0 0.0
        %1974 = vmatpush1.msra.mxu0 0.0
        %1975 = vmatprep.subr.mxu0 0.0
        %1976 = vmatpush1.msra.mxu0 0.0
        %1977 = vmatprep.subr.mxu0 0.0
        %1978 = vmatpush1.msra.mxu0 0.0
        %1979 = vmatprep.subr.mxu0 0.0
        %1980 = vmatpush1.msra.mxu0 0.0
        %1981 = vmatprep.subr.mxu0 0.0
        %1982 = vmatpush1.msra.mxu0 0.0
        %1983 = vmatprep.subr.mxu0 0.0
        %1984 = vmatpush1.msra.mxu0 0.0
        %1985 = vmatprep.subr.mxu0 0.0
        %1986 = vmatpush1.msra.mxu0 0.0
        %1987 = vmatprep.subr.mxu0 0.0
        %1988 = vmatpush1.msra.mxu0 0.0
        %1989 = vmatprep.subr.mxu0 0.0
        %1990 = vmatpush1.msra.mxu0 0.0
        %1991 = vmatprep.subr.mxu0 0.0
        %1992 = vmatpush1.msra.mxu0 0.0
        %1993 = vmatprep.subr.mxu0 0.0
        %1994 = vmatpush1.msra.mxu0 0.0
        %1995 = vmatprep.subr.mxu0 0.0
        %1996 = vmatpush1.msra.mxu0 0.0
        %1997 = vmatprep.subr.mxu0 0.0
        %1998 = vmatpush1.msra.mxu0 0.0
        %1999 = vmatprep.mubr.f32.mxu0 0.0
        %v2000 = vand.u32 %v1833, 4294901760
        %2001 = vmatmul.mubr.f32.gmra.mrb[0].mxu0 %v2000
        %v2002 = vpop.f32.mrb[0].mxu0
        %v2003 = vadd.f32 %v1912, %v2002
        %v2004 = vpop.f32.mrb[0].mxu0
        %2005 = vmatprep.mubr.f32.mxu0 0.0
        %v2006 = vand.u32 %v1836, 4294901760
        %2007 = vmatmul.mubr.f32.gmra.mrb[0].mxu0 %v2006
        %v2008 = vpop.f32.mrb[0].mxu0
        %v2009 = vadd.f32 %v1922, %v2008
        %v2010 = vpop.f32.mrb[0].mxu0
        %2011 = vdwg.mxu0
        %2012 = vmatprep.subr.mxu0 0.0
        %v2013 = vand.u32 %v311, 4294901760
        %v2014 = vsub.f32 %v311, %v2013
        %2015 = vmatpush1.msra.mxu0 %v2014
        %2016 = vmatprep.subr.mxu0 0.0
        %v2017 = vand.u32 %v312, 4294901760
        %v2018 = vsub.f32 %v312, %v2017
        %2019 = vmatpush1.msra.mxu0 %v2018
        %2020 = vmatprep.subr.mxu0 0.0
        %2021 = vmatpush1.msra.mxu0 0.0
        %2022 = vmatprep.subr.mxu0 0.0
        %2023 = vmatpush1.msra.mxu0 0.0
        %2024 = vmatprep.subr.mxu0 0.0
        %2025 = vmatpush1.msra.mxu0 0.0
        %2026 = vmatprep.subr.mxu0 0.0
        %2027 = vmatpush1.msra.mxu0 0.0
        %2028 = vmatprep.subr.mxu0 0.0
        %2029 = vmatpush1.msra.mxu0 0.0
        %2030 = vmatprep.subr.mxu0 0.0
        %2031 = vmatpush1.msra.mxu0 0.0
        %2032 = vmatprep.subr.mxu0 0.0
        %2033 = vmatpush1.msra.mxu0 0.0
        %2034 = vmatprep.subr.mxu0 0.0
        %2035 = vmatpush1.msra.mxu0 0.0
        %2036 = vmatprep.subr.mxu0 0.0
        %2037 = vmatpush1.msra.mxu0 0.0
        %2038 = vmatprep.subr.mxu0 0.0
        %2039 = vmatpush1.msra.mxu0 0.0
        %2040 = vmatprep.subr.mxu0 0.0
        %2041 = vmatpush1.msra.mxu0 0.0
        %2042 = vmatprep.subr.mxu0 0.0
        %2043 = vmatpush1.msra.mxu0 0.0
        %2044 = vmatprep.subr.mxu0 0.0
        %2045 = vmatpush1.msra.mxu0 0.0
        %2046 = vmatprep.subr.mxu0 0.0
        %2047 = vmatpush1.msra.mxu0 0.0
        %2048 = vmatprep.subr.mxu0 0.0
        %2049 = vmatpush1.msra.mxu0 0.0
        %2050 = vmatprep.subr.mxu0 0.0
        %2051 = vmatpush1.msra.mxu0 0.0
        %2052 = vmatprep.subr.mxu0 0.0
        %2053 = vmatpush1.msra.mxu0 0.0
        %2054 = vmatprep.subr.mxu0 0.0
        %2055 = vmatpush1.msra.mxu0 0.0
        %2056 = vmatprep.subr.mxu0 0.0
        %2057 = vmatpush1.msra.mxu0 0.0
        %2058 = vmatprep.subr.mxu0 0.0
        %2059 = vmatpush1.msra.mxu0 0.0
        %2060 = vmatprep.subr.mxu0 0.0
        %2061 = vmatpush1.msra.mxu0 0.0
        %2062 = vmatprep.subr.mxu0 0.0
        %2063 = vmatpush1.msra.mxu0 0.0
        %2064 = vmatprep.subr.mxu0 0.0
        %2065 = vmatpush1.msra.mxu0 0.0
        %2066 = vmatprep.subr.mxu0 0.0
        %2067 = vmatpush1.msra.mxu0 0.0
        %2068 = vmatprep.subr.mxu0 0.0
        %2069 = vmatpush1.msra.mxu0 0.0
        %2070 = vmatprep.subr.mxu0 0.0
        %2071 = vmatpush1.msra.mxu0 0.0
        %2072 = vmatprep.subr.mxu0 0.0
        %2073 = vmatpush1.msra.mxu0 0.0
        %2074 = vmatprep.subr.mxu0 0.0
        %2075 = vmatpush1.msra.mxu0 0.0
        %2076 = vmatprep.subr.mxu0 0.0
        %2077 = vmatpush1.msra.mxu0 0.0
        %2078 = vmatprep.subr.mxu0 0.0
        %2079 = vmatpush1.msra.mxu0 0.0
        %2080 = vmatprep.mubr.f32.mxu0 0.0
        %v2081 = vand.u32 %v1833, 4294901760
        %v2082 = vsub.f32 %v1833, %v2081
        %2083 = vmatmul.mubr.f32.gmra.mrb[0].mxu0 %v2082
        %v2084 = vpop.f32.mrb[0].mxu0
        %v2085 = vadd.f32 %v2003, %v2084
        %v2086 = vpop.f32.mrb[0].mxu0
        %2087 = vmatprep.mubr.f32.mxu0 0.0
        %v2088 = vand.u32 %v1836, 4294901760
        %v2089 = vsub.f32 %v1836, %v2088
        %2090 = vmatmul.mubr.f32.gmra.mrb[0].mxu0 %v2089
        %v2091 = vpop.f32.mrb[0].mxu0
        %v2092 = vadd.f32 %v2009, %v2091
        %v2093 = vpop.f32.mrb[0].mxu0
        %2094 = vdwg.mxu0
        %2095 = vmatprep.subr.mxu0 0.0
        %v2096 = vand.u32 %v311, 4294901760
        %2097 = vmatpush1.msra.mxu0 %v2096
        %2098 = vmatprep.subr.mxu0 0.0
        %v2099 = vand.u32 %v312, 4294901760
        %2100 = vmatpush1.msra.mxu0 %v2099
        %2101 = vmatprep.subr.mxu0 0.0
        %2102 = vmatpush1.msra.mxu0 0.0
        %2103 = vmatprep.subr.mxu0 0.0
        %2104 = vmatpush1.msra.mxu0 0.0
        %2105 = vmatprep.subr.mxu0 0.0
        %2106 = vmatpush1.msra.mxu0 0.0
        %2107 = vmatprep.subr.mxu0 0.0
        %2108 = vmatpush1.msra.mxu0 0.0
        %2109 = vmatprep.subr.mxu0 0.0
        %2110 = vmatpush1.msra.mxu0 0.0
        %2111 = vmatprep.subr.mxu0 0.0
        %2112 = vmatpush1.msra.mxu0 0.0
        %2113 = vmatprep.subr.mxu0 0.0
        %2114 = vmatpush1.msra.mxu0 0.0
        %2115 = vmatprep.subr.mxu0 0.0
        %2116 = vmatpush1.msra.mxu0 0.0
        %2117 = vmatprep.subr.mxu0 0.0
        %2118 = vmatpush1.msra.mxu0 0.0
        %2119 = vmatprep.subr.mxu0 0.0
        %2120 = vmatpush1.msra.mxu0 0.0
        %2121 = vmatprep.subr.mxu0 0.0
        %2122 = vmatpush1.msra.mxu0 0.0
        %2123 = vmatprep.subr.mxu0 0.0
        %2124 = vmatpush1.msra.mxu0 0.0
        %2125 = vmatprep.subr.mxu0 0.0
        %2126 = vmatpush1.msra.mxu0 0.0
        %2127 = vmatprep.subr.mxu0 0.0
        %2128 = vmatpush1.msra.mxu0 0.0
        %2129 = vmatprep.subr.mxu0 0.0
        %2130 = vmatpush1.msra.mxu0 0.0
        %2131 = vmatprep.subr.mxu0 0.0
        %2132 = vmatpush1.msra.mxu0 0.0
        %2133 = vmatprep.subr.mxu0 0.0
        %2134 = vmatpush1.msra.mxu0 0.0
        %2135 = vmatprep.subr.mxu0 0.0
        %2136 = vmatpush1.msra.mxu0 0.0
        %2137 = vmatprep.subr.mxu0 0.0
        %2138 = vmatpush1.msra.mxu0 0.0
        %2139 = vmatprep.subr.mxu0 0.0
        %2140 = vmatpush1.msra.mxu0 0.0
        %2141 = vmatprep.subr.mxu0 0.0
        %2142 = vmatpush1.msra.mxu0 0.0
        %2143 = vmatprep.subr.mxu0 0.0
        %2144 = vmatpush1.msra.mxu0 0.0
        %2145 = vmatprep.subr.mxu0 0.0
        %2146 = vmatpush1.msra.mxu0 0.0
        %2147 = vmatprep.subr.mxu0 0.0
        %2148 = vmatpush1.msra.mxu0 0.0
        %2149 = vmatprep.subr.mxu0 0.0
        %2150 = vmatpush1.msra.mxu0 0.0
        %2151 = vmatprep.subr.mxu0 0.0
        %2152 = vmatpush1.msra.mxu0 0.0
        %2153 = vmatprep.subr.mxu0 0.0
        %2154 = vmatpush1.msra.mxu0 0.0
        %2155 = vmatprep.subr.mxu0 0.0
        %2156 = vmatpush1.msra.mxu0 0.0
        %2157 = vmatprep.subr.mxu0 0.0
        %2158 = vmatpush1.msra.mxu0 0.0
        %2159 = vmatprep.subr.mxu0 0.0
        %2160 = vmatpush1.msra.mxu0 0.0
        %2161 = vmatprep.mubr.f32.mxu0 0.0
        %v2162 = vand.u32 %v1833, 4294901760
        %v2163 = vsub.f32 %v1833, %v2162
        %v2164 = vand.u32 %v2163, 4294901760
        %2165 = vmatmul.mubr.f32.gmra.mrb[0].mxu0 %v2164
        %v2166 = vpop.f32.mrb[0].mxu0
        %v2167 = vadd.f32 %v2085, %v2166
        %v2168 = vpop.f32.mrb[0].mxu0
        %2169 = vmatprep.mubr.f32.mxu0 0.0
        %v2170 = vand.u32 %v1836, 4294901760
        %v2171 = vsub.f32 %v1836, %v2170
        %v2172 = vand.u32 %v2171, 4294901760
        %2173 = vmatmul.mubr.f32.gmra.mrb[0].mxu0 %v2172
        %v2174 = vpop.f32.mrb[0].mxu0
        %v2175 = vadd.f32 %v2092, %v2174
        %v2176 = vpop.f32.mrb[0].mxu0
        %2177 = vdwg.mxu0
        %2178 = vmatprep.subr.mxu0 0.0
        %v2179 = vand.u32 %v311, 4294901760
        %v2180 = vsub.f32 %v311, %v2179
        %v2181 = vand.u32 %v2180, 4294901760
        %2182 = vmatpush1.msra.mxu0 %v2181
        %2183 = vmatprep.subr.mxu0 0.0
        %v2184 = vand.u32 %v312, 4294901760
        %v2185 = vsub.f32 %v312, %v2184
        %v2186 = vand.u32 %v2185, 4294901760
        %2187 = vmatpush1.msra.mxu0 %v2186
        %2188 = vmatprep.subr.mxu0 0.0
        %2189 = vmatpush1.msra.mxu0 0.0
        %2190 = vmatprep.subr.mxu0 0.0
        %2191 = vmatpush1.msra.mxu0 0.0
        %2192 = vmatprep.subr.mxu0 0.0
        %2193 = vmatpush1.msra.mxu0 0.0
        %2194 = vmatprep.subr.mxu0 0.0
        %2195 = vmatpush1.msra.mxu0 0.0
        %2196 = vmatprep.subr.mxu0 0.0
        %2197 = vmatpush1.msra.mxu0 0.0
        %2198 = vmatprep.subr.mxu0 0.0
        %2199 = vmatpush1.msra.mxu0 0.0
        %2200 = vmatprep.subr.mxu0 0.0
        %2201 = vmatpush1.msra.mxu0 0.0
        %2202 = vmatprep.subr.mxu0 0.0
        %2203 = vmatpush1.msra.mxu0 0.0
        %2204 = vmatprep.subr.mxu0 0.0
        %2205 = vmatpush1.msra.mxu0 0.0
        %2206 = vmatprep.subr.mxu0 0.0
        %2207 = vmatpush1.msra.mxu0 0.0
        %2208 = vmatprep.subr.mxu0 0.0
        %2209 = vmatpush1.msra.mxu0 0.0
        %2210 = vmatprep.subr.mxu0 0.0
        %2211 = vmatpush1.msra.mxu0 0.0
        %2212 = vmatprep.subr.mxu0 0.0
        %2213 = vmatpush1.msra.mxu0 0.0
        %2214 = vmatprep.subr.mxu0 0.0
        %2215 = vmatpush1.msra.mxu0 0.0
        %2216 = vmatprep.subr.mxu0 0.0
        %2217 = vmatpush1.msra.mxu0 0.0
        %2218 = vmatprep.subr.mxu0 0.0
        %2219 = vmatpush1.msra.mxu0 0.0
        %2220 = vmatprep.subr.mxu0 0.0
        %2221 = vmatpush1.msra.mxu0 0.0
        %2222 = vmatprep.subr.mxu0 0.0
        %2223 = vmatpush1.msra.mxu0 0.0
        %2224 = vmatprep.subr.mxu0 0.0
        %2225 = vmatpush1.msra.mxu0 0.0
        %2226 = vmatprep.subr.mxu0 0.0
        %2227 = vmatpush1.msra.mxu0 0.0
        %2228 = vmatprep.subr.mxu0 0.0
        %2229 = vmatpush1.msra.mxu0 0.0
        %2230 = vmatprep.subr.mxu0 0.0
        %2231 = vmatpush1.msra.mxu0 0.0
        %2232 = vmatprep.subr.mxu0 0.0
        %2233 = vmatpush1.msra.mxu0 0.0
        %2234 = vmatprep.subr.mxu0 0.0
        %2235 = vmatpush1.msra.mxu0 0.0
        %2236 = vmatprep.subr.mxu0 0.0
        %2237 = vmatpush1.msra.mxu0 0.0
        %2238 = vmatprep.subr.mxu0 0.0
        %2239 = vmatpush1.msra.mxu0 0.0
        %2240 = vmatprep.subr.mxu0 0.0
        %2241 = vmatpush1.msra.mxu0 0.0
        %2242 = vmatprep.subr.mxu0 0.0
        %2243 = vmatpush1.msra.mxu0 0.0
        %2244 = vmatprep.subr.mxu0 0.0
        %2245 = vmatpush1.msra.mxu0 0.0
        %2246 = vmatprep.subr.mxu0 0.0
        %2247 = vmatpush1.msra.mxu0 0.0
        %2248 = vmatprep.mubr.f32.mxu0 0.0
        %v2249 = vand.u32 %v1833, 4294901760
        %2250 = vmatmul.mubr.f32.gmra.mrb[0].mxu0 %v2249
        %v2251 = vpop.f32.mrb[0].mxu0
        %v2252 = vadd.f32 %v2167, %v2251
        %v2253 = vpop.f32.mrb[0].mxu0
        %2254 = vmatprep.mubr.f32.mxu0 0.0
        %v2255 = vand.u32 %v1836, 4294901760
        %2256 = vmatmul.mubr.f32.gmra.mrb[0].mxu0 %v2255
        %v2257 = vpop.f32.mrb[0].mxu0
        %v2258 = vadd.f32 %v2175, %v2257
        %v2259 = vpop.f32.mrb[0].mxu0
        %2260 = vdwg.mxu0
        %2261 = vmatprep.subr.mxu0 0.0
        %v2262 = vand.u32 %v311, 4294901760
        %2263 = vmatpush1.msra.mxu0 %v2262
        %2264 = vmatprep.subr.mxu0 0.0
        %v2265 = vand.u32 %v312, 4294901760
        %2266 = vmatpush1.msra.mxu0 %v2265
        %2267 = vmatprep.subr.mxu0 0.0
        %2268 = vmatpush1.msra.mxu0 0.0
        %2269 = vmatprep.subr.mxu0 0.0
        %2270 = vmatpush1.msra.mxu0 0.0
        %2271 = vmatprep.subr.mxu0 0.0
        %2272 = vmatpush1.msra.mxu0 0.0
        %2273 = vmatprep.subr.mxu0 0.0
        %2274 = vmatpush1.msra.mxu0 0.0
        %2275 = vmatprep.subr.mxu0 0.0
        %2276 = vmatpush1.msra.mxu0 0.0
        %2277 = vmatprep.subr.mxu0 0.0
        %2278 = vmatpush1.msra.mxu0 0.0
        %2279 = vmatprep.subr.mxu0 0.0
        %2280 = vmatpush1.msra.mxu0 0.0
        %2281 = vmatprep.subr.mxu0 0.0
        %2282 = vmatpush1.msra.mxu0 0.0
        %2283 = vmatprep.subr.mxu0 0.0
        %2284 = vmatpush1.msra.mxu0 0.0
        %2285 = vmatprep.subr.mxu0 0.0
        %2286 = vmatpush1.msra.mxu0 0.0
        %2287 = vmatprep.subr.mxu0 0.0
        %2288 = vmatpush1.msra.mxu0 0.0
        %2289 = vmatprep.subr.mxu0 0.0
        %2290 = vmatpush1.msra.mxu0 0.0
        %2291 = vmatprep.subr.mxu0 0.0
        %2292 = vmatpush1.msra.mxu0 0.0
        %2293 = vmatprep.subr.mxu0 0.0
        %2294 = vmatpush1.msra.mxu0 0.0
        %2295 = vmatprep.subr.mxu0 0.0
        %2296 = vmatpush1.msra.mxu0 0.0
        %2297 = vmatprep.subr.mxu0 0.0
        %2298 = vmatpush1.msra.mxu0 0.0
        %2299 = vmatprep.subr.mxu0 0.0
        %2300 = vmatpush1.msra.mxu0 0.0
        %2301 = vmatprep.subr.mxu0 0.0
        %2302 = vmatpush1.msra.mxu0 0.0
        %2303 = vmatprep.subr.mxu0 0.0
        %2304 = vmatpush1.msra.mxu0 0.0
        %2305 = vmatprep.subr.mxu0 0.0
        %2306 = vmatpush1.msra.mxu0 0.0
        %2307 = vmatprep.subr.mxu0 0.0
        %2308 = vmatpush1.msra.mxu0 0.0
        %2309 = vmatprep.subr.mxu0 0.0
        %2310 = vmatpush1.msra.mxu0 0.0
        %2311 = vmatprep.subr.mxu0 0.0
        %2312 = vmatpush1.msra.mxu0 0.0
        %2313 = vmatprep.subr.mxu0 0.0
        %2314 = vmatpush1.msra.mxu0 0.0
        %2315 = vmatprep.subr.mxu0 0.0
        %2316 = vmatpush1.msra.mxu0 0.0
        %2317 = vmatprep.subr.mxu0 0.0
        %2318 = vmatpush1.msra.mxu0 0.0
        %2319 = vmatprep.subr.mxu0 0.0
        %2320 = vmatpush1.msra.mxu0 0.0
        %2321 = vmatprep.subr.mxu0 0.0
        %2322 = vmatpush1.msra.mxu0 0.0
        %2323 = vmatprep.subr.mxu0 0.0
        %2324 = vmatpush1.msra.mxu0 0.0
        %2325 = vmatprep.subr.mxu0 0.0
        %2326 = vmatpush1.msra.mxu0 0.0
        %2327 = vmatprep.mubr.f32.mxu0 0.0
        %v2328 = vand.u32 %v1833, 4294901760
        %2329 = vmatmul.mubr.f32.gmra.mrb[0].mxu0 %v2328
        %v2330 = vpop.f32.mrb[0].mxu0
        %v2331 = vadd.f32 %v2252, %v2330
        %v2332 = vpop.f32.mrb[0].mxu0
        %2333 = vmatprep.mubr.f32.mxu0 0.0
        %v2334 = vand.u32 %v1836, 4294901760
        %2335 = vmatmul.mubr.f32.gmra.mrb[0].mxu0 %v2334
        %v2336 = vpop.f32.mrb[0].mxu0
        %v2337 = vadd.f32 %v2258, %v2336
        %v2338 = vpop.f32.mrb[0].mxu0
        %2339 = vdwg.mxu0
        %v2340 = vmul.f32 %v305, %v305
        %v2341 = vmul.f32 %v306, %v306
        %2342 = vmatprep.subr.mxu0 0.0
        %v2343 = vand.u32 %v2340, 4294901760
        %2344 = vmatpush1.msra.mxu0 %v2343
        %2345 = vmatprep.subr.mxu0 0.0
        %v2346 = vand.u32 %v2341, 4294901760
        %2347 = vmatpush1.msra.mxu0 %v2346
        %2348 = vmatprep.subr.mxu0 0.0
        %2349 = vmatpush1.msra.mxu0 0.0
        %2350 = vmatprep.subr.mxu0 0.0
        %2351 = vmatpush1.msra.mxu0 0.0
        %2352 = vmatprep.subr.mxu0 0.0
        %2353 = vmatpush1.msra.mxu0 0.0
        %2354 = vmatprep.subr.mxu0 0.0
        %2355 = vmatpush1.msra.mxu0 0.0
        %2356 = vmatprep.subr.mxu0 0.0
        %2357 = vmatpush1.msra.mxu0 0.0
        %2358 = vmatprep.subr.mxu0 0.0
        %2359 = vmatpush1.msra.mxu0 0.0
        %2360 = vmatprep.subr.mxu0 0.0
        %2361 = vmatpush1.msra.mxu0 0.0
        %2362 = vmatprep.subr.mxu0 0.0
        %2363 = vmatpush1.msra.mxu0 0.0
        %2364 = vmatprep.subr.mxu0 0.0
        %2365 = vmatpush1.msra.mxu0 0.0
        %2366 = vmatprep.subr.mxu0 0.0
        %2367 = vmatpush1.msra.mxu0 0.0
        %2368 = vmatprep.subr.mxu0 0.0
        %2369 = vmatpush1.msra.mxu0 0.0
        %2370 = vmatprep.subr.mxu0 0.0
        %2371 = vmatpush1.msra.mxu0 0.0
        %2372 = vmatprep.subr.mxu0 0.0
        %2373 = vmatpush1.msra.mxu0 0.0
        %2374 = vmatprep.subr.mxu0 0.0
        %2375 = vmatpush1.msra.mxu0 0.0
        %2376 = vmatprep.subr.mxu0 0.0
        %2377 = vmatpush1.msra.mxu0 0.0
        %2378 = vmatprep.subr.mxu0 0.0
        %2379 = vmatpush1.msra.mxu0 0.0
        %2380 = vmatprep.subr.mxu0 0.0
        %2381 = vmatpush1.msra.mxu0 0.0
        %2382 = vmatprep.subr.mxu0 0.0
        %2383 = vmatpush1.msra.mxu0 0.0
        %2384 = vmatprep.subr.mxu0 0.0
        %2385 = vmatpush1.msra.mxu0 0.0
        %2386 = vmatprep.subr.mxu0 0.0
        %2387 = vmatpush1.msra.mxu0 0.0
        %2388 = vmatprep.subr.mxu0 0.0
        %2389 = vmatpush1.msra.mxu0 0.0
        %2390 = vmatprep.subr.mxu0 0.0
        %2391 = vmatpush1.msra.mxu0 0.0
        %2392 = vmatprep.subr.mxu0 0.0
        %2393 = vmatpush1.msra.mxu0 0.0
        %2394 = vmatprep.subr.mxu0 0.0
        %2395 = vmatpush1.msra.mxu0 0.0
        %2396 = vmatprep.subr.mxu0 0.0
        %2397 = vmatpush1.msra.mxu0 0.0
        %2398 = vmatprep.subr.mxu0 0.0
        %2399 = vmatpush1.msra.mxu0 0.0
        %2400 = vmatprep.subr.mxu0 0.0
        %2401 = vmatpush1.msra.mxu0 0.0
        %2402 = vmatprep.subr.mxu0 0.0
        %2403 = vmatpush1.msra.mxu0 0.0
        %2404 = vmatprep.subr.mxu0 0.0
        %2405 = vmatpush1.msra.mxu0 0.0
        %2406 = vmatprep.subr.mxu0 0.0
        %2407 = vmatpush1.msra.mxu0 0.0
        %2408 = vmatprep.mubr.f32.mxu0 0.0
        %v2409 = vand.u32 %v315, 4294901760
        %v2410 = vsub.f32 %v315, %v2409
        %v2411 = vand.u32 %v2410, 4294901760
        %v2412 = vsub.f32 %v2410, %v2411
        %v2413 = vand.u32 %v2412, 4294901760
        %2414 = vmatmul.mubr.f32.gmra.mrb[0].mxu0 %v2413
        %v2415 = vpop.f32.mrb[0].mxu0
        %v2416 = vadd.f32 0.0, %v2415
        %v2417 = vpop.f32.mrb[0].mxu0
        %2418 = vmatprep.mubr.f32.mxu0 0.0
        %v2419 = vand.u32 %v318, 4294901760
        %v2420 = vsub.f32 %v318, %v2419
        %v2421 = vand.u32 %v2420, 4294901760
        %v2422 = vsub.f32 %v2420, %v2421
        %v2423 = vand.u32 %v2422, 4294901760
        %2424 = vmatmul.mubr.f32.gmra.mrb[0].mxu0 %v2423
        %v2425 = vpop.f32.mrb[0].mxu0
        %v2426 = vadd.f32 0.0, %v2425
        %v2427 = vpop.f32.mrb[0].mxu0
        %2428 = vdwg.mxu0
        %2429 = vmatprep.subr.mxu0 0.0
        %v2430 = vand.u32 %v2340, 4294901760
        %v2431 = vsub.f32 %v2340, %v2430
        %v2432 = vand.u32 %v2431, 4294901760
        %v2433 = vsub.f32 %v2431, %v2432
        %v2434 = vand.u32 %v2433, 4294901760
        %2435 = vmatpush1.msra.mxu0 %v2434
        %2436 = vmatprep.subr.mxu0 0.0
        %v2437 = vand.u32 %v2341, 4294901760
        %v2438 = vsub.f32 %v2341, %v2437
        %v2439 = vand.u32 %v2438, 4294901760
        %v2440 = vsub.f32 %v2438, %v2439
        %v2441 = vand.u32 %v2440, 4294901760
        %2442 = vmatpush1.msra.mxu0 %v2441
        %2443 = vmatprep.subr.mxu0 0.0
        %2444 = vmatpush1.msra.mxu0 0.0
        %2445 = vmatprep.subr.mxu0 0.0
        %2446 = vmatpush1.msra.mxu0 0.0
        %2447 = vmatprep.subr.mxu0 0.0
        %2448 = vmatpush1.msra.mxu0 0.0
        %2449 = vmatprep.subr.mxu0 0.0
        %2450 = vmatpush1.msra.mxu0 0.0
        %2451 = vmatprep.subr.mxu0 0.0
        %2452 = vmatpush1.msra.mxu0 0.0
        %2453 = vmatprep.subr.mxu0 0.0
        %2454 = vmatpush1.msra.mxu0 0.0
        %2455 = vmatprep.subr.mxu0 0.0
        %2456 = vmatpush1.msra.mxu0 0.0
        %2457 = vmatprep.subr.mxu0 0.0
        %2458 = vmatpush1.msra.mxu0 0.0
        %2459 = vmatprep.subr.mxu0 0.0
        %2460 = vmatpush1.msra.mxu0 0.0
        %2461 = vmatprep.subr.mxu0 0.0
        %2462 = vmatpush1.msra.mxu0 0.0
        %2463 = vmatprep.subr.mxu0 0.0
        %2464 = vmatpush1.msra.mxu0 0.0
        %2465 = vmatprep.subr.mxu0 0.0
        %2466 = vmatpush1.msra.mxu0 0.0
        %2467 = vmatprep.subr.mxu0 0.0
        %2468 = vmatpush1.msra.mxu0 0.0
        %2469 = vmatprep.subr.mxu0 0.0
        %2470 = vmatpush1.msra.mxu0 0.0
        %2471 = vmatprep.subr.mxu0 0.0
        %2472 = vmatpush1.msra.mxu0 0.0
        %2473 = vmatprep.subr.mxu0 0.0
        %2474 = vmatpush1.msra.mxu0 0.0
        %2475 = vmatprep.subr.mxu0 0.0
        %2476 = vmatpush1.msra.mxu0 0.0
        %2477 = vmatprep.subr.mxu0 0.0
        %2478 = vmatpush1.msra.mxu0 0.0
        %2479 = vmatprep.subr.mxu0 0.0
        %2480 = vmatpush1.msra.mxu0 0.0
        %2481 = vmatprep.subr.mxu0 0.0
        %2482 = vmatpush1.msra.mxu0 0.0
        %2483 = vmatprep.subr.mxu0 0.0
        %2484 = vmatpush1.msra.mxu0 0.0
        %2485 = vmatprep.subr.mxu0 0.0
        %2486 = vmatpush1.msra.mxu0 0.0
        %2487 = vmatprep.subr.mxu0 0.0
        %2488 = vmatpush1.msra.mxu0 0.0
        %2489 = vmatprep.subr.mxu0 0.0
        %2490 = vmatpush1.msra.mxu0 0.0
        %2491 = vmatprep.subr.mxu0 0.0
        %2492 = vmatpush1.msra.mxu0 0.0
        %2493 = vmatprep.subr.mxu0 0.0
        %2494 = vmatpush1.msra.mxu0 0.0
        %2495 = vmatprep.subr.mxu0 0.0
        %2496 = vmatpush1.msra.mxu0 0.0
        %2497 = vmatprep.subr.mxu0 0.0
        %2498 = vmatpush1.msra.mxu0 0.0
        %2499 = vmatprep.subr.mxu0 0.0
        %2500 = vmatpush1.msra.mxu0 0.0
        %2501 = vmatprep.subr.mxu0 0.0
        %2502 = vmatpush1.msra.mxu0 0.0
        %2503 = vmatprep.mubr.f32.mxu0 0.0
        %v2504 = vand.u32 %v315, 4294901760
        %2505 = vmatmul.mubr.f32.gmra.mrb[0].mxu0 %v2504
        %v2506 = vpop.f32.mrb[0].mxu0
        %v2507 = vadd.f32 %v2416, %v2506
        %v2508 = vpop.f32.mrb[0].mxu0
        %2509 = vmatprep.mubr.f32.mxu0 0.0
        %v2510 = vand.u32 %v318, 4294901760
        %2511 = vmatmul.mubr.f32.gmra.mrb[0].mxu0 %v2510
        %v2512 = vpop.f32.mrb[0].mxu0
        %v2513 = vadd.f32 %v2426, %v2512
        %v2514 = vpop.f32.mrb[0].mxu0
        %2515 = vdwg.mxu0
        %2516 = vmatprep.subr.mxu0 0.0
        %v2517 = vand.u32 %v2340, 4294901760
        %v2518 = vsub.f32 %v2340, %v2517
        %2519 = vmatpush1.msra.mxu0 %v2518
        %2520 = vmatprep.subr.mxu0 0.0
        %v2521 = vand.u32 %v2341, 4294901760
        %v2522 = vsub.f32 %v2341, %v2521
        %2523 = vmatpush1.msra.mxu0 %v2522
        %2524 = vmatprep.subr.mxu0 0.0
        %2525 = vmatpush1.msra.mxu0 0.0
        %2526 = vmatprep.subr.mxu0 0.0
        %2527 = vmatpush1.msra.mxu0 0.0
        %2528 = vmatprep.subr.mxu0 0.0
        %2529 = vmatpush1.msra.mxu0 0.0
        %2530 = vmatprep.subr.mxu0 0.0
        %2531 = vmatpush1.msra.mxu0 0.0
        %2532 = vmatprep.subr.mxu0 0.0
        %2533 = vmatpush1.msra.mxu0 0.0
        %2534 = vmatprep.subr.mxu0 0.0
        %2535 = vmatpush1.msra.mxu0 0.0
        %2536 = vmatprep.subr.mxu0 0.0
        %2537 = vmatpush1.msra.mxu0 0.0
        %2538 = vmatprep.subr.mxu0 0.0
        %2539 = vmatpush1.msra.mxu0 0.0
        %2540 = vmatprep.subr.mxu0 0.0
        %2541 = vmatpush1.msra.mxu0 0.0
        %2542 = vmatprep.subr.mxu0 0.0
        %2543 = vmatpush1.msra.mxu0 0.0
        %2544 = vmatprep.subr.mxu0 0.0
        %2545 = vmatpush1.msra.mxu0 0.0
        %2546 = vmatprep.subr.mxu0 0.0
        %2547 = vmatpush1.msra.mxu0 0.0
        %2548 = vmatprep.subr.mxu0 0.0
        %2549 = vmatpush1.msra.mxu0 0.0
        %2550 = vmatprep.subr.mxu0 0.0
        %2551 = vmatpush1.msra.mxu0 0.0
        %2552 = vmatprep.subr.mxu0 0.0
        %2553 = vmatpush1.msra.mxu0 0.0
        %2554 = vmatprep.subr.mxu0 0.0
        %2555 = vmatpush1.msra.mxu0 0.0
        %2556 = vmatprep.subr.mxu0 0.0
        %2557 = vmatpush1.msra.mxu0 0.0
        %2558 = vmatprep.subr.mxu0 0.0
        %2559 = vmatpush1.msra.mxu0 0.0
        %2560 = vmatprep.subr.mxu0 0.0
        %2561 = vmatpush1.msra.mxu0 0.0
        %2562 = vmatprep.subr.mxu0 0.0
        %2563 = vmatpush1.msra.mxu0 0.0
        %2564 = vmatprep.subr.mxu0 0.0
        %2565 = vmatpush1.msra.mxu0 0.0
        %2566 = vmatprep.subr.mxu0 0.0
        %2567 = vmatpush1.msra.mxu0 0.0
        %2568 = vmatprep.subr.mxu0 0.0
        %2569 = vmatpush1.msra.mxu0 0.0
        %2570 = vmatprep.subr.mxu0 0.0
        %2571 = vmatpush1.msra.mxu0 0.0
        %2572 = vmatprep.subr.mxu0 0.0
        %2573 = vmatpush1.msra.mxu0 0.0
        %2574 = vmatprep.subr.mxu0 0.0
        %2575 = vmatpush1.msra.mxu0 0.0
        %2576 = vmatprep.subr.mxu0 0.0
        %2577 = vmatpush1.msra.mxu0 0.0
        %2578 = vmatprep.subr.mxu0 0.0
        %2579 = vmatpush1.msra.mxu0 0.0
        %2580 = vmatprep.subr.mxu0 0.0
        %2581 = vmatpush1.msra.mxu0 0.0
        %2582 = vmatprep.subr.mxu0 0.0
        %2583 = vmatpush1.msra.mxu0 0.0
        %2584 = vmatprep.mubr.f32.mxu0 0.0
        %v2585 = vand.u32 %v315, 4294901760
        %v2586 = vsub.f32 %v315, %v2585
        %2587 = vmatmul.mubr.f32.gmra.mrb[0].mxu0 %v2586
        %v2588 = vpop.f32.mrb[0].mxu0
        %v2589 = vadd.f32 %v2507, %v2588
        %v2590 = vpop.f32.mrb[0].mxu0
        %2591 = vmatprep.mubr.f32.mxu0 0.0
        %v2592 = vand.u32 %v318, 4294901760
        %v2593 = vsub.f32 %v318, %v2592
        %2594 = vmatmul.mubr.f32.gmra.mrb[0].mxu0 %v2593
        %v2595 = vpop.f32.mrb[0].mxu0
        %v2596 = vadd.f32 %v2513, %v2595
        %v2597 = vpop.f32.mrb[0].mxu0
        %2598 = vdwg.mxu0
        %2599 = vmatprep.subr.mxu0 0.0
        %v2600 = vand.u32 %v2340, 4294901760
        %2601 = vmatpush1.msra.mxu0 %v2600
        %2602 = vmatprep.subr.mxu0 0.0
        %v2603 = vand.u32 %v2341, 4294901760
        %2604 = vmatpush1.msra.mxu0 %v2603
        %2605 = vmatprep.subr.mxu0 0.0
        %2606 = vmatpush1.msra.mxu0 0.0
        %2607 = vmatprep.subr.mxu0 0.0
        %2608 = vmatpush1.msra.mxu0 0.0
        %2609 = vmatprep.subr.mxu0 0.0
        %2610 = vmatpush1.msra.mxu0 0.0
        %2611 = vmatprep.subr.mxu0 0.0
        %2612 = vmatpush1.msra.mxu0 0.0
        %2613 = vmatprep.subr.mxu0 0.0
        %2614 = vmatpush1.msra.mxu0 0.0
        %2615 = vmatprep.subr.mxu0 0.0
        %2616 = vmatpush1.msra.mxu0 0.0
        %2617 = vmatprep.subr.mxu0 0.0
        %2618 = vmatpush1.msra.mxu0 0.0
        %2619 = vmatprep.subr.mxu0 0.0
        %2620 = vmatpush1.msra.mxu0 0.0
        %2621 = vmatprep.subr.mxu0 0.0
        %2622 = vmatpush1.msra.mxu0 0.0
        %2623 = vmatprep.subr.mxu0 0.0
        %2624 = vmatpush1.msra.mxu0 0.0
        %2625 = vmatprep.subr.mxu0 0.0
        %2626 = vmatpush1.msra.mxu0 0.0
        %2627 = vmatprep.subr.mxu0 0.0
        %2628 = vmatpush1.msra.mxu0 0.0
        %2629 = vmatprep.subr.mxu0 0.0
        %2630 = vmatpush1.msra.mxu0 0.0
        %2631 = vmatprep.subr.mxu0 0.0
        %2632 = vmatpush1.msra.mxu0 0.0
        %2633 = vmatprep.subr.mxu0 0.0
        %2634 = vmatpush1.msra.mxu0 0.0
        %2635 = vmatprep.subr.mxu0 0.0
        %2636 = vmatpush1.msra.mxu0 0.0
        %2637 = vmatprep.subr.mxu0 0.0
        %2638 = vmatpush1.msra.mxu0 0.0
        %2639 = vmatprep.subr.mxu0 0.0
        %2640 = vmatpush1.msra.mxu0 0.0
        %2641 = vmatprep.subr.mxu0 0.0
        %2642 = vmatpush1.msra.mxu0 0.0
        %2643 = vmatprep.subr.mxu0 0.0
        %2644 = vmatpush1.msra.mxu0 0.0
        %2645 = vmatprep.subr.mxu0 0.0
        %2646 = vmatpush1.msra.mxu0 0.0
        %2647 = vmatprep.subr.mxu0 0.0
        %2648 = vmatpush1.msra.mxu0 0.0
        %2649 = vmatprep.subr.mxu0 0.0
        %2650 = vmatpush1.msra.mxu0 0.0
        %2651 = vmatprep.subr.mxu0 0.0
        %2652 = vmatpush1.msra.mxu0 0.0
        %2653 = vmatprep.subr.mxu0 0.0
        %2654 = vmatpush1.msra.mxu0 0.0
        %2655 = vmatprep.subr.mxu0 0.0
        %2656 = vmatpush1.msra.mxu0 0.0
        %2657 = vmatprep.subr.mxu0 0.0
        %2658 = vmatpush1.msra.mxu0 0.0
        %2659 = vmatprep.subr.mxu0 0.0
        %2660 = vmatpush1.msra.mxu0 0.0
        %2661 = vmatprep.subr.mxu0 0.0
        %2662 = vmatpush1.msra.mxu0 0.0
        %2663 = vmatprep.subr.mxu0 0.0
        %2664 = vmatpush1.msra.mxu0 0.0
        %2665 = vmatprep.mubr.f32.mxu0 0.0
        %v2666 = vand.u32 %v315, 4294901760
        %v2667 = vsub.f32 %v315, %v2666
        %v2668 = vand.u32 %v2667, 4294901760
        %2669 = vmatmul.mubr.f32.gmra.mrb[0].mxu0 %v2668
        %v2670 = vpop.f32.mrb[0].mxu0
        %v2671 = vadd.f32 %v2589, %v2670
        %v2672 = vpop.f32.mrb[0].mxu0
        %2673 = vmatprep.mubr.f32.mxu0 0.0
        %v2674 = vand.u32 %v318, 4294901760
        %v2675 = vsub.f32 %v318, %v2674
        %v2676 = vand.u32 %v2675, 4294901760
        %2677 = vmatmul.mubr.f32.gmra.mrb[0].mxu0 %v2676
        %v2678 = vpop.f32.mrb[0].mxu0
        %v2679 = vadd.f32 %v2596, %v2678
        %v2680 = vpop.f32.mrb[0].mxu0
        %2681 = vdwg.mxu0
        %2682 = vmatprep.subr.mxu0 0.0
        %v2683 = vand.u32 %v2340, 4294901760
        %v2684 = vsub.f32 %v2340, %v2683
        %v2685 = vand.u32 %v2684, 4294901760
        %2686 = vmatpush1.msra.mxu0 %v2685
        %2687 = vmatprep.subr.mxu0 0.0
        %v2688 = vand.u32 %v2341, 4294901760
        %v2689 = vsub.f32 %v2341, %v2688
        %v2690 = vand.u32 %v2689, 4294901760
        %2691 = vmatpush1.msra.mxu0 %v2690
        %2692 = vmatprep.subr.mxu0 0.0
        %2693 = vmatpush1.msra.mxu0 0.0
        %2694 = vmatprep.subr.mxu0 0.0
        %2695 = vmatpush1.msra.mxu0 0.0
        %2696 = vmatprep.subr.mxu0 0.0
        %2697 = vmatpush1.msra.mxu0 0.0
        %2698 = vmatprep.subr.mxu0 0.0
        %2699 = vmatpush1.msra.mxu0 0.0
        %2700 = vmatprep.subr.mxu0 0.0
        %2701 = vmatpush1.msra.mxu0 0.0
        %2702 = vmatprep.subr.mxu0 0.0
        %2703 = vmatpush1.msra.mxu0 0.0
        %2704 = vmatprep.subr.mxu0 0.0
        %2705 = vmatpush1.msra.mxu0 0.0
        %2706 = vmatprep.subr.mxu0 0.0
        %2707 = vmatpush1.msra.mxu0 0.0
        %2708 = vmatprep.subr.mxu0 0.0
        %2709 = vmatpush1.msra.mxu0 0.0
        %2710 = vmatprep.subr.mxu0 0.0
        %2711 = vmatpush1.msra.mxu0 0.0
        %2712 = vmatprep.subr.mxu0 0.0
        %2713 = vmatpush1.msra.mxu0 0.0
        %2714 = vmatprep.subr.mxu0 0.0
        %2715 = vmatpush1.msra.mxu0 0.0
        %2716 = vmatprep.subr.mxu0 0.0
        %2717 = vmatpush1.msra.mxu0 0.0
        %2718 = vmatprep.subr.mxu0 0.0
        %2719 = vmatpush1.msra.mxu0 0.0
        %2720 = vmatprep.subr.mxu0 0.0
        %2721 = vmatpush1.msra.mxu0 0.0
        %2722 = vmatprep.subr.mxu0 0.0
        %2723 = vmatpush1.msra.mxu0 0.0
        %2724 = vmatprep.subr.mxu0 0.0
        %2725 = vmatpush1.msra.mxu0 0.0
        %2726 = vmatprep.subr.mxu0 0.0
        %2727 = vmatpush1.msra.mxu0 0.0
        %2728 = vmatprep.subr.mxu0 0.0
        %2729 = vmatpush1.msra.mxu0 0.0
        %2730 = vmatprep.subr.mxu0 0.0
        %2731 = vmatpush1.msra.mxu0 0.0
        %2732 = vmatprep.subr.mxu0 0.0
        %2733 = vmatpush1.msra.mxu0 0.0
        %2734 = vmatprep.subr.mxu0 0.0
        %2735 = vmatpush1.msra.mxu0 0.0
        %2736 = vmatprep.subr.mxu0 0.0
        %2737 = vmatpush1.msra.mxu0 0.0
        %2738 = vmatprep.subr.mxu0 0.0
        %2739 = vmatpush1.msra.mxu0 0.0
        %2740 = vmatprep.subr.mxu0 0.0
        %2741 = vmatpush1.msra.mxu0 0.0
        %2742 = vmatprep.subr.mxu0 0.0
        %2743 = vmatpush1.msra.mxu0 0.0
        %2744 = vmatprep.subr.mxu0 0.0
        %2745 = vmatpush1.msra.mxu0 0.0
        %2746 = vmatprep.subr.mxu0 0.0
        %2747 = vmatpush1.msra.mxu0 0.0
        %2748 = vmatprep.subr.mxu0 0.0
        %2749 = vmatpush1.msra.mxu0 0.0
        %2750 = vmatprep.subr.mxu0 0.0
        %2751 = vmatpush1.msra.mxu0 0.0
        %2752 = vmatprep.mubr.f32.mxu0 0.0
        %v2753 = vand.u32 %v315, 4294901760
        %2754 = vmatmul.mubr.f32.gmra.mrb[0].mxu0 %v2753
        %v2755 = vpop.f32.mrb[0].mxu0
        %v2756 = vadd.f32 %v2671, %v2755
        %v2757 = vpop.f32.mrb[0].mxu0
        %2758 = vmatprep.mubr.f32.mxu0 0.0
        %v2759 = vand.u32 %v318, 4294901760
        %2760 = vmatmul.mubr.f32.gmra.mrb[0].mxu0 %v2759
        %v2761 = vpop.f32.mrb[0].mxu0
        %v2762 = vadd.f32 %v2679, %v2761
        %v2763 = vpop.f32.mrb[0].mxu0
        %2764 = vdwg.mxu0
        %2765 = vmatprep.subr.mxu0 0.0
        %v2766 = vand.u32 %v2340, 4294901760
        %2767 = vmatpush1.msra.mxu0 %v2766
        %2768 = vmatprep.subr.mxu0 0.0
        %v2769 = vand.u32 %v2341, 4294901760
        %2770 = vmatpush1.msra.mxu0 %v2769
        %2771 = vmatprep.subr.mxu0 0.0
        %2772 = vmatpush1.msra.mxu0 0.0
        %2773 = vmatprep.subr.mxu0 0.0
        %2774 = vmatpush1.msra.mxu0 0.0
        %2775 = vmatprep.subr.mxu0 0.0
        %2776 = vmatpush1.msra.mxu0 0.0
        %2777 = vmatprep.subr.mxu0 0.0
        %2778 = vmatpush1.msra.mxu0 0.0
        %2779 = vmatprep.subr.mxu0 0.0
        %2780 = vmatpush1.msra.mxu0 0.0
        %2781 = vmatprep.subr.mxu0 0.0
        %2782 = vmatpush1.msra.mxu0 0.0
        %2783 = vmatprep.subr.mxu0 0.0
        %2784 = vmatpush1.msra.mxu0 0.0
        %2785 = vmatprep.subr.mxu0 0.0
        %2786 = vmatpush1.msra.mxu0 0.0
        %2787 = vmatprep.subr.mxu0 0.0
        %2788 = vmatpush1.msra.mxu0 0.0
        %2789 = vmatprep.subr.mxu0 0.0
        %2790 = vmatpush1.msra.mxu0 0.0
        %2791 = vmatprep.subr.mxu0 0.0
        %2792 = vmatpush1.msra.mxu0 0.0
        %2793 = vmatprep.subr.mxu0 0.0
        %2794 = vmatpush1.msra.mxu0 0.0
        %2795 = vmatprep.subr.mxu0 0.0
        %2796 = vmatpush1.msra.mxu0 0.0
        %2797 = vmatprep.subr.mxu0 0.0
        %2798 = vmatpush1.msra.mxu0 0.0
        %2799 = vmatprep.subr.mxu0 0.0
        %2800 = vmatpush1.msra.mxu0 0.0
        %2801 = vmatprep.subr.mxu0 0.0
        %2802 = vmatpush1.msra.mxu0 0.0
        %2803 = vmatprep.subr.mxu0 0.0
        %2804 = vmatpush1.msra.mxu0 0.0
        %2805 = vmatprep.subr.mxu0 0.0
        %2806 = vmatpush1.msra.mxu0 0.0
        %2807 = vmatprep.subr.mxu0 0.0
        %2808 = vmatpush1.msra.mxu0 0.0
        %2809 = vmatprep.subr.mxu0 0.0
        %2810 = vmatpush1.msra.mxu0 0.0
        %2811 = vmatprep.subr.mxu0 0.0
        %2812 = vmatpush1.msra.mxu0 0.0
        %2813 = vmatprep.subr.mxu0 0.0
        %2814 = vmatpush1.msra.mxu0 0.0
        %2815 = vmatprep.subr.mxu0 0.0
        %2816 = vmatpush1.msra.mxu0 0.0
        %2817 = vmatprep.subr.mxu0 0.0
        %2818 = vmatpush1.msra.mxu0 0.0
        %2819 = vmatprep.subr.mxu0 0.0
        %2820 = vmatpush1.msra.mxu0 0.0
        %2821 = vmatprep.subr.mxu0 0.0
        %2822 = vmatpush1.msra.mxu0 0.0
        %2823 = vmatprep.subr.mxu0 0.0
        %2824 = vmatpush1.msra.mxu0 0.0
        %2825 = vmatprep.subr.mxu0 0.0
        %2826 = vmatpush1.msra.mxu0 0.0
        %2827 = vmatprep.subr.mxu0 0.0
        %2828 = vmatpush1.msra.mxu0 0.0
        %2829 = vmatprep.subr.mxu0 0.0
        %2830 = vmatpush1.msra.mxu0 0.0
        %2831 = vmatprep.mubr.f32.mxu0 0.0
        %v2832 = vand.u32 %v315, 4294901760
        %2833 = vmatmul.mubr.f32.gmra.mrb[0].mxu0 %v2832
        %v2834 = vpop.f32.mrb[0].mxu0
        %v2835 = vadd.f32 %v2756, %v2834
        %v2836 = vpop.f32.mrb[0].mxu0
        %2837 = vmatprep.mubr.f32.mxu0 0.0
        %v2838 = vand.u32 %v318, 4294901760
        %2839 = vmatmul.mubr.f32.gmra.mrb[0].mxu0 %v2838
        %v2840 = vpop.f32.mrb[0].mxu0
        %v2841 = vadd.f32 %v2762, %v2840
        %v2842 = vpop.f32.mrb[0].mxu0
        %2843 = vdwg.mxu0
        %v2845 = vsel %vm313, %v2835, 0
        %v2848 = vsel %vm313, %v2841, 0
        %2850 = vmatprep.subr.mxu0 0.0
        %v2851 = vand.u32 %v311, 4294901760
        %2852 = vmatpush1.msra.mxu0 %v2851
        %2853 = vmatprep.subr.mxu0 0.0
        %v2854 = vand.u32 %v312, 4294901760
        %2855 = vmatpush1.msra.mxu0 %v2854
        %2856 = vmatprep.subr.mxu0 0.0
        %2857 = vmatpush1.msra.mxu0 0.0
        %2858 = vmatprep.subr.mxu0 0.0
        %2859 = vmatpush1.msra.mxu0 0.0
        %2860 = vmatprep.subr.mxu0 0.0
        %2861 = vmatpush1.msra.mxu0 0.0
        %2862 = vmatprep.subr.mxu0 0.0
        %2863 = vmatpush1.msra.mxu0 0.0
        %2864 = vmatprep.subr.mxu0 0.0
        %2865 = vmatpush1.msra.mxu0 0.0
        %2866 = vmatprep.subr.mxu0 0.0
        %2867 = vmatpush1.msra.mxu0 0.0
        %2868 = vmatprep.subr.mxu0 0.0
        %2869 = vmatpush1.msra.mxu0 0.0
        %2870 = vmatprep.subr.mxu0 0.0
        %2871 = vmatpush1.msra.mxu0 0.0
        %2872 = vmatprep.subr.mxu0 0.0
        %2873 = vmatpush1.msra.mxu0 0.0
        %2874 = vmatprep.subr.mxu0 0.0
        %2875 = vmatpush1.msra.mxu0 0.0
        %2876 = vmatprep.subr.mxu0 0.0
        %2877 = vmatpush1.msra.mxu0 0.0
        %2878 = vmatprep.subr.mxu0 0.0
        %2879 = vmatpush1.msra.mxu0 0.0
        %2880 = vmatprep.subr.mxu0 0.0
        %2881 = vmatpush1.msra.mxu0 0.0
        %2882 = vmatprep.subr.mxu0 0.0
        %2883 = vmatpush1.msra.mxu0 0.0
        %2884 = vmatprep.subr.mxu0 0.0
        %2885 = vmatpush1.msra.mxu0 0.0
        %2886 = vmatprep.subr.mxu0 0.0
        %2887 = vmatpush1.msra.mxu0 0.0
        %2888 = vmatprep.subr.mxu0 0.0
        %2889 = vmatpush1.msra.mxu0 0.0
        %2890 = vmatprep.subr.mxu0 0.0
        %2891 = vmatpush1.msra.mxu0 0.0
        %2892 = vmatprep.subr.mxu0 0.0
        %2893 = vmatpush1.msra.mxu0 0.0
        %2894 = vmatprep.subr.mxu0 0.0
        %2895 = vmatpush1.msra.mxu0 0.0
        %2896 = vmatprep.subr.mxu0 0.0
        %2897 = vmatpush1.msra.mxu0 0.0
        %2898 = vmatprep.subr.mxu0 0.0
        %2899 = vmatpush1.msra.mxu0 0.0
        %2900 = vmatprep.subr.mxu0 0.0
        %2901 = vmatpush1.msra.mxu0 0.0
        %2902 = vmatprep.subr.mxu0 0.0
        %2903 = vmatpush1.msra.mxu0 0.0
        %2904 = vmatprep.subr.mxu0 0.0
        %2905 = vmatpush1.msra.mxu0 0.0
        %2906 = vmatprep.subr.mxu0 0.0
        %2907 = vmatpush1.msra.mxu0 0.0
        %2908 = vmatprep.subr.mxu0 0.0
        %2909 = vmatpush1.msra.mxu0 0.0
        %2910 = vmatprep.subr.mxu0 0.0
        %2911 = vmatpush1.msra.mxu0 0.0
        %2912 = vmatprep.subr.mxu0 0.0
        %2913 = vmatpush1.msra.mxu0 0.0
        %2914 = vmatprep.subr.mxu0 0.0
        %2915 = vmatpush1.msra.mxu0 0.0
        %2916 = vmatprep.mubr.f32.mxu0 0.0
        %v2917 = vand.u32 %v2845, 4294901760
        %v2918 = vsub.f32 %v2845, %v2917
        %v2919 = vand.u32 %v2918, 4294901760
        %v2920 = vsub.f32 %v2918, %v2919
        %v2921 = vand.u32 %v2920, 4294901760
        %2922 = vmatmul.mubr.f32.gmra.mrb[0].mxu0 %v2921
        %v2923 = vpop.f32.mrb[0].mxu0
        %v2924 = vadd.f32 0.0, %v2923
        %v2925 = vpop.f32.mrb[0].mxu0
        %2926 = vmatprep.mubr.f32.mxu0 0.0
        %v2927 = vand.u32 %v2848, 4294901760
        %v2928 = vsub.f32 %v2848, %v2927
        %v2929 = vand.u32 %v2928, 4294901760
        %v2930 = vsub.f32 %v2928, %v2929
        %v2931 = vand.u32 %v2930, 4294901760
        %2932 = vmatmul.mubr.f32.gmra.mrb[0].mxu0 %v2931
        %v2933 = vpop.f32.mrb[0].mxu0
        %v2934 = vadd.f32 0.0, %v2933
        %v2935 = vpop.f32.mrb[0].mxu0
        %2936 = vdwg.mxu0
        %2937 = vmatprep.subr.mxu0 0.0
        %v2938 = vand.u32 %v311, 4294901760
        %v2939 = vsub.f32 %v311, %v2938
        %v2940 = vand.u32 %v2939, 4294901760
        %v2941 = vsub.f32 %v2939, %v2940
        %v2942 = vand.u32 %v2941, 4294901760
        %2943 = vmatpush1.msra.mxu0 %v2942
        %2944 = vmatprep.subr.mxu0 0.0
        %v2945 = vand.u32 %v312, 4294901760
        %v2946 = vsub.f32 %v312, %v2945
        %v2947 = vand.u32 %v2946, 4294901760
        %v2948 = vsub.f32 %v2946, %v2947
        %v2949 = vand.u32 %v2948, 4294901760
        %2950 = vmatpush1.msra.mxu0 %v2949
        %2951 = vmatprep.subr.mxu0 0.0
        %2952 = vmatpush1.msra.mxu0 0.0
        %2953 = vmatprep.subr.mxu0 0.0
        %2954 = vmatpush1.msra.mxu0 0.0
        %2955 = vmatprep.subr.mxu0 0.0
        %2956 = vmatpush1.msra.mxu0 0.0
        %2957 = vmatprep.subr.mxu0 0.0
        %2958 = vmatpush1.msra.mxu0 0.0
        %2959 = vmatprep.subr.mxu0 0.0
        %2960 = vmatpush1.msra.mxu0 0.0
        %2961 = vmatprep.subr.mxu0 0.0
        %2962 = vmatpush1.msra.mxu0 0.0
        %2963 = vmatprep.subr.mxu0 0.0
        %2964 = vmatpush1.msra.mxu0 0.0
        %2965 = vmatprep.subr.mxu0 0.0
        %2966 = vmatpush1.msra.mxu0 0.0
        %2967 = vmatprep.subr.mxu0 0.0
        %2968 = vmatpush1.msra.mxu0 0.0
        %2969 = vmatprep.subr.mxu0 0.0
        %2970 = vmatpush1.msra.mxu0 0.0
        %2971 = vmatprep.subr.mxu0 0.0
        %2972 = vmatpush1.msra.mxu0 0.0
        %2973 = vmatprep.subr.mxu0 0.0
        %2974 = vmatpush1.msra.mxu0 0.0
        %2975 = vmatprep.subr.mxu0 0.0
        %2976 = vmatpush1.msra.mxu0 0.0
        %2977 = vmatprep.subr.mxu0 0.0
        %2978 = vmatpush1.msra.mxu0 0.0
        %2979 = vmatprep.subr.mxu0 0.0
        %2980 = vmatpush1.msra.mxu0 0.0
        %2981 = vmatprep.subr.mxu0 0.0
        %2982 = vmatpush1.msra.mxu0 0.0
        %2983 = vmatprep.subr.mxu0 0.0
        %2984 = vmatpush1.msra.mxu0 0.0
        %2985 = vmatprep.subr.mxu0 0.0
        %2986 = vmatpush1.msra.mxu0 0.0
        %2987 = vmatprep.subr.mxu0 0.0
        %2988 = vmatpush1.msra.mxu0 0.0
        %2989 = vmatprep.subr.mxu0 0.0
        %2990 = vmatpush1.msra.mxu0 0.0
        %2991 = vmatprep.subr.mxu0 0.0
        %2992 = vmatpush1.msra.mxu0 0.0
        %2993 = vmatprep.subr.mxu0 0.0
        %2994 = vmatpush1.msra.mxu0 0.0
        %2995 = vmatprep.subr.mxu0 0.0
        %2996 = vmatpush1.msra.mxu0 0.0
        %2997 = vmatprep.subr.mxu0 0.0
        %2998 = vmatpush1.msra.mxu0 0.0
        %2999 = vmatprep.subr.mxu0 0.0
        %3000 = vmatpush1.msra.mxu0 0.0
        %3001 = vmatprep.subr.mxu0 0.0
        %3002 = vmatpush1.msra.mxu0 0.0
        %3003 = vmatprep.subr.mxu0 0.0
        %3004 = vmatpush1.msra.mxu0 0.0
        %3005 = vmatprep.subr.mxu0 0.0
        %3006 = vmatpush1.msra.mxu0 0.0
        %3007 = vmatprep.subr.mxu0 0.0
        %3008 = vmatpush1.msra.mxu0 0.0
        %3009 = vmatprep.subr.mxu0 0.0
        %3010 = vmatpush1.msra.mxu0 0.0
        %3011 = vmatprep.mubr.f32.mxu0 0.0
        %v3012 = vand.u32 %v2845, 4294901760
        %3013 = vmatmul.mubr.f32.gmra.mrb[0].mxu0 %v3012
        %v3014 = vpop.f32.mrb[0].mxu0
        %v3015 = vadd.f32 %v2924, %v3014
        %v3016 = vpop.f32.mrb[0].mxu0
        %3017 = vmatprep.mubr.f32.mxu0 0.0
        %v3018 = vand.u32 %v2848, 4294901760
        %3019 = vmatmul.mubr.f32.gmra.mrb[0].mxu0 %v3018
        %v3020 = vpop.f32.mrb[0].mxu0
        %v3021 = vadd.f32 %v2934, %v3020
        %v3022 = vpop.f32.mrb[0].mxu0
        %3023 = vdwg.mxu0
        %3024 = vmatprep.subr.mxu0 0.0
        %v3025 = vand.u32 %v311, 4294901760
        %v3026 = vsub.f32 %v311, %v3025
        %3027 = vmatpush1.msra.mxu0 %v3026
        %3028 = vmatprep.subr.mxu0 0.0
        %v3029 = vand.u32 %v312, 4294901760
        %v3030 = vsub.f32 %v312, %v3029
        %3031 = vmatpush1.msra.mxu0 %v3030
        %3032 = vmatprep.subr.mxu0 0.0
        %3033 = vmatpush1.msra.mxu0 0.0
        %3034 = vmatprep.subr.mxu0 0.0
        %3035 = vmatpush1.msra.mxu0 0.0
        %3036 = vmatprep.subr.mxu0 0.0
        %3037 = vmatpush1.msra.mxu0 0.0
        %3038 = vmatprep.subr.mxu0 0.0
        %3039 = vmatpush1.msra.mxu0 0.0
        %3040 = vmatprep.subr.mxu0 0.0
        %3041 = vmatpush1.msra.mxu0 0.0
        %3042 = vmatprep.subr.mxu0 0.0
        %3043 = vmatpush1.msra.mxu0 0.0
        %3044 = vmatprep.subr.mxu0 0.0
        %3045 = vmatpush1.msra.mxu0 0.0
        %3046 = vmatprep.subr.mxu0 0.0
        %3047 = vmatpush1.msra.mxu0 0.0
        %3048 = vmatprep.subr.mxu0 0.0
        %3049 = vmatpush1.msra.mxu0 0.0
        %3050 = vmatprep.subr.mxu0 0.0
        %3051 = vmatpush1.msra.mxu0 0.0
        %3052 = vmatprep.subr.mxu0 0.0
        %3053 = vmatpush1.msra.mxu0 0.0
        %3054 = vmatprep.subr.mxu0 0.0
        %3055 = vmatpush1.msra.mxu0 0.0
        %3056 = vmatprep.subr.mxu0 0.0
        %3057 = vmatpush1.msra.mxu0 0.0
        %3058 = vmatprep.subr.mxu0 0.0
        %3059 = vmatpush1.msra.mxu0 0.0
        %3060 = vmatprep.subr.mxu0 0.0
        %3061 = vmatpush1.msra.mxu0 0.0
        %3062 = vmatprep.subr.mxu0 0.0
        %3063 = vmatpush1.msra.mxu0 0.0
        %3064 = vmatprep.subr.mxu0 0.0
        %3065 = vmatpush1.msra.mxu0 0.0
        %3066 = vmatprep.subr.mxu0 0.0
        %3067 = vmatpush1.msra.mxu0 0.0
        %3068 = vmatprep.subr.mxu0 0.0
        %3069 = vmatpush1.msra.mxu0 0.0
        %3070 = vmatprep.subr.mxu0 0.0
        %3071 = vmatpush1.msra.mxu0 0.0
        %3072 = vmatprep.subr.mxu0 0.0
        %3073 = vmatpush1.msra.mxu0 0.0
        %3074 = vmatprep.subr.mxu0 0.0
        %3075 = vmatpush1.msra.mxu0 0.0
        %3076 = vmatprep.subr.mxu0 0.0
        %3077 = vmatpush1.msra.mxu0 0.0
        %3078 = vmatprep.subr.mxu0 0.0
        %3079 = vmatpush1.msra.mxu0 0.0
        %3080 = vmatprep.subr.mxu0 0.0
        %3081 = vmatpush1.msra.mxu0 0.0
        %3082 = vmatprep.subr.mxu0 0.0
        %3083 = vmatpush1.msra.mxu0 0.0
        %3084 = vmatprep.subr.mxu0 0.0
        %3085 = vmatpush1.msra.mxu0 0.0
        %3086 = vmatprep.subr.mxu0 0.0
        %3087 = vmatpush1.msra.mxu0 0.0
        %3088 = vmatprep.subr.mxu0 0.0
        %3089 = vmatpush1.msra.mxu0 0.0
        %3090 = vmatprep.subr.mxu0 0.0
        %3091 = vmatpush1.msra.mxu0 0.0
        %3092 = vmatprep.mubr.f32.mxu0 0.0
        %v3093 = vand.u32 %v2845, 4294901760
        %v3094 = vsub.f32 %v2845, %v3093
        %3095 = vmatmul.mubr.f32.gmra.mrb[0].mxu0 %v3094
        %v3096 = vpop.f32.mrb[0].mxu0
        %v3097 = vadd.f32 %v3015, %v3096
        %v3098 = vpop.f32.mrb[0].mxu0
        %3099 = vmatprep.mubr.f32.mxu0 0.0
        %v3100 = vand.u32 %v2848, 4294901760
        %v3101 = vsub.f32 %v2848, %v3100
        %3102 = vmatmul.mubr.f32.gmra.mrb[0].mxu0 %v3101
        %v3103 = vpop.f32.mrb[0].mxu0
        %v3104 = vadd.f32 %v3021, %v3103
        %v3105 = vpop.f32.mrb[0].mxu0
        %3106 = vdwg.mxu0
        %3107 = vmatprep.subr.mxu0 0.0
        %v3108 = vand.u32 %v311, 4294901760
        %3109 = vmatpush1.msra.mxu0 %v3108
        %3110 = vmatprep.subr.mxu0 0.0
        %v3111 = vand.u32 %v312, 4294901760
        %3112 = vmatpush1.msra.mxu0 %v3111
        %3113 = vmatprep.subr.mxu0 0.0
        %3114 = vmatpush1.msra.mxu0 0.0
        %3115 = vmatprep.subr.mxu0 0.0
        %3116 = vmatpush1.msra.mxu0 0.0
        %3117 = vmatprep.subr.mxu0 0.0
        %3118 = vmatpush1.msra.mxu0 0.0
        %3119 = vmatprep.subr.mxu0 0.0
        %3120 = vmatpush1.msra.mxu0 0.0
        %3121 = vmatprep.subr.mxu0 0.0
        %3122 = vmatpush1.msra.mxu0 0.0
        %3123 = vmatprep.subr.mxu0 0.0
        %3124 = vmatpush1.msra.mxu0 0.0
        %3125 = vmatprep.subr.mxu0 0.0
        %3126 = vmatpush1.msra.mxu0 0.0
        %3127 = vmatprep.subr.mxu0 0.0
        %3128 = vmatpush1.msra.mxu0 0.0
        %3129 = vmatprep.subr.mxu0 0.0
        %3130 = vmatpush1.msra.mxu0 0.0
        %3131 = vmatprep.subr.mxu0 0.0
        %3132 = vmatpush1.msra.mxu0 0.0
        %3133 = vmatprep.subr.mxu0 0.0
        %3134 = vmatpush1.msra.mxu0 0.0
        %3135 = vmatprep.subr.mxu0 0.0
        %3136 = vmatpush1.msra.mxu0 0.0
        %3137 = vmatprep.subr.mxu0 0.0
        %3138 = vmatpush1.msra.mxu0 0.0
        %3139 = vmatprep.subr.mxu0 0.0
        %3140 = vmatpush1.msra.mxu0 0.0
        %3141 = vmatprep.subr.mxu0 0.0
        %3142 = vmatpush1.msra.mxu0 0.0
        %3143 = vmatprep.subr.mxu0 0.0
        %3144 = vmatpush1.msra.mxu0 0.0
        %3145 = vmatprep.subr.mxu0 0.0
        %3146 = vmatpush1.msra.mxu0 0.0
        %3147 = vmatprep.subr.mxu0 0.0
        %3148 = vmatpush1.msra.mxu0 0.0
        %3149 = vmatprep.subr.mxu0 0.0
        %3150 = vmatpush1.msra.mxu0 0.0
        %3151 = vmatprep.subr.mxu0 0.0
        %3152 = vmatpush1.msra.mxu0 0.0
        %3153 = vmatprep.subr.mxu0 0.0
        %3154 = vmatpush1.msra.mxu0 0.0
        %3155 = vmatprep.subr.mxu0 0.0
        %3156 = vmatpush1.msra.mxu0 0.0
        %3157 = vmatprep.subr.mxu0 0.0
        %3158 = vmatpush1.msra.mxu0 0.0
        %3159 = vmatprep.subr.mxu0 0.0
        %3160 = vmatpush1.msra.mxu0 0.0
        %3161 = vmatprep.subr.mxu0 0.0
        %3162 = vmatpush1.msra.mxu0 0.0
        %3163 = vmatprep.subr.mxu0 0.0
        %3164 = vmatpush1.msra.mxu0 0.0
        %3165 = vmatprep.subr.mxu0 0.0
        %3166 = vmatpush1.msra.mxu0 0.0
        %3167 = vmatprep.subr.mxu0 0.0
        %3168 = vmatpush1.msra.mxu0 0.0
        %3169 = vmatprep.subr.mxu0 0.0
        %3170 = vmatpush1.msra.mxu0 0.0
        %3171 = vmatprep.subr.mxu0 0.0
        %3172 = vmatpush1.msra.mxu0 0.0
        %3173 = vmatprep.mubr.f32.mxu0 0.0
        %v3174 = vand.u32 %v2845, 4294901760
        %v3175 = vsub.f32 %v2845, %v3174
        %v3176 = vand.u32 %v3175, 4294901760
        %3177 = vmatmul.mubr.f32.gmra.mrb[0].mxu0 %v3176
        %v3178 = vpop.f32.mrb[0].mxu0
        %v3179 = vadd.f32 %v3097, %v3178
        %v3180 = vpop.f32.mrb[0].mxu0
        %3181 = vmatprep.mubr.f32.mxu0 0.0
        %v3182 = vand.u32 %v2848, 4294901760
        %v3183 = vsub.f32 %v2848, %v3182
        %v3184 = vand.u32 %v3183, 4294901760
        %3185 = vmatmul.mubr.f32.gmra.mrb[0].mxu0 %v3184
        %v3186 = vpop.f32.mrb[0].mxu0
        %v3187 = vadd.f32 %v3104, %v3186
        %v3188 = vpop.f32.mrb[0].mxu0
        %3189 = vdwg.mxu0
        %3190 = vmatprep.subr.mxu0 0.0
        %v3191 = vand.u32 %v311, 4294901760
        %v3192 = vsub.f32 %v311, %v3191
        %v3193 = vand.u32 %v3192, 4294901760
        %3194 = vmatpush1.msra.mxu0 %v3193
        %3195 = vmatprep.subr.mxu0 0.0
        %v3196 = vand.u32 %v312, 4294901760
        %v3197 = vsub.f32 %v312, %v3196
        %v3198 = vand.u32 %v3197, 4294901760
        %3199 = vmatpush1.msra.mxu0 %v3198
        %3200 = vmatprep.subr.mxu0 0.0
        %3201 = vmatpush1.msra.mxu0 0.0
        %3202 = vmatprep.subr.mxu0 0.0
        %3203 = vmatpush1.msra.mxu0 0.0
        %3204 = vmatprep.subr.mxu0 0.0
        %3205 = vmatpush1.msra.mxu0 0.0
        %3206 = vmatprep.subr.mxu0 0.0
        %3207 = vmatpush1.msra.mxu0 0.0
        %3208 = vmatprep.subr.mxu0 0.0
        %3209 = vmatpush1.msra.mxu0 0.0
        %3210 = vmatprep.subr.mxu0 0.0
        %3211 = vmatpush1.msra.mxu0 0.0
        %3212 = vmatprep.subr.mxu0 0.0
        %3213 = vmatpush1.msra.mxu0 0.0
        %3214 = vmatprep.subr.mxu0 0.0
        %3215 = vmatpush1.msra.mxu0 0.0
        %3216 = vmatprep.subr.mxu0 0.0
        %3217 = vmatpush1.msra.mxu0 0.0
        %3218 = vmatprep.subr.mxu0 0.0
        %3219 = vmatpush1.msra.mxu0 0.0
        %3220 = vmatprep.subr.mxu0 0.0
        %3221 = vmatpush1.msra.mxu0 0.0
        %3222 = vmatprep.subr.mxu0 0.0
        %3223 = vmatpush1.msra.mxu0 0.0
        %3224 = vmatprep.subr.mxu0 0.0
        %3225 = vmatpush1.msra.mxu0 0.0
        %3226 = vmatprep.subr.mxu0 0.0
        %3227 = vmatpush1.msra.mxu0 0.0
        %3228 = vmatprep.subr.mxu0 0.0
        %3229 = vmatpush1.msra.mxu0 0.0
        %3230 = vmatprep.subr.mxu0 0.0
        %3231 = vmatpush1.msra.mxu0 0.0
        %3232 = vmatprep.subr.mxu0 0.0
        %3233 = vmatpush1.msra.mxu0 0.0
        %3234 = vmatprep.subr.mxu0 0.0
        %3235 = vmatpush1.msra.mxu0 0.0
        %3236 = vmatprep.subr.mxu0 0.0
        %3237 = vmatpush1.msra.mxu0 0.0
        %3238 = vmatprep.subr.mxu0 0.0
        %3239 = vmatpush1.msra.mxu0 0.0
        %3240 = vmatprep.subr.mxu0 0.0
        %3241 = vmatpush1.msra.mxu0 0.0
        %3242 = vmatprep.subr.mxu0 0.0
        %3243 = vmatpush1.msra.mxu0 0.0
        %3244 = vmatprep.subr.mxu0 0.0
        %3245 = vmatpush1.msra.mxu0 0.0
        %3246 = vmatprep.subr.mxu0 0.0
        %3247 = vmatpush1.msra.mxu0 0.0
        %3248 = vmatprep.subr.mxu0 0.0
        %3249 = vmatpush1.msra.mxu0 0.0
        %3250 = vmatprep.subr.mxu0 0.0
        %3251 = vmatpush1.msra.mxu0 0.0
        %3252 = vmatprep.subr.mxu0 0.0
        %3253 = vmatpush1.msra.mxu0 0.0
        %3254 = vmatprep.subr.mxu0 0.0
        %3255 = vmatpush1.msra.mxu0 0.0
        %3256 = vmatprep.subr.mxu0 0.0
        %3257 = vmatpush1.msra.mxu0 0.0
        %3258 = vmatprep.subr.mxu0 0.0
        %3259 = vmatpush1.msra.mxu0 0.0
        %3260 = vmatprep.mubr.f32.mxu0 0.0
        %v3261 = vand.u32 %v2845, 4294901760
        %3262 = vmatmul.mubr.f32.gmra.mrb[0].mxu0 %v3261
        %v3263 = vpop.f32.mrb[0].mxu0
        %v3264 = vadd.f32 %v3179, %v3263
        %v3265 = vpop.f32.mrb[0].mxu0
        %3266 = vmatprep.mubr.f32.mxu0 0.0
        %v3267 = vand.u32 %v2848, 4294901760
        %3268 = vmatmul.mubr.f32.gmra.mrb[0].mxu0 %v3267
        %v3269 = vpop.f32.mrb[0].mxu0
        %v3270 = vadd.f32 %v3187, %v3269
        %v3271 = vpop.f32.mrb[0].mxu0
        %3272 = vdwg.mxu0
        %3273 = vmatprep.subr.mxu0 0.0
        %v3274 = vand.u32 %v311, 4294901760
        %3275 = vmatpush1.msra.mxu0 %v3274
        %3276 = vmatprep.subr.mxu0 0.0
        %v3277 = vand.u32 %v312, 4294901760
        %3278 = vmatpush1.msra.mxu0 %v3277
        %3279 = vmatprep.subr.mxu0 0.0
        %3280 = vmatpush1.msra.mxu0 0.0
        %3281 = vmatprep.subr.mxu0 0.0
        %3282 = vmatpush1.msra.mxu0 0.0
        %3283 = vmatprep.subr.mxu0 0.0
        %3284 = vmatpush1.msra.mxu0 0.0
        %3285 = vmatprep.subr.mxu0 0.0
        %3286 = vmatpush1.msra.mxu0 0.0
        %3287 = vmatprep.subr.mxu0 0.0
        %3288 = vmatpush1.msra.mxu0 0.0
        %3289 = vmatprep.subr.mxu0 0.0
        %3290 = vmatpush1.msra.mxu0 0.0
        %3291 = vmatprep.subr.mxu0 0.0
        %3292 = vmatpush1.msra.mxu0 0.0
        %3293 = vmatprep.subr.mxu0 0.0
        %3294 = vmatpush1.msra.mxu0 0.0
        %3295 = vmatprep.subr.mxu0 0.0
        %3296 = vmatpush1.msra.mxu0 0.0
        %3297 = vmatprep.subr.mxu0 0.0
        %3298 = vmatpush1.msra.mxu0 0.0
        %3299 = vmatprep.subr.mxu0 0.0
        %3300 = vmatpush1.msra.mxu0 0.0
        %3301 = vmatprep.subr.mxu0 0.0
        %3302 = vmatpush1.msra.mxu0 0.0
        %3303 = vmatprep.subr.mxu0 0.0
        %3304 = vmatpush1.msra.mxu0 0.0
        %3305 = vmatprep.subr.mxu0 0.0
        %3306 = vmatpush1.msra.mxu0 0.0
        %3307 = vmatprep.subr.mxu0 0.0
        %3308 = vmatpush1.msra.mxu0 0.0
        %3309 = vmatprep.subr.mxu0 0.0
        %3310 = vmatpush1.msra.mxu0 0.0
        %3311 = vmatprep.subr.mxu0 0.0
        %3312 = vmatpush1.msra.mxu0 0.0
        %3313 = vmatprep.subr.mxu0 0.0
        %3314 = vmatpush1.msra.mxu0 0.0
        %3315 = vmatprep.subr.mxu0 0.0
        %3316 = vmatpush1.msra.mxu0 0.0
        %3317 = vmatprep.subr.mxu0 0.0
        %3318 = vmatpush1.msra.mxu0 0.0
        %3319 = vmatprep.subr.mxu0 0.0
        %3320 = vmatpush1.msra.mxu0 0.0
        %3321 = vmatprep.subr.mxu0 0.0
        %3322 = vmatpush1.msra.mxu0 0.0
        %3323 = vmatprep.subr.mxu0 0.0
        %3324 = vmatpush1.msra.mxu0 0.0
        %3325 = vmatprep.subr.mxu0 0.0
        %3326 = vmatpush1.msra.mxu0 0.0
        %3327 = vmatprep.subr.mxu0 0.0
        %3328 = vmatpush1.msra.mxu0 0.0
        %3329 = vmatprep.subr.mxu0 0.0
        %3330 = vmatpush1.msra.mxu0 0.0
        %3331 = vmatprep.subr.mxu0 0.0
        %3332 = vmatpush1.msra.mxu0 0.0
        %3333 = vmatprep.subr.mxu0 0.0
        %3334 = vmatpush1.msra.mxu0 0.0
        %3335 = vmatprep.subr.mxu0 0.0
        %3336 = vmatpush1.msra.mxu0 0.0
        %3337 = vmatprep.subr.mxu0 0.0
        %3338 = vmatpush1.msra.mxu0 0.0
        %3339 = vmatprep.mubr.f32.mxu0 0.0
        %v3340 = vand.u32 %v2845, 4294901760
        %3341 = vmatmul.mubr.f32.gmra.mrb[0].mxu0 %v3340
        %v3342 = vpop.f32.mrb[0].mxu0
        %v3343 = vadd.f32 %v3264, %v3342
        %v3344 = vpop.f32.mrb[0].mxu0
        %3345 = vmatprep.mubr.f32.mxu0 0.0
        %v3346 = vand.u32 %v2848, 4294901760
        %3347 = vmatmul.mubr.f32.gmra.mrb[0].mxu0 %v3346
        %v3348 = vpop.f32.mrb[0].mxu0
        %v3349 = vadd.f32 %v3270, %v3348
        %v3350 = vpop.f32.mrb[0].mxu0
        %3351 = vdwg.mxu0
        %v3352 = vmul.f32 %v307, %v307
        %v3353 = vmul.f32 %v308, %v308
        %3354 = vmatprep.subr.mxu0 0.0
        %v3355 = vand.u32 %v3352, 4294901760
        %3356 = vmatpush1.msra.mxu0 %v3355
        %3357 = vmatprep.subr.mxu0 0.0
        %v3358 = vand.u32 %v3353, 4294901760
        %3359 = vmatpush1.msra.mxu0 %v3358
        %3360 = vmatprep.subr.mxu0 0.0
        %3361 = vmatpush1.msra.mxu0 0.0
        %3362 = vmatprep.subr.mxu0 0.0
        %3363 = vmatpush1.msra.mxu0 0.0
        %3364 = vmatprep.subr.mxu0 0.0
        %3365 = vmatpush1.msra.mxu0 0.0
        %3366 = vmatprep.subr.mxu0 0.0
        %3367 = vmatpush1.msra.mxu0 0.0
        %3368 = vmatprep.subr.mxu0 0.0
        %3369 = vmatpush1.msra.mxu0 0.0
        %3370 = vmatprep.subr.mxu0 0.0
        %3371 = vmatpush1.msra.mxu0 0.0
        %3372 = vmatprep.subr.mxu0 0.0
        %3373 = vmatpush1.msra.mxu0 0.0
        %3374 = vmatprep.subr.mxu0 0.0
        %3375 = vmatpush1.msra.mxu0 0.0
        %3376 = vmatprep.subr.mxu0 0.0
        %3377 = vmatpush1.msra.mxu0 0.0
        %3378 = vmatprep.subr.mxu0 0.0
        %3379 = vmatpush1.msra.mxu0 0.0
        %3380 = vmatprep.subr.mxu0 0.0
        %3381 = vmatpush1.msra.mxu0 0.0
        %3382 = vmatprep.subr.mxu0 0.0
        %3383 = vmatpush1.msra.mxu0 0.0
        %3384 = vmatprep.subr.mxu0 0.0
        %3385 = vmatpush1.msra.mxu0 0.0
        %3386 = vmatprep.subr.mxu0 0.0
        %3387 = vmatpush1.msra.mxu0 0.0
        %3388 = vmatprep.subr.mxu0 0.0
        %3389 = vmatpush1.msra.mxu0 0.0
        %3390 = vmatprep.subr.mxu0 0.0
        %3391 = vmatpush1.msra.mxu0 0.0
        %3392 = vmatprep.subr.mxu0 0.0
        %3393 = vmatpush1.msra.mxu0 0.0
        %3394 = vmatprep.subr.mxu0 0.0
        %3395 = vmatpush1.msra.mxu0 0.0
        %3396 = vmatprep.subr.mxu0 0.0
        %3397 = vmatpush1.msra.mxu0 0.0
        %3398 = vmatprep.subr.mxu0 0.0
        %3399 = vmatpush1.msra.mxu0 0.0
        %3400 = vmatprep.subr.mxu0 0.0
        %3401 = vmatpush1.msra.mxu0 0.0
        %3402 = vmatprep.subr.mxu0 0.0
        %3403 = vmatpush1.msra.mxu0 0.0
        %3404 = vmatprep.subr.mxu0 0.0
        %3405 = vmatpush1.msra.mxu0 0.0
        %3406 = vmatprep.subr.mxu0 0.0
        %3407 = vmatpush1.msra.mxu0 0.0
        %3408 = vmatprep.subr.mxu0 0.0
        %3409 = vmatpush1.msra.mxu0 0.0
        %3410 = vmatprep.subr.mxu0 0.0
        %3411 = vmatpush1.msra.mxu0 0.0
        %3412 = vmatprep.subr.mxu0 0.0
        %3413 = vmatpush1.msra.mxu0 0.0
        %3414 = vmatprep.subr.mxu0 0.0
        %3415 = vmatpush1.msra.mxu0 0.0
        %3416 = vmatprep.subr.mxu0 0.0
        %3417 = vmatpush1.msra.mxu0 0.0
        %3418 = vmatprep.subr.mxu0 0.0
        %3419 = vmatpush1.msra.mxu0 0.0
        %3420 = vmatprep.mubr.f32.mxu0 0.0
        %v3421 = vand.u32 %v315, 4294901760
        %v3422 = vsub.f32 %v315, %v3421
        %v3423 = vand.u32 %v3422, 4294901760
        %v3424 = vsub.f32 %v3422, %v3423
        %v3425 = vand.u32 %v3424, 4294901760
        %3426 = vmatmul.mubr.f32.gmra.mrb[0].mxu0 %v3425
        %v3427 = vpop.f32.mrb[0].mxu0
        %v3428 = vadd.f32 0.0, %v3427
        %v3429 = vpop.f32.mrb[0].mxu0
        %3430 = vmatprep.mubr.f32.mxu0 0.0
        %v3431 = vand.u32 %v318, 4294901760
        %v3432 = vsub.f32 %v318, %v3431
        %v3433 = vand.u32 %v3432, 4294901760
        %v3434 = vsub.f32 %v3432, %v3433
        %v3435 = vand.u32 %v3434, 4294901760
        %3436 = vmatmul.mubr.f32.gmra.mrb[0].mxu0 %v3435
        %v3437 = vpop.f32.mrb[0].mxu0
        %v3438 = vadd.f32 0.0, %v3437
        %v3439 = vpop.f32.mrb[0].mxu0
        %3440 = vdwg.mxu0
        %3441 = vmatprep.subr.mxu0 0.0
        %v3442 = vand.u32 %v3352, 4294901760
        %v3443 = vsub.f32 %v3352, %v3442
        %v3444 = vand.u32 %v3443, 4294901760
        %v3445 = vsub.f32 %v3443, %v3444
        %v3446 = vand.u32 %v3445, 4294901760
        %3447 = vmatpush1.msra.mxu0 %v3446
        %3448 = vmatprep.subr.mxu0 0.0
        %v3449 = vand.u32 %v3353, 4294901760
        %v3450 = vsub.f32 %v3353, %v3449
        %v3451 = vand.u32 %v3450, 4294901760
        %v3452 = vsub.f32 %v3450, %v3451
        %v3453 = vand.u32 %v3452, 4294901760
        %3454 = vmatpush1.msra.mxu0 %v3453
        %3455 = vmatprep.subr.mxu0 0.0
        %3456 = vmatpush1.msra.mxu0 0.0
        %3457 = vmatprep.subr.mxu0 0.0
        %3458 = vmatpush1.msra.mxu0 0.0
        %3459 = vmatprep.subr.mxu0 0.0
        %3460 = vmatpush1.msra.mxu0 0.0
        %3461 = vmatprep.subr.mxu0 0.0
        %3462 = vmatpush1.msra.mxu0 0.0
        %3463 = vmatprep.subr.mxu0 0.0
        %3464 = vmatpush1.msra.mxu0 0.0
        %3465 = vmatprep.subr.mxu0 0.0
        %3466 = vmatpush1.msra.mxu0 0.0
        %3467 = vmatprep.subr.mxu0 0.0
        %3468 = vmatpush1.msra.mxu0 0.0
        %3469 = vmatprep.subr.mxu0 0.0
        %3470 = vmatpush1.msra.mxu0 0.0
        %3471 = vmatprep.subr.mxu0 0.0
        %3472 = vmatpush1.msra.mxu0 0.0
        %3473 = vmatprep.subr.mxu0 0.0
        %3474 = vmatpush1.msra.mxu0 0.0
        %3475 = vmatprep.subr.mxu0 0.0
        %3476 = vmatpush1.msra.mxu0 0.0
        %3477 = vmatprep.subr.mxu0 0.0
        %3478 = vmatpush1.msra.mxu0 0.0
        %3479 = vmatprep.subr.mxu0 0.0
        %3480 = vmatpush1.msra.mxu0 0.0
        %3481 = vmatprep.subr.mxu0 0.0
        %3482 = vmatpush1.msra.mxu0 0.0
        %3483 = vmatprep.subr.mxu0 0.0
        %3484 = vmatpush1.msra.mxu0 0.0
        %3485 = vmatprep.subr.mxu0 0.0
        %3486 = vmatpush1.msra.mxu0 0.0
        %3487 = vmatprep.subr.mxu0 0.0
        %3488 = vmatpush1.msra.mxu0 0.0
        %3489 = vmatprep.subr.mxu0 0.0
        %3490 = vmatpush1.msra.mxu0 0.0
        %3491 = vmatprep.subr.mxu0 0.0
        %3492 = vmatpush1.msra.mxu0 0.0
        %3493 = vmatprep.subr.mxu0 0.0
        %3494 = vmatpush1.msra.mxu0 0.0
        %3495 = vmatprep.subr.mxu0 0.0
        %3496 = vmatpush1.msra.mxu0 0.0
        %3497 = vmatprep.subr.mxu0 0.0
        %3498 = vmatpush1.msra.mxu0 0.0
        %3499 = vmatprep.subr.mxu0 0.0
        %3500 = vmatpush1.msra.mxu0 0.0
        %3501 = vmatprep.subr.mxu0 0.0
        %3502 = vmatpush1.msra.mxu0 0.0
        %3503 = vmatprep.subr.mxu0 0.0
        %3504 = vmatpush1.msra.mxu0 0.0
        %3505 = vmatprep.subr.mxu0 0.0
        %3506 = vmatpush1.msra.mxu0 0.0
        %3507 = vmatprep.subr.mxu0 0.0
        %3508 = vmatpush1.msra.mxu0 0.0
        %3509 = vmatprep.subr.mxu0 0.0
        %3510 = vmatpush1.msra.mxu0 0.0
        %3511 = vmatprep.subr.mxu0 0.0
        %3512 = vmatpush1.msra.mxu0 0.0
        %3513 = vmatprep.subr.mxu0 0.0
        %3514 = vmatpush1.msra.mxu0 0.0
        %3515 = vmatprep.mubr.f32.mxu0 0.0
        %v3516 = vand.u32 %v315, 4294901760
        %3517 = vmatmul.mubr.f32.gmra.mrb[0].mxu0 %v3516
        %v3518 = vpop.f32.mrb[0].mxu0
        %v3519 = vadd.f32 %v3428, %v3518
        %v3520 = vpop.f32.mrb[0].mxu0
        %3521 = vmatprep.mubr.f32.mxu0 0.0
        %v3522 = vand.u32 %v318, 4294901760
        %3523 = vmatmul.mubr.f32.gmra.mrb[0].mxu0 %v3522
        %v3524 = vpop.f32.mrb[0].mxu0
        %v3525 = vadd.f32 %v3438, %v3524
        %v3526 = vpop.f32.mrb[0].mxu0
        %3527 = vdwg.mxu0
        %3528 = vmatprep.subr.mxu0 0.0
        %v3529 = vand.u32 %v3352, 4294901760
        %v3530 = vsub.f32 %v3352, %v3529
        %3531 = vmatpush1.msra.mxu0 %v3530
        %3532 = vmatprep.subr.mxu0 0.0
        %v3533 = vand.u32 %v3353, 4294901760
        %v3534 = vsub.f32 %v3353, %v3533
        %3535 = vmatpush1.msra.mxu0 %v3534
        %3536 = vmatprep.subr.mxu0 0.0
        %3537 = vmatpush1.msra.mxu0 0.0
        %3538 = vmatprep.subr.mxu0 0.0
        %3539 = vmatpush1.msra.mxu0 0.0
        %3540 = vmatprep.subr.mxu0 0.0
        %3541 = vmatpush1.msra.mxu0 0.0
        %3542 = vmatprep.subr.mxu0 0.0
        %3543 = vmatpush1.msra.mxu0 0.0
        %3544 = vmatprep.subr.mxu0 0.0
        %3545 = vmatpush1.msra.mxu0 0.0
        %3546 = vmatprep.subr.mxu0 0.0
        %3547 = vmatpush1.msra.mxu0 0.0
        %3548 = vmatprep.subr.mxu0 0.0
        %3549 = vmatpush1.msra.mxu0 0.0
        %3550 = vmatprep.subr.mxu0 0.0
        %3551 = vmatpush1.msra.mxu0 0.0
        %3552 = vmatprep.subr.mxu0 0.0
        %3553 = vmatpush1.msra.mxu0 0.0
        %3554 = vmatprep.subr.mxu0 0.0
        %3555 = vmatpush1.msra.mxu0 0.0
        %3556 = vmatprep.subr.mxu0 0.0
        %3557 = vmatpush1.msra.mxu0 0.0
        %3558 = vmatprep.subr.mxu0 0.0
        %3559 = vmatpush1.msra.mxu0 0.0
        %3560 = vmatprep.subr.mxu0 0.0
        %3561 = vmatpush1.msra.mxu0 0.0
        %3562 = vmatprep.subr.mxu0 0.0
        %3563 = vmatpush1.msra.mxu0 0.0
        %3564 = vmatprep.subr.mxu0 0.0
        %3565 = vmatpush1.msra.mxu0 0.0
        %3566 = vmatprep.subr.mxu0 0.0
        %3567 = vmatpush1.msra.mxu0 0.0
        %3568 = vmatprep.subr.mxu0 0.0
        %3569 = vmatpush1.msra.mxu0 0.0
        %3570 = vmatprep.subr.mxu0 0.0
        %3571 = vmatpush1.msra.mxu0 0.0
        %3572 = vmatprep.subr.mxu0 0.0
        %3573 = vmatpush1.msra.mxu0 0.0
        %3574 = vmatprep.subr.mxu0 0.0
        %3575 = vmatpush1.msra.mxu0 0.0
        %3576 = vmatprep.subr.mxu0 0.0
        %3577 = vmatpush1.msra.mxu0 0.0
        %3578 = vmatprep.subr.mxu0 0.0
        %3579 = vmatpush1.msra.mxu0 0.0
        %3580 = vmatprep.subr.mxu0 0.0
        %3581 = vmatpush1.msra.mxu0 0.0
        %3582 = vmatprep.subr.mxu0 0.0
        %3583 = vmatpush1.msra.mxu0 0.0
        %3584 = vmatprep.subr.mxu0 0.0
        %3585 = vmatpush1.msra.mxu0 0.0
        %3586 = vmatprep.subr.mxu0 0.0
        %3587 = vmatpush1.msra.mxu0 0.0
        %3588 = vmatprep.subr.mxu0 0.0
        %3589 = vmatpush1.msra.mxu0 0.0
        %3590 = vmatprep.subr.mxu0 0.0
        %3591 = vmatpush1.msra.mxu0 0.0
        %3592 = vmatprep.subr.mxu0 0.0
        %3593 = vmatpush1.msra.mxu0 0.0
        %3594 = vmatprep.subr.mxu0 0.0
        %3595 = vmatpush1.msra.mxu0 0.0
        %3596 = vmatprep.mubr.f32.mxu0 0.0
        %v3597 = vand.u32 %v315, 4294901760
        %v3598 = vsub.f32 %v315, %v3597
        %3599 = vmatmul.mubr.f32.gmra.mrb[0].mxu0 %v3598
        %v3600 = vpop.f32.mrb[0].mxu0
        %v3601 = vadd.f32 %v3519, %v3600
        %v3602 = vpop.f32.mrb[0].mxu0
        %3603 = vmatprep.mubr.f32.mxu0 0.0
        %v3604 = vand.u32 %v318, 4294901760
        %v3605 = vsub.f32 %v318, %v3604
        %3606 = vmatmul.mubr.f32.gmra.mrb[0].mxu0 %v3605
        %v3607 = vpop.f32.mrb[0].mxu0
        %v3608 = vadd.f32 %v3525, %v3607
        %v3609 = vpop.f32.mrb[0].mxu0
        %3610 = vdwg.mxu0
        %3611 = vmatprep.subr.mxu0 0.0
        %v3612 = vand.u32 %v3352, 4294901760
        %3613 = vmatpush1.msra.mxu0 %v3612
        %3614 = vmatprep.subr.mxu0 0.0
        %v3615 = vand.u32 %v3353, 4294901760
        %3616 = vmatpush1.msra.mxu0 %v3615
        %3617 = vmatprep.subr.mxu0 0.0
        %3618 = vmatpush1.msra.mxu0 0.0
        %3619 = vmatprep.subr.mxu0 0.0
        %3620 = vmatpush1.msra.mxu0 0.0
        %3621 = vmatprep.subr.mxu0 0.0
        %3622 = vmatpush1.msra.mxu0 0.0
        %3623 = vmatprep.subr.mxu0 0.0
        %3624 = vmatpush1.msra.mxu0 0.0
        %3625 = vmatprep.subr.mxu0 0.0
        %3626 = vmatpush1.msra.mxu0 0.0
        %3627 = vmatprep.subr.mxu0 0.0
        %3628 = vmatpush1.msra.mxu0 0.0
        %3629 = vmatprep.subr.mxu0 0.0
        %3630 = vmatpush1.msra.mxu0 0.0
        %3631 = vmatprep.subr.mxu0 0.0
        %3632 = vmatpush1.msra.mxu0 0.0
        %3633 = vmatprep.subr.mxu0 0.0
        %3634 = vmatpush1.msra.mxu0 0.0
        %3635 = vmatprep.subr.mxu0 0.0
        %3636 = vmatpush1.msra.mxu0 0.0
        %3637 = vmatprep.subr.mxu0 0.0
        %3638 = vmatpush1.msra.mxu0 0.0
        %3639 = vmatprep.subr.mxu0 0.0
        %3640 = vmatpush1.msra.mxu0 0.0
        %3641 = vmatprep.subr.mxu0 0.0
        %3642 = vmatpush1.msra.mxu0 0.0
        %3643 = vmatprep.subr.mxu0 0.0
        %3644 = vmatpush1.msra.mxu0 0.0
        %3645 = vmatprep.subr.mxu0 0.0
        %3646 = vmatpush1.msra.mxu0 0.0
        %3647 = vmatprep.subr.mxu0 0.0
        %3648 = vmatpush1.msra.mxu0 0.0
        %3649 = vmatprep.subr.mxu0 0.0
        %3650 = vmatpush1.msra.mxu0 0.0
        %3651 = vmatprep.subr.mxu0 0.0
        %3652 = vmatpush1.msra.mxu0 0.0
        %3653 = vmatprep.subr.mxu0 0.0
        %3654 = vmatpush1.msra.mxu0 0.0
        %3655 = vmatprep.subr.mxu0 0.0
        %3656 = vmatpush1.msra.mxu0 0.0
        %3657 = vmatprep.subr.mxu0 0.0
        %3658 = vmatpush1.msra.mxu0 0.0
        %3659 = vmatprep.subr.mxu0 0.0
        %3660 = vmatpush1.msra.mxu0 0.0
        %3661 = vmatprep.subr.mxu0 0.0
        %3662 = vmatpush1.msra.mxu0 0.0
        %3663 = vmatprep.subr.mxu0 0.0
        %3664 = vmatpush1.msra.mxu0 0.0
        %3665 = vmatprep.subr.mxu0 0.0
        %3666 = vmatpush1.msra.mxu0 0.0
        %3667 = vmatprep.subr.mxu0 0.0
        %3668 = vmatpush1.msra.mxu0 0.0
        %3669 = vmatprep.subr.mxu0 0.0
        %3670 = vmatpush1.msra.mxu0 0.0
        %3671 = vmatprep.subr.mxu0 0.0
        %3672 = vmatpush1.msra.mxu0 0.0
        %3673 = vmatprep.subr.mxu0 0.0
        %3674 = vmatpush1.msra.mxu0 0.0
        %3675 = vmatprep.subr.mxu0 0.0
        %3676 = vmatpush1.msra.mxu0 0.0
        %3677 = vmatprep.mubr.f32.mxu0 0.0
        %v3678 = vand.u32 %v315, 4294901760
        %v3679 = vsub.f32 %v315, %v3678
        %v3680 = vand.u32 %v3679, 4294901760
        %3681 = vmatmul.mubr.f32.gmra.mrb[0].mxu0 %v3680
        %v3682 = vpop.f32.mrb[0].mxu0
        %v3683 = vadd.f32 %v3601, %v3682
        %v3684 = vpop.f32.mrb[0].mxu0
        %3685 = vmatprep.mubr.f32.mxu0 0.0
        %v3686 = vand.u32 %v318, 4294901760
        %v3687 = vsub.f32 %v318, %v3686
        %v3688 = vand.u32 %v3687, 4294901760
        %3689 = vmatmul.mubr.f32.gmra.mrb[0].mxu0 %v3688
        %v3690 = vpop.f32.mrb[0].mxu0
        %v3691 = vadd.f32 %v3608, %v3690
        %v3692 = vpop.f32.mrb[0].mxu0
        %3693 = vdwg.mxu0
        %3694 = vmatprep.subr.mxu0 0.0
        %v3695 = vand.u32 %v3352, 4294901760
        %v3696 = vsub.f32 %v3352, %v3695
        %v3697 = vand.u32 %v3696, 4294901760
        %3698 = vmatpush1.msra.mxu0 %v3697
        %3699 = vmatprep.subr.mxu0 0.0
        %v3700 = vand.u32 %v3353, 4294901760
        %v3701 = vsub.f32 %v3353, %v3700
        %v3702 = vand.u32 %v3701, 4294901760
        %3703 = vmatpush1.msra.mxu0 %v3702
        %3704 = vmatprep.subr.mxu0 0.0
        %3705 = vmatpush1.msra.mxu0 0.0
        %3706 = vmatprep.subr.mxu0 0.0
        %3707 = vmatpush1.msra.mxu0 0.0
        %3708 = vmatprep.subr.mxu0 0.0
        %3709 = vmatpush1.msra.mxu0 0.0
        %3710 = vmatprep.subr.mxu0 0.0
        %3711 = vmatpush1.msra.mxu0 0.0
        %3712 = vmatprep.subr.mxu0 0.0
        %3713 = vmatpush1.msra.mxu0 0.0
        %3714 = vmatprep.subr.mxu0 0.0
        %3715 = vmatpush1.msra.mxu0 0.0
        %3716 = vmatprep.subr.mxu0 0.0
        %3717 = vmatpush1.msra.mxu0 0.0
        %3718 = vmatprep.subr.mxu0 0.0
        %3719 = vmatpush1.msra.mxu0 0.0
        %3720 = vmatprep.subr.mxu0 0.0
        %3721 = vmatpush1.msra.mxu0 0.0
        %3722 = vmatprep.subr.mxu0 0.0
        %3723 = vmatpush1.msra.mxu0 0.0
        %3724 = vmatprep.subr.mxu0 0.0
        %3725 = vmatpush1.msra.mxu0 0.0
        %3726 = vmatprep.subr.mxu0 0.0
        %3727 = vmatpush1.msra.mxu0 0.0
        %3728 = vmatprep.subr.mxu0 0.0
        %3729 = vmatpush1.msra.mxu0 0.0
        %3730 = vmatprep.subr.mxu0 0.0
        %3731 = vmatpush1.msra.mxu0 0.0
        %3732 = vmatprep.subr.mxu0 0.0
        %3733 = vmatpush1.msra.mxu0 0.0
        %3734 = vmatprep.subr.mxu0 0.0
        %3735 = vmatpush1.msra.mxu0 0.0
        %3736 = vmatprep.subr.mxu0 0.0
        %3737 = vmatpush1.msra.mxu0 0.0
        %3738 = vmatprep.subr.mxu0 0.0
        %3739 = vmatpush1.msra.mxu0 0.0
        %3740 = vmatprep.subr.mxu0 0.0
        %3741 = vmatpush1.msra.mxu0 0.0
        %3742 = vmatprep.subr.mxu0 0.0
        %3743 = vmatpush1.msra.mxu0 0.0
        %3744 = vmatprep.subr.mxu0 0.0
        %3745 = vmatpush1.msra.mxu0 0.0
        %3746 = vmatprep.subr.mxu0 0.0
        %3747 = vmatpush1.msra.mxu0 0.0
        %3748 = vmatprep.subr.mxu0 0.0
        %3749 = vmatpush1.msra.mxu0 0.0
        %3750 = vmatprep.subr.mxu0 0.0
        %3751 = vmatpush1.msra.mxu0 0.0
        %3752 = vmatprep.subr.mxu0 0.0
        %3753 = vmatpush1.msra.mxu0 0.0
        %3754 = vmatprep.subr.mxu0 0.0
        %3755 = vmatpush1.msra.mxu0 0.0
        %3756 = vmatprep.subr.mxu0 0.0
        %3757 = vmatpush1.msra.mxu0 0.0
        %3758 = vmatprep.subr.mxu0 0.0
        %3759 = vmatpush1.msra.mxu0 0.0
        %3760 = vmatprep.subr.mxu0 0.0
        %3761 = vmatpush1.msra.mxu0 0.0
        %3762 = vmatprep.subr.mxu0 0.0
        %3763 = vmatpush1.msra.mxu0 0.0
        %3764 = vmatprep.mubr.f32.mxu0 0.0
        %v3765 = vand.u32 %v315, 4294901760
        %3766 = vmatmul.mubr.f32.gmra.mrb[0].mxu0 %v3765
        %v3767 = vpop.f32.mrb[0].mxu0
        %v3768 = vadd.f32 %v3683, %v3767
        %v3769 = vpop.f32.mrb[0].mxu0
        %3770 = vmatprep.mubr.f32.mxu0 0.0
        %v3771 = vand.u32 %v318, 4294901760
        %3772 = vmatmul.mubr.f32.gmra.mrb[0].mxu0 %v3771
        %v3773 = vpop.f32.mrb[0].mxu0
        %v3774 = vadd.f32 %v3691, %v3773
        %v3775 = vpop.f32.mrb[0].mxu0
        %3776 = vdwg.mxu0
        %3777 = vmatprep.subr.mxu0 0.0
        %v3778 = vand.u32 %v3352, 4294901760
        %3779 = vmatpush1.msra.mxu0 %v3778
        %3780 = vmatprep.subr.mxu0 0.0
        %v3781 = vand.u32 %v3353, 4294901760
        %3782 = vmatpush1.msra.mxu0 %v3781
        %3783 = vmatprep.subr.mxu0 0.0
        %3784 = vmatpush1.msra.mxu0 0.0
        %3785 = vmatprep.subr.mxu0 0.0
        %3786 = vmatpush1.msra.mxu0 0.0
        %3787 = vmatprep.subr.mxu0 0.0
        %3788 = vmatpush1.msra.mxu0 0.0
        %3789 = vmatprep.subr.mxu0 0.0
        %3790 = vmatpush1.msra.mxu0 0.0
        %3791 = vmatprep.subr.mxu0 0.0
        %3792 = vmatpush1.msra.mxu0 0.0
        %3793 = vmatprep.subr.mxu0 0.0
        %3794 = vmatpush1.msra.mxu0 0.0
        %3795 = vmatprep.subr.mxu0 0.0
        %3796 = vmatpush1.msra.mxu0 0.0
        %3797 = vmatprep.subr.mxu0 0.0
        %3798 = vmatpush1.msra.mxu0 0.0
        %3799 = vmatprep.subr.mxu0 0.0
        %3800 = vmatpush1.msra.mxu0 0.0
        %3801 = vmatprep.subr.mxu0 0.0
        %3802 = vmatpush1.msra.mxu0 0.0
        %3803 = vmatprep.subr.mxu0 0.0
        %3804 = vmatpush1.msra.mxu0 0.0
        %3805 = vmatprep.subr.mxu0 0.0
        %3806 = vmatpush1.msra.mxu0 0.0
        %3807 = vmatprep.subr.mxu0 0.0
        %3808 = vmatpush1.msra.mxu0 0.0
        %3809 = vmatprep.subr.mxu0 0.0
        %3810 = vmatpush1.msra.mxu0 0.0
        %3811 = vmatprep.subr.mxu0 0.0
        %3812 = vmatpush1.msra.mxu0 0.0
        %3813 = vmatprep.subr.mxu0 0.0
        %3814 = vmatpush1.msra.mxu0 0.0
        %3815 = vmatprep.subr.mxu0 0.0
        %3816 = vmatpush1.msra.mxu0 0.0
        %3817 = vmatprep.subr.mxu0 0.0
        %3818 = vmatpush1.msra.mxu0 0.0
        %3819 = vmatprep.subr.mxu0 0.0
        %3820 = vmatpush1.msra.mxu0 0.0
        %3821 = vmatprep.subr.mxu0 0.0
        %3822 = vmatpush1.msra.mxu0 0.0
        %3823 = vmatprep.subr.mxu0 0.0
        %3824 = vmatpush1.msra.mxu0 0.0
        %3825 = vmatprep.subr.mxu0 0.0
        %3826 = vmatpush1.msra.mxu0 0.0
        %3827 = vmatprep.subr.mxu0 0.0
        %3828 = vmatpush1.msra.mxu0 0.0
        %3829 = vmatprep.subr.mxu0 0.0
        %3830 = vmatpush1.msra.mxu0 0.0
        %3831 = vmatprep.subr.mxu0 0.0
        %3832 = vmatpush1.msra.mxu0 0.0
        %3833 = vmatprep.subr.mxu0 0.0
        %3834 = vmatpush1.msra.mxu0 0.0
        %3835 = vmatprep.subr.mxu0 0.0
        %3836 = vmatpush1.msra.mxu0 0.0
        %3837 = vmatprep.subr.mxu0 0.0
        %3838 = vmatpush1.msra.mxu0 0.0
        %3839 = vmatprep.subr.mxu0 0.0
        %3840 = vmatpush1.msra.mxu0 0.0
        %3841 = vmatprep.subr.mxu0 0.0
        %3842 = vmatpush1.msra.mxu0 0.0
        %3843 = vmatprep.mubr.f32.mxu0 0.0
        %v3844 = vand.u32 %v315, 4294901760
        %3845 = vmatmul.mubr.f32.gmra.mrb[0].mxu0 %v3844
        %v3846 = vpop.f32.mrb[0].mxu0
        %v3847 = vadd.f32 %v3768, %v3846
        %v3848 = vpop.f32.mrb[0].mxu0
        %3849 = vmatprep.mubr.f32.mxu0 0.0
        %v3850 = vand.u32 %v318, 4294901760
        %3851 = vmatmul.mubr.f32.gmra.mrb[0].mxu0 %v3850
        %v3852 = vpop.f32.mrb[0].mxu0
        %v3853 = vadd.f32 %v3774, %v3852
        %v3854 = vpop.f32.mrb[0].mxu0
        %3855 = vdwg.mxu0
        %v3857 = vsel %vm313, %v3847, 0
        %v3860 = vsel %vm313, %v3853, 0
        %3862 = vmatprep.subr.mxu0 0.0
        %v3863 = vand.u32 %v311, 4294901760
        %3864 = vmatpush1.msra.mxu0 %v3863
        %3865 = vmatprep.subr.mxu0 0.0
        %v3866 = vand.u32 %v312, 4294901760
        %3867 = vmatpush1.msra.mxu0 %v3866
        %3868 = vmatprep.subr.mxu0 0.0
        %3869 = vmatpush1.msra.mxu0 0.0
        %3870 = vmatprep.subr.mxu0 0.0
        %3871 = vmatpush1.msra.mxu0 0.0
        %3872 = vmatprep.subr.mxu0 0.0
        %3873 = vmatpush1.msra.mxu0 0.0
        %3874 = vmatprep.subr.mxu0 0.0
        %3875 = vmatpush1.msra.mxu0 0.0
        %3876 = vmatprep.subr.mxu0 0.0
        %3877 = vmatpush1.msra.mxu0 0.0
        %3878 = vmatprep.subr.mxu0 0.0
        %3879 = vmatpush1.msra.mxu0 0.0
        %3880 = vmatprep.subr.mxu0 0.0
        %3881 = vmatpush1.msra.mxu0 0.0
        %3882 = vmatprep.subr.mxu0 0.0
        %3883 = vmatpush1.msra.mxu0 0.0
        %3884 = vmatprep.subr.mxu0 0.0
        %3885 = vmatpush1.msra.mxu0 0.0
        %3886 = vmatprep.subr.mxu0 0.0
        %3887 = vmatpush1.msra.mxu0 0.0
        %3888 = vmatprep.subr.mxu0 0.0
        %3889 = vmatpush1.msra.mxu0 0.0
        %3890 = vmatprep.subr.mxu0 0.0
        %3891 = vmatpush1.msra.mxu0 0.0
        %3892 = vmatprep.subr.mxu0 0.0
        %3893 = vmatpush1.msra.mxu0 0.0
        %3894 = vmatprep.subr.mxu0 0.0
        %3895 = vmatpush1.msra.mxu0 0.0
        %3896 = vmatprep.subr.mxu0 0.0
        %3897 = vmatpush1.msra.mxu0 0.0
        %3898 = vmatprep.subr.mxu0 0.0
        %3899 = vmatpush1.msra.mxu0 0.0
        %3900 = vmatprep.subr.mxu0 0.0
        %3901 = vmatpush1.msra.mxu0 0.0
        %3902 = vmatprep.subr.mxu0 0.0
        %3903 = vmatpush1.msra.mxu0 0.0
        %3904 = vmatprep.subr.mxu0 0.0
        %3905 = vmatpush1.msra.mxu0 0.0
        %3906 = vmatprep.subr.mxu0 0.0
        %3907 = vmatpush1.msra.mxu0 0.0
        %3908 = vmatprep.subr.mxu0 0.0
        %3909 = vmatpush1.msra.mxu0 0.0
        %3910 = vmatprep.subr.mxu0 0.0
        %3911 = vmatpush1.msra.mxu0 0.0
        %3912 = vmatprep.subr.mxu0 0.0
        %3913 = vmatpush1.msra.mxu0 0.0
        %3914 = vmatprep.subr.mxu0 0.0
        %3915 = vmatpush1.msra.mxu0 0.0
        %3916 = vmatprep.subr.mxu0 0.0
        %3917 = vmatpush1.msra.mxu0 0.0
        %3918 = vmatprep.subr.mxu0 0.0
        %3919 = vmatpush1.msra.mxu0 0.0
        %3920 = vmatprep.subr.mxu0 0.0
        %3921 = vmatpush1.msra.mxu0 0.0
        %3922 = vmatprep.subr.mxu0 0.0
        %3923 = vmatpush1.msra.mxu0 0.0
        %3924 = vmatprep.subr.mxu0 0.0
        %3925 = vmatpush1.msra.mxu0 0.0
        %3926 = vmatprep.subr.mxu0 0.0
        %3927 = vmatpush1.msra.mxu0 0.0
        %3928 = vmatprep.mubr.f32.mxu0 0.0
        %v3929 = vand.u32 %v3857, 4294901760
        %v3930 = vsub.f32 %v3857, %v3929
        %v3931 = vand.u32 %v3930, 4294901760
        %v3932 = vsub.f32 %v3930, %v3931
        %v3933 = vand.u32 %v3932, 4294901760
        %3934 = vmatmul.mubr.f32.gmra.mrb[0].mxu0 %v3933
        %v3935 = vpop.f32.mrb[0].mxu0
        %v3936 = vadd.f32 0.0, %v3935
        %v3937 = vpop.f32.mrb[0].mxu0
        %3938 = vmatprep.mubr.f32.mxu0 0.0
        %v3939 = vand.u32 %v3860, 4294901760
        %v3940 = vsub.f32 %v3860, %v3939
        %v3941 = vand.u32 %v3940, 4294901760
        %v3942 = vsub.f32 %v3940, %v3941
        %v3943 = vand.u32 %v3942, 4294901760
        %3944 = vmatmul.mubr.f32.gmra.mrb[0].mxu0 %v3943
        %v3945 = vpop.f32.mrb[0].mxu0
        %v3946 = vadd.f32 0.0, %v3945
        %v3947 = vpop.f32.mrb[0].mxu0
        %3948 = vdwg.mxu0
        %3949 = vmatprep.subr.mxu0 0.0
        %v3950 = vand.u32 %v311, 4294901760
        %v3951 = vsub.f32 %v311, %v3950
        %v3952 = vand.u32 %v3951, 4294901760
        %v3953 = vsub.f32 %v3951, %v3952
        %v3954 = vand.u32 %v3953, 4294901760
        %3955 = vmatpush1.msra.mxu0 %v3954
        %3956 = vmatprep.subr.mxu0 0.0
        %v3957 = vand.u32 %v312, 4294901760
        %v3958 = vsub.f32 %v312, %v3957
        %v3959 = vand.u32 %v3958, 4294901760
        %v3960 = vsub.f32 %v3958, %v3959
        %v3961 = vand.u32 %v3960, 4294901760
        %3962 = vmatpush1.msra.mxu0 %v3961
        %3963 = vmatprep.subr.mxu0 0.0
        %3964 = vmatpush1.msra.mxu0 0.0
        %3965 = vmatprep.subr.mxu0 0.0
        %3966 = vmatpush1.msra.mxu0 0.0
        %3967 = vmatprep.subr.mxu0 0.0
        %3968 = vmatpush1.msra.mxu0 0.0
        %3969 = vmatprep.subr.mxu0 0.0
        %3970 = vmatpush1.msra.mxu0 0.0
        %3971 = vmatprep.subr.mxu0 0.0
        %3972 = vmatpush1.msra.mxu0 0.0
        %3973 = vmatprep.subr.mxu0 0.0
        %3974 = vmatpush1.msra.mxu0 0.0
        %3975 = vmatprep.subr.mxu0 0.0
        %3976 = vmatpush1.msra.mxu0 0.0
        %3977 = vmatprep.subr.mxu0 0.0
        %3978 = vmatpush1.msra.mxu0 0.0
        %3979 = vmatprep.subr.mxu0 0.0
        %3980 = vmatpush1.msra.mxu0 0.0
        %3981 = vmatprep.subr.mxu0 0.0
        %3982 = vmatpush1.msra.mxu0 0.0
        %3983 = vmatprep.subr.mxu0 0.0
        %3984 = vmatpush1.msra.mxu0 0.0
        %3985 = vmatprep.subr.mxu0 0.0
        %3986 = vmatpush1.msra.mxu0 0.0
        %3987 = vmatprep.subr.mxu0 0.0
        %3988 = vmatpush1.msra.mxu0 0.0
        %3989 = vmatprep.subr.mxu0 0.0
        %3990 = vmatpush1.msra.mxu0 0.0
        %3991 = vmatprep.subr.mxu0 0.0
        %3992 = vmatpush1.msra.mxu0 0.0
        %3993 = vmatprep.subr.mxu0 0.0
        %3994 = vmatpush1.msra.mxu0 0.0
        %3995 = vmatprep.subr.mxu0 0.0
        %3996 = vmatpush1.msra.mxu0 0.0
        %3997 = vmatprep.subr.mxu0 0.0
        %3998 = vmatpush1.msra.mxu0 0.0
        %3999 = vmatprep.subr.mxu0 0.0
        %4000 = vmatpush1.msra.mxu0 0.0
        %4001 = vmatprep.subr.mxu0 0.0
        %4002 = vmatpush1.msra.mxu0 0.0
        %4003 = vmatprep.subr.mxu0 0.0
        %4004 = vmatpush1.msra.mxu0 0.0
        %4005 = vmatprep.subr.mxu0 0.0
        %4006 = vmatpush1.msra.mxu0 0.0
        %4007 = vmatprep.subr.mxu0 0.0
        %4008 = vmatpush1.msra.mxu0 0.0
        %4009 = vmatprep.subr.mxu0 0.0
        %4010 = vmatpush1.msra.mxu0 0.0
        %4011 = vmatprep.subr.mxu0 0.0
        %4012 = vmatpush1.msra.mxu0 0.0
        %4013 = vmatprep.subr.mxu0 0.0
        %4014 = vmatpush1.msra.mxu0 0.0
        %4015 = vmatprep.subr.mxu0 0.0
        %4016 = vmatpush1.msra.mxu0 0.0
        %4017 = vmatprep.subr.mxu0 0.0
        %4018 = vmatpush1.msra.mxu0 0.0
        %4019 = vmatprep.subr.mxu0 0.0
        %4020 = vmatpush1.msra.mxu0 0.0
        %4021 = vmatprep.subr.mxu0 0.0
        %4022 = vmatpush1.msra.mxu0 0.0
        %4023 = vmatprep.mubr.f32.mxu0 0.0
        %v4024 = vand.u32 %v3857, 4294901760
        %4025 = vmatmul.mubr.f32.gmra.mrb[0].mxu0 %v4024
        %v4026 = vpop.f32.mrb[0].mxu0
        %v4027 = vadd.f32 %v3936, %v4026
        %v4028 = vpop.f32.mrb[0].mxu0
        %4029 = vmatprep.mubr.f32.mxu0 0.0
        %v4030 = vand.u32 %v3860, 4294901760
        %4031 = vmatmul.mubr.f32.gmra.mrb[0].mxu0 %v4030
        %v4032 = vpop.f32.mrb[0].mxu0
        %v4033 = vadd.f32 %v3946, %v4032
        %v4034 = vpop.f32.mrb[0].mxu0
        %4035 = vdwg.mxu0
        %4036 = vmatprep.subr.mxu0 0.0
        %v4037 = vand.u32 %v311, 4294901760
        %v4038 = vsub.f32 %v311, %v4037
        %4039 = vmatpush1.msra.mxu0 %v4038
        %4040 = vmatprep.subr.mxu0 0.0
        %v4041 = vand.u32 %v312, 4294901760
        %v4042 = vsub.f32 %v312, %v4041
        %4043 = vmatpush1.msra.mxu0 %v4042
        %4044 = vmatprep.subr.mxu0 0.0
        %4045 = vmatpush1.msra.mxu0 0.0
        %4046 = vmatprep.subr.mxu0 0.0
        %4047 = vmatpush1.msra.mxu0 0.0
        %4048 = vmatprep.subr.mxu0 0.0
        %4049 = vmatpush1.msra.mxu0 0.0
        %4050 = vmatprep.subr.mxu0 0.0
        %4051 = vmatpush1.msra.mxu0 0.0
        %4052 = vmatprep.subr.mxu0 0.0
        %4053 = vmatpush1.msra.mxu0 0.0
        %4054 = vmatprep.subr.mxu0 0.0
        %4055 = vmatpush1.msra.mxu0 0.0
        %4056 = vmatprep.subr.mxu0 0.0
        %4057 = vmatpush1.msra.mxu0 0.0
        %4058 = vmatprep.subr.mxu0 0.0
        %4059 = vmatpush1.msra.mxu0 0.0
        %4060 = vmatprep.subr.mxu0 0.0
        %4061 = vmatpush1.msra.mxu0 0.0
        %4062 = vmatprep.subr.mxu0 0.0
        %4063 = vmatpush1.msra.mxu0 0.0
        %4064 = vmatprep.subr.mxu0 0.0
        %4065 = vmatpush1.msra.mxu0 0.0
        %4066 = vmatprep.subr.mxu0 0.0
        %4067 = vmatpush1.msra.mxu0 0.0
        %4068 = vmatprep.subr.mxu0 0.0
        %4069 = vmatpush1.msra.mxu0 0.0
        %4070 = vmatprep.subr.mxu0 0.0
        %4071 = vmatpush1.msra.mxu0 0.0
        %4072 = vmatprep.subr.mxu0 0.0
        %4073 = vmatpush1.msra.mxu0 0.0
        %4074 = vmatprep.subr.mxu0 0.0
        %4075 = vmatpush1.msra.mxu0 0.0
        %4076 = vmatprep.subr.mxu0 0.0
        %4077 = vmatpush1.msra.mxu0 0.0
        %4078 = vmatprep.subr.mxu0 0.0
        %4079 = vmatpush1.msra.mxu0 0.0
        %4080 = vmatprep.subr.mxu0 0.0
        %4081 = vmatpush1.msra.mxu0 0.0
        %4082 = vmatprep.subr.mxu0 0.0
        %4083 = vmatpush1.msra.mxu0 0.0
        %4084 = vmatprep.subr.mxu0 0.0
        %4085 = vmatpush1.msra.mxu0 0.0
        %4086 = vmatprep.subr.mxu0 0.0
        %4087 = vmatpush1.msra.mxu0 0.0
        %4088 = vmatprep.subr.mxu0 0.0
        %4089 = vmatpush1.msra.mxu0 0.0
        %4090 = vmatprep.subr.mxu0 0.0
        %4091 = vmatpush1.msra.mxu0 0.0
        %4092 = vmatprep.subr.mxu0 0.0
        %4093 = vmatpush1.msra.mxu0 0.0
        %4094 = vmatprep.subr.mxu0 0.0
        %4095 = vmatpush1.msra.mxu0 0.0
        %4096 = vmatprep.subr.mxu0 0.0
        %4097 = vmatpush1.msra.mxu0 0.0
        %4098 = vmatprep.subr.mxu0 0.0
        %4099 = vmatpush1.msra.mxu0 0.0
        %4100 = vmatprep.subr.mxu0 0.0
        %4101 = vmatpush1.msra.mxu0 0.0
        %4102 = vmatprep.subr.mxu0 0.0
        %4103 = vmatpush1.msra.mxu0 0.0
        %4104 = vmatprep.mubr.f32.mxu0 0.0
        %v4105 = vand.u32 %v3857, 4294901760
        %v4106 = vsub.f32 %v3857, %v4105
        %4107 = vmatmul.mubr.f32.gmra.mrb[0].mxu0 %v4106
        %v4108 = vpop.f32.mrb[0].mxu0
        %v4109 = vadd.f32 %v4027, %v4108
        %v4110 = vpop.f32.mrb[0].mxu0
        %4111 = vmatprep.mubr.f32.mxu0 0.0
        %v4112 = vand.u32 %v3860, 4294901760
        %v4113 = vsub.f32 %v3860, %v4112
        %4114 = vmatmul.mubr.f32.gmra.mrb[0].mxu0 %v4113
        %v4115 = vpop.f32.mrb[0].mxu0
        %v4116 = vadd.f32 %v4033, %v4115
        %v4117 = vpop.f32.mrb[0].mxu0
        %4118 = vdwg.mxu0
        %4119 = vmatprep.subr.mxu0 0.0
        %v4120 = vand.u32 %v311, 4294901760
        %4121 = vmatpush1.msra.mxu0 %v4120
        %4122 = vmatprep.subr.mxu0 0.0
        %v4123 = vand.u32 %v312, 4294901760
        %4124 = vmatpush1.msra.mxu0 %v4123
        %4125 = vmatprep.subr.mxu0 0.0
        %4126 = vmatpush1.msra.mxu0 0.0
        %4127 = vmatprep.subr.mxu0 0.0
        %4128 = vmatpush1.msra.mxu0 0.0
        %4129 = vmatprep.subr.mxu0 0.0
        %4130 = vmatpush1.msra.mxu0 0.0
        %4131 = vmatprep.subr.mxu0 0.0
        %4132 = vmatpush1.msra.mxu0 0.0
        %4133 = vmatprep.subr.mxu0 0.0
        %4134 = vmatpush1.msra.mxu0 0.0
        %4135 = vmatprep.subr.mxu0 0.0
        %4136 = vmatpush1.msra.mxu0 0.0
        %4137 = vmatprep.subr.mxu0 0.0
        %4138 = vmatpush1.msra.mxu0 0.0
        %4139 = vmatprep.subr.mxu0 0.0
        %4140 = vmatpush1.msra.mxu0 0.0
        %4141 = vmatprep.subr.mxu0 0.0
        %4142 = vmatpush1.msra.mxu0 0.0
        %4143 = vmatprep.subr.mxu0 0.0
        %4144 = vmatpush1.msra.mxu0 0.0
        %4145 = vmatprep.subr.mxu0 0.0
        %4146 = vmatpush1.msra.mxu0 0.0
        %4147 = vmatprep.subr.mxu0 0.0
        %4148 = vmatpush1.msra.mxu0 0.0
        %4149 = vmatprep.subr.mxu0 0.0
        %4150 = vmatpush1.msra.mxu0 0.0
        %4151 = vmatprep.subr.mxu0 0.0
        %4152 = vmatpush1.msra.mxu0 0.0
        %4153 = vmatprep.subr.mxu0 0.0
        %4154 = vmatpush1.msra.mxu0 0.0
        %4155 = vmatprep.subr.mxu0 0.0
        %4156 = vmatpush1.msra.mxu0 0.0
        %4157 = vmatprep.subr.mxu0 0.0
        %4158 = vmatpush1.msra.mxu0 0.0
        %4159 = vmatprep.subr.mxu0 0.0
        %4160 = vmatpush1.msra.mxu0 0.0
        %4161 = vmatprep.subr.mxu0 0.0
        %4162 = vmatpush1.msra.mxu0 0.0
        %4163 = vmatprep.subr.mxu0 0.0
        %4164 = vmatpush1.msra.mxu0 0.0
        %4165 = vmatprep.subr.mxu0 0.0
        %4166 = vmatpush1.msra.mxu0 0.0
        %4167 = vmatprep.subr.mxu0 0.0
        %4168 = vmatpush1.msra.mxu0 0.0
        %4169 = vmatprep.subr.mxu0 0.0
        %4170 = vmatpush1.msra.mxu0 0.0
        %4171 = vmatprep.subr.mxu0 0.0
        %4172 = vmatpush1.msra.mxu0 0.0
        %4173 = vmatprep.subr.mxu0 0.0
        %4174 = vmatpush1.msra.mxu0 0.0
        %4175 = vmatprep.subr.mxu0 0.0
        %4176 = vmatpush1.msra.mxu0 0.0
        %4177 = vmatprep.subr.mxu0 0.0
        %4178 = vmatpush1.msra.mxu0 0.0
        %4179 = vmatprep.subr.mxu0 0.0
        %4180 = vmatpush1.msra.mxu0 0.0
        %4181 = vmatprep.subr.mxu0 0.0
        %4182 = vmatpush1.msra.mxu0 0.0
        %4183 = vmatprep.subr.mxu0 0.0
        %4184 = vmatpush1.msra.mxu0 0.0
        %4185 = vmatprep.mubr.f32.mxu0 0.0
        %v4186 = vand.u32 %v3857, 4294901760
        %v4187 = vsub.f32 %v3857, %v4186
        %v4188 = vand.u32 %v4187, 4294901760
        %4189 = vmatmul.mubr.f32.gmra.mrb[0].mxu0 %v4188
        %v4190 = vpop.f32.mrb[0].mxu0
        %v4191 = vadd.f32 %v4109, %v4190
        %v4192 = vpop.f32.mrb[0].mxu0
        %4193 = vmatprep.mubr.f32.mxu0 0.0
        %v4194 = vand.u32 %v3860, 4294901760
        %v4195 = vsub.f32 %v3860, %v4194
        %v4196 = vand.u32 %v4195, 4294901760
        %4197 = vmatmul.mubr.f32.gmra.mrb[0].mxu0 %v4196
        %v4198 = vpop.f32.mrb[0].mxu0
        %v4199 = vadd.f32 %v4116, %v4198
        %v4200 = vpop.f32.mrb[0].mxu0
        %4201 = vdwg.mxu0
        %4202 = vmatprep.subr.mxu0 0.0
        %v4203 = vand.u32 %v311, 4294901760
        %v4204 = vsub.f32 %v311, %v4203
        %v4205 = vand.u32 %v4204, 4294901760
        %4206 = vmatpush1.msra.mxu0 %v4205
        %4207 = vmatprep.subr.mxu0 0.0
        %v4208 = vand.u32 %v312, 4294901760
        %v4209 = vsub.f32 %v312, %v4208
        %v4210 = vand.u32 %v4209, 4294901760
        %4211 = vmatpush1.msra.mxu0 %v4210
        %4212 = vmatprep.subr.mxu0 0.0
        %4213 = vmatpush1.msra.mxu0 0.0
        %4214 = vmatprep.subr.mxu0 0.0
        %4215 = vmatpush1.msra.mxu0 0.0
        %4216 = vmatprep.subr.mxu0 0.0
        %4217 = vmatpush1.msra.mxu0 0.0
        %4218 = vmatprep.subr.mxu0 0.0
        %4219 = vmatpush1.msra.mxu0 0.0
        %4220 = vmatprep.subr.mxu0 0.0
        %4221 = vmatpush1.msra.mxu0 0.0
        %4222 = vmatprep.subr.mxu0 0.0
        %4223 = vmatpush1.msra.mxu0 0.0
        %4224 = vmatprep.subr.mxu0 0.0
        %4225 = vmatpush1.msra.mxu0 0.0
        %4226 = vmatprep.subr.mxu0 0.0
        %4227 = vmatpush1.msra.mxu0 0.0
        %4228 = vmatprep.subr.mxu0 0.0
        %4229 = vmatpush1.msra.mxu0 0.0
        %4230 = vmatprep.subr.mxu0 0.0
        %4231 = vmatpush1.msra.mxu0 0.0
        %4232 = vmatprep.subr.mxu0 0.0
        %4233 = vmatpush1.msra.mxu0 0.0
        %4234 = vmatprep.subr.mxu0 0.0
        %4235 = vmatpush1.msra.mxu0 0.0
        %4236 = vmatprep.subr.mxu0 0.0
        %4237 = vmatpush1.msra.mxu0 0.0
        %4238 = vmatprep.subr.mxu0 0.0
        %4239 = vmatpush1.msra.mxu0 0.0
        %4240 = vmatprep.subr.mxu0 0.0
        %4241 = vmatpush1.msra.mxu0 0.0
        %4242 = vmatprep.subr.mxu0 0.0
        %4243 = vmatpush1.msra.mxu0 0.0
        %4244 = vmatprep.subr.mxu0 0.0
        %4245 = vmatpush1.msra.mxu0 0.0
        %4246 = vmatprep.subr.mxu0 0.0
        %4247 = vmatpush1.msra.mxu0 0.0
        %4248 = vmatprep.subr.mxu0 0.0
        %4249 = vmatpush1.msra.mxu0 0.0
        %4250 = vmatprep.subr.mxu0 0.0
        %4251 = vmatpush1.msra.mxu0 0.0
        %4252 = vmatprep.subr.mxu0 0.0
        %4253 = vmatpush1.msra.mxu0 0.0
        %4254 = vmatprep.subr.mxu0 0.0
        %4255 = vmatpush1.msra.mxu0 0.0
        %4256 = vmatprep.subr.mxu0 0.0
        %4257 = vmatpush1.msra.mxu0 0.0
        %4258 = vmatprep.subr.mxu0 0.0
        %4259 = vmatpush1.msra.mxu0 0.0
        %4260 = vmatprep.subr.mxu0 0.0
        %4261 = vmatpush1.msra.mxu0 0.0
        %4262 = vmatprep.subr.mxu0 0.0
        %4263 = vmatpush1.msra.mxu0 0.0
        %4264 = vmatprep.subr.mxu0 0.0
        %4265 = vmatpush1.msra.mxu0 0.0
        %4266 = vmatprep.subr.mxu0 0.0
        %4267 = vmatpush1.msra.mxu0 0.0
        %4268 = vmatprep.subr.mxu0 0.0
        %4269 = vmatpush1.msra.mxu0 0.0
        %4270 = vmatprep.subr.mxu0 0.0
        %4271 = vmatpush1.msra.mxu0 0.0
        %4272 = vmatprep.mubr.f32.mxu0 0.0
        %v4273 = vand.u32 %v3857, 4294901760
        %4274 = vmatmul.mubr.f32.gmra.mrb[0].mxu0 %v4273
        %v4275 = vpop.f32.mrb[0].mxu0
        %v4276 = vadd.f32 %v4191, %v4275
        %v4277 = vpop.f32.mrb[0].mxu0
        %4278 = vmatprep.mubr.f32.mxu0 0.0
        %v4279 = vand.u32 %v3860, 4294901760
        %4280 = vmatmul.mubr.f32.gmra.mrb[0].mxu0 %v4279
        %v4281 = vpop.f32.mrb[0].mxu0
        %v4282 = vadd.f32 %v4199, %v4281
        %v4283 = vpop.f32.mrb[0].mxu0
        %4284 = vdwg.mxu0
        %4285 = vmatprep.subr.mxu0 0.0
        %v4286 = vand.u32 %v311, 4294901760
        %4287 = vmatpush1.msra.mxu0 %v4286
        %4288 = vmatprep.subr.mxu0 0.0
        %v4289 = vand.u32 %v312, 4294901760
        %4290 = vmatpush1.msra.mxu0 %v4289
        %4291 = vmatprep.subr.mxu0 0.0
        %4292 = vmatpush1.msra.mxu0 0.0
        %4293 = vmatprep.subr.mxu0 0.0
        %4294 = vmatpush1.msra.mxu0 0.0
        %4295 = vmatprep.subr.mxu0 0.0
        %4296 = vmatpush1.msra.mxu0 0.0
        %4297 = vmatprep.subr.mxu0 0.0
        %4298 = vmatpush1.msra.mxu0 0.0
        %4299 = vmatprep.subr.mxu0 0.0
        %4300 = vmatpush1.msra.mxu0 0.0
        %4301 = vmatprep.subr.mxu0 0.0
        %4302 = vmatpush1.msra.mxu0 0.0
        %4303 = vmatprep.subr.mxu0 0.0
        %4304 = vmatpush1.msra.mxu0 0.0
        %4305 = vmatprep.subr.mxu0 0.0
        %4306 = vmatpush1.msra.mxu0 0.0
        %4307 = vmatprep.subr.mxu0 0.0
        %4308 = vmatpush1.msra.mxu0 0.0
        %4309 = vmatprep.subr.mxu0 0.0
        %4310 = vmatpush1.msra.mxu0 0.0
        %4311 = vmatprep.subr.mxu0 0.0
        %4312 = vmatpush1.msra.mxu0 0.0
        %4313 = vmatprep.subr.mxu0 0.0
        %4314 = vmatpush1.msra.mxu0 0.0
        %4315 = vmatprep.subr.mxu0 0.0
        %4316 = vmatpush1.msra.mxu0 0.0
        %4317 = vmatprep.subr.mxu0 0.0
        %4318 = vmatpush1.msra.mxu0 0.0
        %4319 = vmatprep.subr.mxu0 0.0
        %4320 = vmatpush1.msra.mxu0 0.0
        %4321 = vmatprep.subr.mxu0 0.0
        %4322 = vmatpush1.msra.mxu0 0.0
        %4323 = vmatprep.subr.mxu0 0.0
        %4324 = vmatpush1.msra.mxu0 0.0
        %4325 = vmatprep.subr.mxu0 0.0
        %4326 = vmatpush1.msra.mxu0 0.0
        %4327 = vmatprep.subr.mxu0 0.0
        %4328 = vmatpush1.msra.mxu0 0.0
        %4329 = vmatprep.subr.mxu0 0.0
        %4330 = vmatpush1.msra.mxu0 0.0
        %4331 = vmatprep.subr.mxu0 0.0
        %4332 = vmatpush1.msra.mxu0 0.0
        %4333 = vmatprep.subr.mxu0 0.0
        %4334 = vmatpush1.msra.mxu0 0.0
        %4335 = vmatprep.subr.mxu0 0.0
        %4336 = vmatpush1.msra.mxu0 0.0
        %4337 = vmatprep.subr.mxu0 0.0
        %4338 = vmatpush1.msra.mxu0 0.0
        %4339 = vmatprep.subr.mxu0 0.0
        %4340 = vmatpush1.msra.mxu0 0.0
        %4341 = vmatprep.subr.mxu0 0.0
        %4342 = vmatpush1.msra.mxu0 0.0
        %4343 = vmatprep.subr.mxu0 0.0
        %4344 = vmatpush1.msra.mxu0 0.0
        %4345 = vmatprep.subr.mxu0 0.0
        %4346 = vmatpush1.msra.mxu0 0.0
        %4347 = vmatprep.subr.mxu0 0.0
        %4348 = vmatpush1.msra.mxu0 0.0
        %4349 = vmatprep.subr.mxu0 0.0
        %4350 = vmatpush1.msra.mxu0 0.0
        %4351 = vmatprep.mubr.f32.mxu0 0.0
        %v4352 = vand.u32 %v3857, 4294901760
        %4353 = vmatmul.mubr.f32.gmra.mrb[0].mxu0 %v4352
        %v4354 = vpop.f32.mrb[0].mxu0
        %v4355 = vadd.f32 %v4276, %v4354
        %v4356 = vpop.f32.mrb[0].mxu0
        %4357 = vmatprep.mubr.f32.mxu0 0.0
        %v4358 = vand.u32 %v3860, 4294901760
        %4359 = vmatmul.mubr.f32.gmra.mrb[0].mxu0 %v4358
        %v4360 = vpop.f32.mrb[0].mxu0
        %v4361 = vadd.f32 %v4282, %v4360
        %v4362 = vpop.f32.mrb[0].mxu0
        %4363 = vdwg.mxu0
        %v4364 = vmul.f32 %v305, %v307
        %v4365 = vmul.f32 %v306, %v308
        %4366 = vmatprep.subr.mxu0 0.0
        %v4367 = vand.u32 %v4364, 4294901760
        %4368 = vmatpush1.msra.mxu0 %v4367
        %4369 = vmatprep.subr.mxu0 0.0
        %v4370 = vand.u32 %v4365, 4294901760
        %4371 = vmatpush1.msra.mxu0 %v4370
        %4372 = vmatprep.subr.mxu0 0.0
        %4373 = vmatpush1.msra.mxu0 0.0
        %4374 = vmatprep.subr.mxu0 0.0
        %4375 = vmatpush1.msra.mxu0 0.0
        %4376 = vmatprep.subr.mxu0 0.0
        %4377 = vmatpush1.msra.mxu0 0.0
        %4378 = vmatprep.subr.mxu0 0.0
        %4379 = vmatpush1.msra.mxu0 0.0
        %4380 = vmatprep.subr.mxu0 0.0
        %4381 = vmatpush1.msra.mxu0 0.0
        %4382 = vmatprep.subr.mxu0 0.0
        %4383 = vmatpush1.msra.mxu0 0.0
        %4384 = vmatprep.subr.mxu0 0.0
        %4385 = vmatpush1.msra.mxu0 0.0
        %4386 = vmatprep.subr.mxu0 0.0
        %4387 = vmatpush1.msra.mxu0 0.0
        %4388 = vmatprep.subr.mxu0 0.0
        %4389 = vmatpush1.msra.mxu0 0.0
        %4390 = vmatprep.subr.mxu0 0.0
        %4391 = vmatpush1.msra.mxu0 0.0
        %4392 = vmatprep.subr.mxu0 0.0
        %4393 = vmatpush1.msra.mxu0 0.0
        %4394 = vmatprep.subr.mxu0 0.0
        %4395 = vmatpush1.msra.mxu0 0.0
        %4396 = vmatprep.subr.mxu0 0.0
        %4397 = vmatpush1.msra.mxu0 0.0
        %4398 = vmatprep.subr.mxu0 0.0
        %4399 = vmatpush1.msra.mxu0 0.0
        %4400 = vmatprep.subr.mxu0 0.0
        %4401 = vmatpush1.msra.mxu0 0.0
        %4402 = vmatprep.subr.mxu0 0.0
        %4403 = vmatpush1.msra.mxu0 0.0
        %4404 = vmatprep.subr.mxu0 0.0
        %4405 = vmatpush1.msra.mxu0 0.0
        %4406 = vmatprep.subr.mxu0 0.0
        %4407 = vmatpush1.msra.mxu0 0.0
        %4408 = vmatprep.subr.mxu0 0.0
        %4409 = vmatpush1.msra.mxu0 0.0
        %4410 = vmatprep.subr.mxu0 0.0
        %4411 = vmatpush1.msra.mxu0 0.0
        %4412 = vmatprep.subr.mxu0 0.0
        %4413 = vmatpush1.msra.mxu0 0.0
        %4414 = vmatprep.subr.mxu0 0.0
        %4415 = vmatpush1.msra.mxu0 0.0
        %4416 = vmatprep.subr.mxu0 0.0
        %4417 = vmatpush1.msra.mxu0 0.0
        %4418 = vmatprep.subr.mxu0 0.0
        %4419 = vmatpush1.msra.mxu0 0.0
        %4420 = vmatprep.subr.mxu0 0.0
        %4421 = vmatpush1.msra.mxu0 0.0
        %4422 = vmatprep.subr.mxu0 0.0
        %4423 = vmatpush1.msra.mxu0 0.0
        %4424 = vmatprep.subr.mxu0 0.0
        %4425 = vmatpush1.msra.mxu0 0.0
        %4426 = vmatprep.subr.mxu0 0.0
        %4427 = vmatpush1.msra.mxu0 0.0
        %4428 = vmatprep.subr.mxu0 0.0
        %4429 = vmatpush1.msra.mxu0 0.0
        %4430 = vmatprep.subr.mxu0 0.0
        %4431 = vmatpush1.msra.mxu0 0.0
        %4432 = vmatprep.mubr.f32.mxu0 0.0
        %v4433 = vand.u32 %v315, 4294901760
        %v4434 = vsub.f32 %v315, %v4433
        %v4435 = vand.u32 %v4434, 4294901760
        %v4436 = vsub.f32 %v4434, %v4435
        %v4437 = vand.u32 %v4436, 4294901760
        %4438 = vmatmul.mubr.f32.gmra.mrb[0].mxu0 %v4437
        %v4439 = vpop.f32.mrb[0].mxu0
        %v4440 = vadd.f32 0.0, %v4439
        %v4441 = vpop.f32.mrb[0].mxu0
        %4442 = vmatprep.mubr.f32.mxu0 0.0
        %v4443 = vand.u32 %v318, 4294901760
        %v4444 = vsub.f32 %v318, %v4443
        %v4445 = vand.u32 %v4444, 4294901760
        %v4446 = vsub.f32 %v4444, %v4445
        %v4447 = vand.u32 %v4446, 4294901760
        %4448 = vmatmul.mubr.f32.gmra.mrb[0].mxu0 %v4447
        %v4449 = vpop.f32.mrb[0].mxu0
        %v4450 = vadd.f32 0.0, %v4449
        %v4451 = vpop.f32.mrb[0].mxu0
        %4452 = vdwg.mxu0
        %4453 = vmatprep.subr.mxu0 0.0
        %v4454 = vand.u32 %v4364, 4294901760
        %v4455 = vsub.f32 %v4364, %v4454
        %v4456 = vand.u32 %v4455, 4294901760
        %v4457 = vsub.f32 %v4455, %v4456
        %v4458 = vand.u32 %v4457, 4294901760
        %4459 = vmatpush1.msra.mxu0 %v4458
        %4460 = vmatprep.subr.mxu0 0.0
        %v4461 = vand.u32 %v4365, 4294901760
        %v4462 = vsub.f32 %v4365, %v4461
        %v4463 = vand.u32 %v4462, 4294901760
        %v4464 = vsub.f32 %v4462, %v4463
        %v4465 = vand.u32 %v4464, 4294901760
        %4466 = vmatpush1.msra.mxu0 %v4465
        %4467 = vmatprep.subr.mxu0 0.0
        %4468 = vmatpush1.msra.mxu0 0.0
        %4469 = vmatprep.subr.mxu0 0.0
        %4470 = vmatpush1.msra.mxu0 0.0
        %4471 = vmatprep.subr.mxu0 0.0
        %4472 = vmatpush1.msra.mxu0 0.0
        %4473 = vmatprep.subr.mxu0 0.0
        %4474 = vmatpush1.msra.mxu0 0.0
        %4475 = vmatprep.subr.mxu0 0.0
        %4476 = vmatpush1.msra.mxu0 0.0
        %4477 = vmatprep.subr.mxu0 0.0
        %4478 = vmatpush1.msra.mxu0 0.0
        %4479 = vmatprep.subr.mxu0 0.0
        %4480 = vmatpush1.msra.mxu0 0.0
        %4481 = vmatprep.subr.mxu0 0.0
        %4482 = vmatpush1.msra.mxu0 0.0
        %4483 = vmatprep.subr.mxu0 0.0
        %4484 = vmatpush1.msra.mxu0 0.0
        %4485 = vmatprep.subr.mxu0 0.0
        %4486 = vmatpush1.msra.mxu0 0.0
        %4487 = vmatprep.subr.mxu0 0.0
        %4488 = vmatpush1.msra.mxu0 0.0
        %4489 = vmatprep.subr.mxu0 0.0
        %4490 = vmatpush1.msra.mxu0 0.0
        %4491 = vmatprep.subr.mxu0 0.0
        %4492 = vmatpush1.msra.mxu0 0.0
        %4493 = vmatprep.subr.mxu0 0.0
        %4494 = vmatpush1.msra.mxu0 0.0
        %4495 = vmatprep.subr.mxu0 0.0
        %4496 = vmatpush1.msra.mxu0 0.0
        %4497 = vmatprep.subr.mxu0 0.0
        %4498 = vmatpush1.msra.mxu0 0.0
        %4499 = vmatprep.subr.mxu0 0.0
        %4500 = vmatpush1.msra.mxu0 0.0
        %4501 = vmatprep.subr.mxu0 0.0
        %4502 = vmatpush1.msra.mxu0 0.0
        %4503 = vmatprep.subr.mxu0 0.0
        %4504 = vmatpush1.msra.mxu0 0.0
        %4505 = vmatprep.subr.mxu0 0.0
        %4506 = vmatpush1.msra.mxu0 0.0
        %4507 = vmatprep.subr.mxu0 0.0
        %4508 = vmatpush1.msra.mxu0 0.0
        %4509 = vmatprep.subr.mxu0 0.0
        %4510 = vmatpush1.msra.mxu0 0.0
        %4511 = vmatprep.subr.mxu0 0.0
        %4512 = vmatpush1.msra.mxu0 0.0
        %4513 = vmatprep.subr.mxu0 0.0
        %4514 = vmatpush1.msra.mxu0 0.0
        %4515 = vmatprep.subr.mxu0 0.0
        %4516 = vmatpush1.msra.mxu0 0.0
        %4517 = vmatprep.subr.mxu0 0.0
        %4518 = vmatpush1.msra.mxu0 0.0
        %4519 = vmatprep.subr.mxu0 0.0
        %4520 = vmatpush1.msra.mxu0 0.0
        %4521 = vmatprep.subr.mxu0 0.0
        %4522 = vmatpush1.msra.mxu0 0.0
        %4523 = vmatprep.subr.mxu0 0.0
        %4524 = vmatpush1.msra.mxu0 0.0
        %4525 = vmatprep.subr.mxu0 0.0
        %4526 = vmatpush1.msra.mxu0 0.0
        %4527 = vmatprep.mubr.f32.mxu0 0.0
        %v4528 = vand.u32 %v315, 4294901760
        %4529 = vmatmul.mubr.f32.gmra.mrb[0].mxu0 %v4528
        %v4530 = vpop.f32.mrb[0].mxu0
        %v4531 = vadd.f32 %v4440, %v4530
        %v4532 = vpop.f32.mrb[0].mxu0
        %4533 = vmatprep.mubr.f32.mxu0 0.0
        %v4534 = vand.u32 %v318, 4294901760
        %4535 = vmatmul.mubr.f32.gmra.mrb[0].mxu0 %v4534
        %v4536 = vpop.f32.mrb[0].mxu0
        %v4537 = vadd.f32 %v4450, %v4536
        %v4538 = vpop.f32.mrb[0].mxu0
        %4539 = vdwg.mxu0
        %4540 = vmatprep.subr.mxu0 0.0
        %v4541 = vand.u32 %v4364, 4294901760
        %v4542 = vsub.f32 %v4364, %v4541
        %4543 = vmatpush1.msra.mxu0 %v4542
        %4544 = vmatprep.subr.mxu0 0.0
        %v4545 = vand.u32 %v4365, 4294901760
        %v4546 = vsub.f32 %v4365, %v4545
        %4547 = vmatpush1.msra.mxu0 %v4546
        %4548 = vmatprep.subr.mxu0 0.0
        %4549 = vmatpush1.msra.mxu0 0.0
        %4550 = vmatprep.subr.mxu0 0.0
        %4551 = vmatpush1.msra.mxu0 0.0
        %4552 = vmatprep.subr.mxu0 0.0
        %4553 = vmatpush1.msra.mxu0 0.0
        %4554 = vmatprep.subr.mxu0 0.0
        %4555 = vmatpush1.msra.mxu0 0.0
        %4556 = vmatprep.subr.mxu0 0.0
        %4557 = vmatpush1.msra.mxu0 0.0
        %4558 = vmatprep.subr.mxu0 0.0
        %4559 = vmatpush1.msra.mxu0 0.0
        %4560 = vmatprep.subr.mxu0 0.0
        %4561 = vmatpush1.msra.mxu0 0.0
        %4562 = vmatprep.subr.mxu0 0.0
        %4563 = vmatpush1.msra.mxu0 0.0
        %4564 = vmatprep.subr.mxu0 0.0
        %4565 = vmatpush1.msra.mxu0 0.0
        %4566 = vmatprep.subr.mxu0 0.0
        %4567 = vmatpush1.msra.mxu0 0.0
        %4568 = vmatprep.subr.mxu0 0.0
        %4569 = vmatpush1.msra.mxu0 0.0
        %4570 = vmatprep.subr.mxu0 0.0
        %4571 = vmatpush1.msra.mxu0 0.0
        %4572 = vmatprep.subr.mxu0 0.0
        %4573 = vmatpush1.msra.mxu0 0.0
        %4574 = vmatprep.subr.mxu0 0.0
        %4575 = vmatpush1.msra.mxu0 0.0
        %4576 = vmatprep.subr.mxu0 0.0
        %4577 = vmatpush1.msra.mxu0 0.0
        %4578 = vmatprep.subr.mxu0 0.0
        %4579 = vmatpush1.msra.mxu0 0.0
        %4580 = vmatprep.subr.mxu0 0.0
        %4581 = vmatpush1.msra.mxu0 0.0
        %4582 = vmatprep.subr.mxu0 0.0
        %4583 = vmatpush1.msra.mxu0 0.0
        %4584 = vmatprep.subr.mxu0 0.0
        %4585 = vmatpush1.msra.mxu0 0.0
        %4586 = vmatprep.subr.mxu0 0.0
        %4587 = vmatpush1.msra.mxu0 0.0
        %4588 = vmatprep.subr.mxu0 0.0
        %4589 = vmatpush1.msra.mxu0 0.0
        %4590 = vmatprep.subr.mxu0 0.0
        %4591 = vmatpush1.msra.mxu0 0.0
        %4592 = vmatprep.subr.mxu0 0.0
        %4593 = vmatpush1.msra.mxu0 0.0
        %4594 = vmatprep.subr.mxu0 0.0
        %4595 = vmatpush1.msra.mxu0 0.0
        %4596 = vmatprep.subr.mxu0 0.0
        %4597 = vmatpush1.msra.mxu0 0.0
        %4598 = vmatprep.subr.mxu0 0.0
        %4599 = vmatpush1.msra.mxu0 0.0
        %4600 = vmatprep.subr.mxu0 0.0
        %4601 = vmatpush1.msra.mxu0 0.0
        %4602 = vmatprep.subr.mxu0 0.0
        %4603 = vmatpush1.msra.mxu0 0.0
        %4604 = vmatprep.subr.mxu0 0.0
        %4605 = vmatpush1.msra.mxu0 0.0
        %4606 = vmatprep.subr.mxu0 0.0
        %4607 = vmatpush1.msra.mxu0 0.0
        %4608 = vmatprep.mubr.f32.mxu0 0.0
        %v4609 = vand.u32 %v315, 4294901760
        %v4610 = vsub.f32 %v315, %v4609
        %4611 = vmatmul.mubr.f32.gmra.mrb[0].mxu0 %v4610
        %v4612 = vpop.f32.mrb[0].mxu0
        %v4613 = vadd.f32 %v4531, %v4612
        %v4614 = vpop.f32.mrb[0].mxu0
        %4615 = vmatprep.mubr.f32.mxu0 0.0
        %v4616 = vand.u32 %v318, 4294901760
        %v4617 = vsub.f32 %v318, %v4616
        %4618 = vmatmul.mubr.f32.gmra.mrb[0].mxu0 %v4617
        %v4619 = vpop.f32.mrb[0].mxu0
        %v4620 = vadd.f32 %v4537, %v4619
        %v4621 = vpop.f32.mrb[0].mxu0
        %4622 = vdwg.mxu0
        %4623 = vmatprep.subr.mxu0 0.0
        %v4624 = vand.u32 %v4364, 4294901760
        %4625 = vmatpush1.msra.mxu0 %v4624
        %4626 = vmatprep.subr.mxu0 0.0
        %v4627 = vand.u32 %v4365, 4294901760
        %4628 = vmatpush1.msra.mxu0 %v4627
        %4629 = vmatprep.subr.mxu0 0.0
        %4630 = vmatpush1.msra.mxu0 0.0
        %4631 = vmatprep.subr.mxu0 0.0
        %4632 = vmatpush1.msra.mxu0 0.0
        %4633 = vmatprep.subr.mxu0 0.0
        %4634 = vmatpush1.msra.mxu0 0.0
        %4635 = vmatprep.subr.mxu0 0.0
        %4636 = vmatpush1.msra.mxu0 0.0
        %4637 = vmatprep.subr.mxu0 0.0
        %4638 = vmatpush1.msra.mxu0 0.0
        %4639 = vmatprep.subr.mxu0 0.0
        %4640 = vmatpush1.msra.mxu0 0.0
        %4641 = vmatprep.subr.mxu0 0.0
        %4642 = vmatpush1.msra.mxu0 0.0
        %4643 = vmatprep.subr.mxu0 0.0
        %4644 = vmatpush1.msra.mxu0 0.0
        %4645 = vmatprep.subr.mxu0 0.0
        %4646 = vmatpush1.msra.mxu0 0.0
        %4647 = vmatprep.subr.mxu0 0.0
        %4648 = vmatpush1.msra.mxu0 0.0
        %4649 = vmatprep.subr.mxu0 0.0
        %4650 = vmatpush1.msra.mxu0 0.0
        %4651 = vmatprep.subr.mxu0 0.0
        %4652 = vmatpush1.msra.mxu0 0.0
        %4653 = vmatprep.subr.mxu0 0.0
        %4654 = vmatpush1.msra.mxu0 0.0
        %4655 = vmatprep.subr.mxu0 0.0
        %4656 = vmatpush1.msra.mxu0 0.0
        %4657 = vmatprep.subr.mxu0 0.0
        %4658 = vmatpush1.msra.mxu0 0.0
        %4659 = vmatprep.subr.mxu0 0.0
        %4660 = vmatpush1.msra.mxu0 0.0
        %4661 = vmatprep.subr.mxu0 0.0
        %4662 = vmatpush1.msra.mxu0 0.0
        %4663 = vmatprep.subr.mxu0 0.0
        %4664 = vmatpush1.msra.mxu0 0.0
        %4665 = vmatprep.subr.mxu0 0.0
        %4666 = vmatpush1.msra.mxu0 0.0
        %4667 = vmatprep.subr.mxu0 0.0
        %4668 = vmatpush1.msra.mxu0 0.0
        %4669 = vmatprep.subr.mxu0 0.0
        %4670 = vmatpush1.msra.mxu0 0.0
        %4671 = vmatprep.subr.mxu0 0.0
        %4672 = vmatpush1.msra.mxu0 0.0
        %4673 = vmatprep.subr.mxu0 0.0
        %4674 = vmatpush1.msra.mxu0 0.0
        %4675 = vmatprep.subr.mxu0 0.0
        %4676 = vmatpush1.msra.mxu0 0.0
        %4677 = vmatprep.subr.mxu0 0.0
        %4678 = vmatpush1.msra.mxu0 0.0
        %4679 = vmatprep.subr.mxu0 0.0
        %4680 = vmatpush1.msra.mxu0 0.0
        %4681 = vmatprep.subr.mxu0 0.0
        %4682 = vmatpush1.msra.mxu0 0.0
        %4683 = vmatprep.subr.mxu0 0.0
        %4684 = vmatpush1.msra.mxu0 0.0
        %4685 = vmatprep.subr.mxu0 0.0
        %4686 = vmatpush1.msra.mxu0 0.0
        %4687 = vmatprep.subr.mxu0 0.0
        %4688 = vmatpush1.msra.mxu0 0.0
        %4689 = vmatprep.mubr.f32.mxu0 0.0
        %v4690 = vand.u32 %v315, 4294901760
        %v4691 = vsub.f32 %v315, %v4690
        %v4692 = vand.u32 %v4691, 4294901760
        %4693 = vmatmul.mubr.f32.gmra.mrb[0].mxu0 %v4692
        %v4694 = vpop.f32.mrb[0].mxu0
        %v4695 = vadd.f32 %v4613, %v4694
        %v4696 = vpop.f32.mrb[0].mxu0
        %4697 = vmatprep.mubr.f32.mxu0 0.0
        %v4698 = vand.u32 %v318, 4294901760
        %v4699 = vsub.f32 %v318, %v4698
        %v4700 = vand.u32 %v4699, 4294901760
        %4701 = vmatmul.mubr.f32.gmra.mrb[0].mxu0 %v4700
        %v4702 = vpop.f32.mrb[0].mxu0
        %v4703 = vadd.f32 %v4620, %v4702
        %v4704 = vpop.f32.mrb[0].mxu0
        %4705 = vdwg.mxu0
        %4706 = vmatprep.subr.mxu0 0.0
        %v4707 = vand.u32 %v4364, 4294901760
        %v4708 = vsub.f32 %v4364, %v4707
        %v4709 = vand.u32 %v4708, 4294901760
        %4710 = vmatpush1.msra.mxu0 %v4709
        %4711 = vmatprep.subr.mxu0 0.0
        %v4712 = vand.u32 %v4365, 4294901760
        %v4713 = vsub.f32 %v4365, %v4712
        %v4714 = vand.u32 %v4713, 4294901760
        %4715 = vmatpush1.msra.mxu0 %v4714
        %4716 = vmatprep.subr.mxu0 0.0
        %4717 = vmatpush1.msra.mxu0 0.0
        %4718 = vmatprep.subr.mxu0 0.0
        %4719 = vmatpush1.msra.mxu0 0.0
        %4720 = vmatprep.subr.mxu0 0.0
        %4721 = vmatpush1.msra.mxu0 0.0
        %4722 = vmatprep.subr.mxu0 0.0
        %4723 = vmatpush1.msra.mxu0 0.0
        %4724 = vmatprep.subr.mxu0 0.0
        %4725 = vmatpush1.msra.mxu0 0.0
        %4726 = vmatprep.subr.mxu0 0.0
        %4727 = vmatpush1.msra.mxu0 0.0
        %4728 = vmatprep.subr.mxu0 0.0
        %4729 = vmatpush1.msra.mxu0 0.0
        %4730 = vmatprep.subr.mxu0 0.0
        %4731 = vmatpush1.msra.mxu0 0.0
        %4732 = vmatprep.subr.mxu0 0.0
        %4733 = vmatpush1.msra.mxu0 0.0
        %4734 = vmatprep.subr.mxu0 0.0
        %4735 = vmatpush1.msra.mxu0 0.0
        %4736 = vmatprep.subr.mxu0 0.0
        %4737 = vmatpush1.msra.mxu0 0.0
        %4738 = vmatprep.subr.mxu0 0.0
        %4739 = vmatpush1.msra.mxu0 0.0
        %4740 = vmatprep.subr.mxu0 0.0
        %4741 = vmatpush1.msra.mxu0 0.0
        %4742 = vmatprep.subr.mxu0 0.0
        %4743 = vmatpush1.msra.mxu0 0.0
        %4744 = vmatprep.subr.mxu0 0.0
        %4745 = vmatpush1.msra.mxu0 0.0
        %4746 = vmatprep.subr.mxu0 0.0
        %4747 = vmatpush1.msra.mxu0 0.0
        %4748 = vmatprep.subr.mxu0 0.0
        %4749 = vmatpush1.msra.mxu0 0.0
        %4750 = vmatprep.subr.mxu0 0.0
        %4751 = vmatpush1.msra.mxu0 0.0
        %4752 = vmatprep.subr.mxu0 0.0
        %4753 = vmatpush1.msra.mxu0 0.0
        %4754 = vmatprep.subr.mxu0 0.0
        %4755 = vmatpush1.msra.mxu0 0.0
        %4756 = vmatprep.subr.mxu0 0.0
        %4757 = vmatpush1.msra.mxu0 0.0
        %4758 = vmatprep.subr.mxu0 0.0
        %4759 = vmatpush1.msra.mxu0 0.0
        %4760 = vmatprep.subr.mxu0 0.0
        %4761 = vmatpush1.msra.mxu0 0.0
        %4762 = vmatprep.subr.mxu0 0.0
        %4763 = vmatpush1.msra.mxu0 0.0
        %4764 = vmatprep.subr.mxu0 0.0
        %4765 = vmatpush1.msra.mxu0 0.0
        %4766 = vmatprep.subr.mxu0 0.0
        %4767 = vmatpush1.msra.mxu0 0.0
        %4768 = vmatprep.subr.mxu0 0.0
        %4769 = vmatpush1.msra.mxu0 0.0
        %4770 = vmatprep.subr.mxu0 0.0
        %4771 = vmatpush1.msra.mxu0 0.0
        %4772 = vmatprep.subr.mxu0 0.0
        %4773 = vmatpush1.msra.mxu0 0.0
        %4774 = vmatprep.subr.mxu0 0.0
        %4775 = vmatpush1.msra.mxu0 0.0
        %4776 = vmatprep.mubr.f32.mxu0 0.0
        %v4777 = vand.u32 %v315, 4294901760
        %4778 = vmatmul.mubr.f32.gmra.mrb[0].mxu0 %v4777
        %v4779 = vpop.f32.mrb[0].mxu0
        %v4780 = vadd.f32 %v4695, %v4779
        %v4781 = vpop.f32.mrb[0].mxu0
        %4782 = vmatprep.mubr.f32.mxu0 0.0
        %v4783 = vand.u32 %v318, 4294901760
        %4784 = vmatmul.mubr.f32.gmra.mrb[0].mxu0 %v4783
        %v4785 = vpop.f32.mrb[0].mxu0
        %v4786 = vadd.f32 %v4703, %v4785
        %v4787 = vpop.f32.mrb[0].mxu0
        %4788 = vdwg.mxu0
        %4789 = vmatprep.subr.mxu0 0.0
        %v4790 = vand.u32 %v4364, 4294901760
        %4791 = vmatpush1.msra.mxu0 %v4790
        %4792 = vmatprep.subr.mxu0 0.0
        %v4793 = vand.u32 %v4365, 4294901760
        %4794 = vmatpush1.msra.mxu0 %v4793
        %4795 = vmatprep.subr.mxu0 0.0
        %4796 = vmatpush1.msra.mxu0 0.0
        %4797 = vmatprep.subr.mxu0 0.0
        %4798 = vmatpush1.msra.mxu0 0.0
        %4799 = vmatprep.subr.mxu0 0.0
        %4800 = vmatpush1.msra.mxu0 0.0
        %4801 = vmatprep.subr.mxu0 0.0
        %4802 = vmatpush1.msra.mxu0 0.0
        %4803 = vmatprep.subr.mxu0 0.0
        %4804 = vmatpush1.msra.mxu0 0.0
        %4805 = vmatprep.subr.mxu0 0.0
        %4806 = vmatpush1.msra.mxu0 0.0
        %4807 = vmatprep.subr.mxu0 0.0
        %4808 = vmatpush1.msra.mxu0 0.0
        %4809 = vmatprep.subr.mxu0 0.0
        %4810 = vmatpush1.msra.mxu0 0.0
        %4811 = vmatprep.subr.mxu0 0.0
        %4812 = vmatpush1.msra.mxu0 0.0
        %4813 = vmatprep.subr.mxu0 0.0
        %4814 = vmatpush1.msra.mxu0 0.0
        %4815 = vmatprep.subr.mxu0 0.0
        %4816 = vmatpush1.msra.mxu0 0.0
        %4817 = vmatprep.subr.mxu0 0.0
        %4818 = vmatpush1.msra.mxu0 0.0
        %4819 = vmatprep.subr.mxu0 0.0
        %4820 = vmatpush1.msra.mxu0 0.0
        %4821 = vmatprep.subr.mxu0 0.0
        %4822 = vmatpush1.msra.mxu0 0.0
        %4823 = vmatprep.subr.mxu0 0.0
        %4824 = vmatpush1.msra.mxu0 0.0
        %4825 = vmatprep.subr.mxu0 0.0
        %4826 = vmatpush1.msra.mxu0 0.0
        %4827 = vmatprep.subr.mxu0 0.0
        %4828 = vmatpush1.msra.mxu0 0.0
        %4829 = vmatprep.subr.mxu0 0.0
        %4830 = vmatpush1.msra.mxu0 0.0
        %4831 = vmatprep.subr.mxu0 0.0
        %4832 = vmatpush1.msra.mxu0 0.0
        %4833 = vmatprep.subr.mxu0 0.0
        %4834 = vmatpush1.msra.mxu0 0.0
        %4835 = vmatprep.subr.mxu0 0.0
        %4836 = vmatpush1.msra.mxu0 0.0
        %4837 = vmatprep.subr.mxu0 0.0
        %4838 = vmatpush1.msra.mxu0 0.0
        %4839 = vmatprep.subr.mxu0 0.0
        %4840 = vmatpush1.msra.mxu0 0.0
        %4841 = vmatprep.subr.mxu0 0.0
        %4842 = vmatpush1.msra.mxu0 0.0
        %4843 = vmatprep.subr.mxu0 0.0
        %4844 = vmatpush1.msra.mxu0 0.0
        %4845 = vmatprep.subr.mxu0 0.0
        %4846 = vmatpush1.msra.mxu0 0.0
        %4847 = vmatprep.subr.mxu0 0.0
        %4848 = vmatpush1.msra.mxu0 0.0
        %4849 = vmatprep.subr.mxu0 0.0
        %4850 = vmatpush1.msra.mxu0 0.0
        %4851 = vmatprep.subr.mxu0 0.0
        %4852 = vmatpush1.msra.mxu0 0.0
        %4853 = vmatprep.subr.mxu0 0.0
        %4854 = vmatpush1.msra.mxu0 0.0
        %4855 = vmatprep.mubr.f32.mxu0 0.0
        %v4856 = vand.u32 %v315, 4294901760
        %4857 = vmatmul.mubr.f32.gmra.mrb[0].mxu0 %v4856
        %v4858 = vpop.f32.mrb[0].mxu0
        %v4859 = vadd.f32 %v4780, %v4858
        %v4860 = vpop.f32.mrb[0].mxu0
        %4861 = vmatprep.mubr.f32.mxu0 0.0
        %v4862 = vand.u32 %v318, 4294901760
        %4863 = vmatmul.mubr.f32.gmra.mrb[0].mxu0 %v4862
        %v4864 = vpop.f32.mrb[0].mxu0
        %v4865 = vadd.f32 %v4786, %v4864
        %v4866 = vpop.f32.mrb[0].mxu0
        %4867 = vdwg.mxu0
        %v4869 = vsel %vm313, %v4859, 0
        %v4872 = vsel %vm313, %v4865, 0
        %4874 = vmatprep.subr.mxu0 0.0
        %v4875 = vand.u32 %v311, 4294901760
        %4876 = vmatpush1.msra.mxu0 %v4875
        %4877 = vmatprep.subr.mxu0 0.0
        %v4878 = vand.u32 %v312, 4294901760
        %4879 = vmatpush1.msra.mxu0 %v4878
        %4880 = vmatprep.subr.mxu0 0.0
        %4881 = vmatpush1.msra.mxu0 0.0
        %4882 = vmatprep.subr.mxu0 0.0
        %4883 = vmatpush1.msra.mxu0 0.0
        %4884 = vmatprep.subr.mxu0 0.0
        %4885 = vmatpush1.msra.mxu0 0.0
        %4886 = vmatprep.subr.mxu0 0.0
        %4887 = vmatpush1.msra.mxu0 0.0
        %4888 = vmatprep.subr.mxu0 0.0
        %4889 = vmatpush1.msra.mxu0 0.0
        %4890 = vmatprep.subr.mxu0 0.0
        %4891 = vmatpush1.msra.mxu0 0.0
        %4892 = vmatprep.subr.mxu0 0.0
        %4893 = vmatpush1.msra.mxu0 0.0
        %4894 = vmatprep.subr.mxu0 0.0
        %4895 = vmatpush1.msra.mxu0 0.0
        %4896 = vmatprep.subr.mxu0 0.0
        %4897 = vmatpush1.msra.mxu0 0.0
        %4898 = vmatprep.subr.mxu0 0.0
        %4899 = vmatpush1.msra.mxu0 0.0
        %4900 = vmatprep.subr.mxu0 0.0
        %4901 = vmatpush1.msra.mxu0 0.0
        %4902 = vmatprep.subr.mxu0 0.0
        %4903 = vmatpush1.msra.mxu0 0.0
        %4904 = vmatprep.subr.mxu0 0.0
        %4905 = vmatpush1.msra.mxu0 0.0
        %4906 = vmatprep.subr.mxu0 0.0
        %4907 = vmatpush1.msra.mxu0 0.0
        %4908 = vmatprep.subr.mxu0 0.0
        %4909 = vmatpush1.msra.mxu0 0.0
        %4910 = vmatprep.subr.mxu0 0.0
        %4911 = vmatpush1.msra.mxu0 0.0
        %4912 = vmatprep.subr.mxu0 0.0
        %4913 = vmatpush1.msra.mxu0 0.0
        %4914 = vmatprep.subr.mxu0 0.0
        %4915 = vmatpush1.msra.mxu0 0.0
        %4916 = vmatprep.subr.mxu0 0.0
        %4917 = vmatpush1.msra.mxu0 0.0
        %4918 = vmatprep.subr.mxu0 0.0
        %4919 = vmatpush1.msra.mxu0 0.0
        %4920 = vmatprep.subr.mxu0 0.0
        %4921 = vmatpush1.msra.mxu0 0.0
        %4922 = vmatprep.subr.mxu0 0.0
        %4923 = vmatpush1.msra.mxu0 0.0
        %4924 = vmatprep.subr.mxu0 0.0
        %4925 = vmatpush1.msra.mxu0 0.0
        %4926 = vmatprep.subr.mxu0 0.0
        %4927 = vmatpush1.msra.mxu0 0.0
        %4928 = vmatprep.subr.mxu0 0.0
        %4929 = vmatpush1.msra.mxu0 0.0
        %4930 = vmatprep.subr.mxu0 0.0
        %4931 = vmatpush1.msra.mxu0 0.0
        %4932 = vmatprep.subr.mxu0 0.0
        %4933 = vmatpush1.msra.mxu0 0.0
        %4934 = vmatprep.subr.mxu0 0.0
        %4935 = vmatpush1.msra.mxu0 0.0
        %4936 = vmatprep.subr.mxu0 0.0
        %4937 = vmatpush1.msra.mxu0 0.0
        %4938 = vmatprep.subr.mxu0 0.0
        %4939 = vmatpush1.msra.mxu0 0.0
        %4940 = vmatprep.mubr.f32.mxu0 0.0
        %v4941 = vand.u32 %v4869, 4294901760
        %v4942 = vsub.f32 %v4869, %v4941
        %v4943 = vand.u32 %v4942, 4294901760
        %v4944 = vsub.f32 %v4942, %v4943
        %v4945 = vand.u32 %v4944, 4294901760
        %4946 = vmatmul.mubr.f32.gmra.mrb[0].mxu0 %v4945
        %v4947 = vpop.f32.mrb[0].mxu0
        %v4948 = vadd.f32 0.0, %v4947
        %v4949 = vpop.f32.mrb[0].mxu0
        %4950 = vmatprep.mubr.f32.mxu0 0.0
        %v4951 = vand.u32 %v4872, 4294901760
        %v4952 = vsub.f32 %v4872, %v4951
        %v4953 = vand.u32 %v4952, 4294901760
        %v4954 = vsub.f32 %v4952, %v4953
        %v4955 = vand.u32 %v4954, 4294901760
        %4956 = vmatmul.mubr.f32.gmra.mrb[0].mxu0 %v4955
        %v4957 = vpop.f32.mrb[0].mxu0
        %v4958 = vadd.f32 0.0, %v4957
        %v4959 = vpop.f32.mrb[0].mxu0
        %4960 = vdwg.mxu0
        %4961 = vmatprep.subr.mxu0 0.0
        %v4962 = vand.u32 %v311, 4294901760
        %v4963 = vsub.f32 %v311, %v4962
        %v4964 = vand.u32 %v4963, 4294901760
        %v4965 = vsub.f32 %v4963, %v4964
        %v4966 = vand.u32 %v4965, 4294901760
        %4967 = vmatpush1.msra.mxu0 %v4966
        %4968 = vmatprep.subr.mxu0 0.0
        %v4969 = vand.u32 %v312, 4294901760
        %v4970 = vsub.f32 %v312, %v4969
        %v4971 = vand.u32 %v4970, 4294901760
        %v4972 = vsub.f32 %v4970, %v4971
        %v4973 = vand.u32 %v4972, 4294901760
        %4974 = vmatpush1.msra.mxu0 %v4973
        %4975 = vmatprep.subr.mxu0 0.0
        %4976 = vmatpush1.msra.mxu0 0.0
        %4977 = vmatprep.subr.mxu0 0.0
        %4978 = vmatpush1.msra.mxu0 0.0
        %4979 = vmatprep.subr.mxu0 0.0
        %4980 = vmatpush1.msra.mxu0 0.0
        %4981 = vmatprep.subr.mxu0 0.0
        %4982 = vmatpush1.msra.mxu0 0.0
        %4983 = vmatprep.subr.mxu0 0.0
        %4984 = vmatpush1.msra.mxu0 0.0
        %4985 = vmatprep.subr.mxu0 0.0
        %4986 = vmatpush1.msra.mxu0 0.0
        %4987 = vmatprep.subr.mxu0 0.0
        %4988 = vmatpush1.msra.mxu0 0.0
        %4989 = vmatprep.subr.mxu0 0.0
        %4990 = vmatpush1.msra.mxu0 0.0
        %4991 = vmatprep.subr.mxu0 0.0
        %4992 = vmatpush1.msra.mxu0 0.0
        %4993 = vmatprep.subr.mxu0 0.0
        %4994 = vmatpush1.msra.mxu0 0.0
        %4995 = vmatprep.subr.mxu0 0.0
        %4996 = vmatpush1.msra.mxu0 0.0
        %4997 = vmatprep.subr.mxu0 0.0
        %4998 = vmatpush1.msra.mxu0 0.0
        %4999 = vmatprep.subr.mxu0 0.0
        %5000 = vmatpush1.msra.mxu0 0.0
        %5001 = vmatprep.subr.mxu0 0.0
        %5002 = vmatpush1.msra.mxu0 0.0
        %5003 = vmatprep.subr.mxu0 0.0
        %5004 = vmatpush1.msra.mxu0 0.0
        %5005 = vmatprep.subr.mxu0 0.0
        %5006 = vmatpush1.msra.mxu0 0.0
        %5007 = vmatprep.subr.mxu0 0.0
        %5008 = vmatpush1.msra.mxu0 0.0
        %5009 = vmatprep.subr.mxu0 0.0
        %5010 = vmatpush1.msra.mxu0 0.0
        %5011 = vmatprep.subr.mxu0 0.0
        %5012 = vmatpush1.msra.mxu0 0.0
        %5013 = vmatprep.subr.mxu0 0.0
        %5014 = vmatpush1.msra.mxu0 0.0
        %5015 = vmatprep.subr.mxu0 0.0
        %5016 = vmatpush1.msra.mxu0 0.0
        %5017 = vmatprep.subr.mxu0 0.0
        %5018 = vmatpush1.msra.mxu0 0.0
        %5019 = vmatprep.subr.mxu0 0.0
        %5020 = vmatpush1.msra.mxu0 0.0
        %5021 = vmatprep.subr.mxu0 0.0
        %5022 = vmatpush1.msra.mxu0 0.0
        %5023 = vmatprep.subr.mxu0 0.0
        %5024 = vmatpush1.msra.mxu0 0.0
        %5025 = vmatprep.subr.mxu0 0.0
        %5026 = vmatpush1.msra.mxu0 0.0
        %5027 = vmatprep.subr.mxu0 0.0
        %5028 = vmatpush1.msra.mxu0 0.0
        %5029 = vmatprep.subr.mxu0 0.0
        %5030 = vmatpush1.msra.mxu0 0.0
        %5031 = vmatprep.subr.mxu0 0.0
        %5032 = vmatpush1.msra.mxu0 0.0
        %5033 = vmatprep.subr.mxu0 0.0
        %5034 = vmatpush1.msra.mxu0 0.0
        %5035 = vmatprep.mubr.f32.mxu0 0.0
        %v5036 = vand.u32 %v4869, 4294901760
        %5037 = vmatmul.mubr.f32.gmra.mrb[0].mxu0 %v5036
        %v5038 = vpop.f32.mrb[0].mxu0
        %v5039 = vadd.f32 %v4948, %v5038
        %v5040 = vpop.f32.mrb[0].mxu0
        %5041 = vmatprep.mubr.f32.mxu0 0.0
        %v5042 = vand.u32 %v4872, 4294901760
        %5043 = vmatmul.mubr.f32.gmra.mrb[0].mxu0 %v5042
        %v5044 = vpop.f32.mrb[0].mxu0
        %v5045 = vadd.f32 %v4958, %v5044
        %v5046 = vpop.f32.mrb[0].mxu0
        %5047 = vdwg.mxu0
        %5048 = vmatprep.subr.mxu0 0.0
        %v5049 = vand.u32 %v311, 4294901760
        %v5050 = vsub.f32 %v311, %v5049
        %5051 = vmatpush1.msra.mxu0 %v5050
        %5052 = vmatprep.subr.mxu0 0.0
        %v5053 = vand.u32 %v312, 4294901760
        %v5054 = vsub.f32 %v312, %v5053
        %5055 = vmatpush1.msra.mxu0 %v5054
        %5056 = vmatprep.subr.mxu0 0.0
        %5057 = vmatpush1.msra.mxu0 0.0
        %5058 = vmatprep.subr.mxu0 0.0
        %5059 = vmatpush1.msra.mxu0 0.0
        %5060 = vmatprep.subr.mxu0 0.0
        %5061 = vmatpush1.msra.mxu0 0.0
        %5062 = vmatprep.subr.mxu0 0.0
        %5063 = vmatpush1.msra.mxu0 0.0
        %5064 = vmatprep.subr.mxu0 0.0
        %5065 = vmatpush1.msra.mxu0 0.0
        %5066 = vmatprep.subr.mxu0 0.0
        %5067 = vmatpush1.msra.mxu0 0.0
        %5068 = vmatprep.subr.mxu0 0.0
        %5069 = vmatpush1.msra.mxu0 0.0
        %5070 = vmatprep.subr.mxu0 0.0
        %5071 = vmatpush1.msra.mxu0 0.0
        %5072 = vmatprep.subr.mxu0 0.0
        %5073 = vmatpush1.msra.mxu0 0.0
        %5074 = vmatprep.subr.mxu0 0.0
        %5075 = vmatpush1.msra.mxu0 0.0
        %5076 = vmatprep.subr.mxu0 0.0
        %5077 = vmatpush1.msra.mxu0 0.0
        %5078 = vmatprep.subr.mxu0 0.0
        %5079 = vmatpush1.msra.mxu0 0.0
        %5080 = vmatprep.subr.mxu0 0.0
        %5081 = vmatpush1.msra.mxu0 0.0
        %5082 = vmatprep.subr.mxu0 0.0
        %5083 = vmatpush1.msra.mxu0 0.0
        %5084 = vmatprep.subr.mxu0 0.0
        %5085 = vmatpush1.msra.mxu0 0.0
        %5086 = vmatprep.subr.mxu0 0.0
        %5087 = vmatpush1.msra.mxu0 0.0
        %5088 = vmatprep.subr.mxu0 0.0
        %5089 = vmatpush1.msra.mxu0 0.0
        %5090 = vmatprep.subr.mxu0 0.0
        %5091 = vmatpush1.msra.mxu0 0.0
        %5092 = vmatprep.subr.mxu0 0.0
        %5093 = vmatpush1.msra.mxu0 0.0
        %5094 = vmatprep.subr.mxu0 0.0
        %5095 = vmatpush1.msra.mxu0 0.0
        %5096 = vmatprep.subr.mxu0 0.0
        %5097 = vmatpush1.msra.mxu0 0.0
        %5098 = vmatprep.subr.mxu0 0.0
        %5099 = vmatpush1.msra.mxu0 0.0
        %5100 = vmatprep.subr.mxu0 0.0
        %5101 = vmatpush1.msra.mxu0 0.0
        %5102 = vmatprep.subr.mxu0 0.0
        %5103 = vmatpush1.msra.mxu0 0.0
        %5104 = vmatprep.subr.mxu0 0.0
        %5105 = vmatpush1.msra.mxu0 0.0
        %5106 = vmatprep.subr.mxu0 0.0
        %5107 = vmatpush1.msra.mxu0 0.0
        %5108 = vmatprep.subr.mxu0 0.0
        %5109 = vmatpush1.msra.mxu0 0.0
        %5110 = vmatprep.subr.mxu0 0.0
        %5111 = vmatpush1.msra.mxu0 0.0
        %5112 = vmatprep.subr.mxu0 0.0
        %5113 = vmatpush1.msra.mxu0 0.0
        %5114 = vmatprep.subr.mxu0 0.0
        %5115 = vmatpush1.msra.mxu0 0.0
        %5116 = vmatprep.mubr.f32.mxu0 0.0
        %v5117 = vand.u32 %v4869, 4294901760
        %v5118 = vsub.f32 %v4869, %v5117
        %5119 = vmatmul.mubr.f32.gmra.mrb[0].mxu0 %v5118
        %v5120 = vpop.f32.mrb[0].mxu0
        %v5121 = vadd.f32 %v5039, %v5120
        %v5122 = vpop.f32.mrb[0].mxu0
        %5123 = vmatprep.mubr.f32.mxu0 0.0
        %v5124 = vand.u32 %v4872, 4294901760
        %v5125 = vsub.f32 %v4872, %v5124
        %5126 = vmatmul.mubr.f32.gmra.mrb[0].mxu0 %v5125
        %v5127 = vpop.f32.mrb[0].mxu0
        %v5128 = vadd.f32 %v5045, %v5127
        %v5129 = vpop.f32.mrb[0].mxu0
        %5130 = vdwg.mxu0
        %5131 = vmatprep.subr.mxu0 0.0
        %v5132 = vand.u32 %v311, 4294901760
        %5133 = vmatpush1.msra.mxu0 %v5132
        %5134 = vmatprep.subr.mxu0 0.0
        %v5135 = vand.u32 %v312, 4294901760
        %5136 = vmatpush1.msra.mxu0 %v5135
        %5137 = vmatprep.subr.mxu0 0.0
        %5138 = vmatpush1.msra.mxu0 0.0
        %5139 = vmatprep.subr.mxu0 0.0
        %5140 = vmatpush1.msra.mxu0 0.0
        %5141 = vmatprep.subr.mxu0 0.0
        %5142 = vmatpush1.msra.mxu0 0.0
        %5143 = vmatprep.subr.mxu0 0.0
        %5144 = vmatpush1.msra.mxu0 0.0
        %5145 = vmatprep.subr.mxu0 0.0
        %5146 = vmatpush1.msra.mxu0 0.0
        %5147 = vmatprep.subr.mxu0 0.0
        %5148 = vmatpush1.msra.mxu0 0.0
        %5149 = vmatprep.subr.mxu0 0.0
        %5150 = vmatpush1.msra.mxu0 0.0
        %5151 = vmatprep.subr.mxu0 0.0
        %5152 = vmatpush1.msra.mxu0 0.0
        %5153 = vmatprep.subr.mxu0 0.0
        %5154 = vmatpush1.msra.mxu0 0.0
        %5155 = vmatprep.subr.mxu0 0.0
        %5156 = vmatpush1.msra.mxu0 0.0
        %5157 = vmatprep.subr.mxu0 0.0
        %5158 = vmatpush1.msra.mxu0 0.0
        %5159 = vmatprep.subr.mxu0 0.0
        %5160 = vmatpush1.msra.mxu0 0.0
        %5161 = vmatprep.subr.mxu0 0.0
        %5162 = vmatpush1.msra.mxu0 0.0
        %5163 = vmatprep.subr.mxu0 0.0
        %5164 = vmatpush1.msra.mxu0 0.0
        %5165 = vmatprep.subr.mxu0 0.0
        %5166 = vmatpush1.msra.mxu0 0.0
        %5167 = vmatprep.subr.mxu0 0.0
        %5168 = vmatpush1.msra.mxu0 0.0
        %5169 = vmatprep.subr.mxu0 0.0
        %5170 = vmatpush1.msra.mxu0 0.0
        %5171 = vmatprep.subr.mxu0 0.0
        %5172 = vmatpush1.msra.mxu0 0.0
        %5173 = vmatprep.subr.mxu0 0.0
        %5174 = vmatpush1.msra.mxu0 0.0
        %5175 = vmatprep.subr.mxu0 0.0
        %5176 = vmatpush1.msra.mxu0 0.0
        %5177 = vmatprep.subr.mxu0 0.0
        %5178 = vmatpush1.msra.mxu0 0.0
        %5179 = vmatprep.subr.mxu0 0.0
        %5180 = vmatpush1.msra.mxu0 0.0
        %5181 = vmatprep.subr.mxu0 0.0
        %5182 = vmatpush1.msra.mxu0 0.0
        %5183 = vmatprep.subr.mxu0 0.0
        %5184 = vmatpush1.msra.mxu0 0.0
        %5185 = vmatprep.subr.mxu0 0.0
        %5186 = vmatpush1.msra.mxu0 0.0
        %5187 = vmatprep.subr.mxu0 0.0
        %5188 = vmatpush1.msra.mxu0 0.0
        %5189 = vmatprep.subr.mxu0 0.0
        %5190 = vmatpush1.msra.mxu0 0.0
        %5191 = vmatprep.subr.mxu0 0.0
        %5192 = vmatpush1.msra.mxu0 0.0
        %5193 = vmatprep.subr.mxu0 0.0
        %5194 = vmatpush1.msra.mxu0 0.0
        %5195 = vmatprep.subr.mxu0 0.0
        %5196 = vmatpush1.msra.mxu0 0.0
        %5197 = vmatprep.mubr.f32.mxu0 0.0
        %v5198 = vand.u32 %v4869, 4294901760
        %v5199 = vsub.f32 %v4869, %v5198
        %v5200 = vand.u32 %v5199, 4294901760
        %5201 = vmatmul.mubr.f32.gmra.mrb[0].mxu0 %v5200
        %v5202 = vpop.f32.mrb[0].mxu0
        %v5203 = vadd.f32 %v5121, %v5202
        %v5204 = vpop.f32.mrb[0].mxu0
        %5205 = vmatprep.mubr.f32.mxu0 0.0
        %v5206 = vand.u32 %v4872, 4294901760
        %v5207 = vsub.f32 %v4872, %v5206
        %v5208 = vand.u32 %v5207, 4294901760
        %5209 = vmatmul.mubr.f32.gmra.mrb[0].mxu0 %v5208
        %v5210 = vpop.f32.mrb[0].mxu0
        %v5211 = vadd.f32 %v5128, %v5210
        %v5212 = vpop.f32.mrb[0].mxu0
        %5213 = vdwg.mxu0
        %5214 = vmatprep.subr.mxu0 0.0
        %v5215 = vand.u32 %v311, 4294901760
        %v5216 = vsub.f32 %v311, %v5215
        %v5217 = vand.u32 %v5216, 4294901760
        %5218 = vmatpush1.msra.mxu0 %v5217
        %5219 = vmatprep.subr.mxu0 0.0
        %v5220 = vand.u32 %v312, 4294901760
        %v5221 = vsub.f32 %v312, %v5220
        %v5222 = vand.u32 %v5221, 4294901760
        %5223 = vmatpush1.msra.mxu0 %v5222
        %5224 = vmatprep.subr.mxu0 0.0
        %5225 = vmatpush1.msra.mxu0 0.0
        %5226 = vmatprep.subr.mxu0 0.0
        %5227 = vmatpush1.msra.mxu0 0.0
        %5228 = vmatprep.subr.mxu0 0.0
        %5229 = vmatpush1.msra.mxu0 0.0
        %5230 = vmatprep.subr.mxu0 0.0
        %5231 = vmatpush1.msra.mxu0 0.0
        %5232 = vmatprep.subr.mxu0 0.0
        %5233 = vmatpush1.msra.mxu0 0.0
        %5234 = vmatprep.subr.mxu0 0.0
        %5235 = vmatpush1.msra.mxu0 0.0
        %5236 = vmatprep.subr.mxu0 0.0
        %5237 = vmatpush1.msra.mxu0 0.0
        %5238 = vmatprep.subr.mxu0 0.0
        %5239 = vmatpush1.msra.mxu0 0.0
        %5240 = vmatprep.subr.mxu0 0.0
        %5241 = vmatpush1.msra.mxu0 0.0
        %5242 = vmatprep.subr.mxu0 0.0
        %5243 = vmatpush1.msra.mxu0 0.0
        %5244 = vmatprep.subr.mxu0 0.0
        %5245 = vmatpush1.msra.mxu0 0.0
        %5246 = vmatprep.subr.mxu0 0.0
        %5247 = vmatpush1.msra.mxu0 0.0
        %5248 = vmatprep.subr.mxu0 0.0
        %5249 = vmatpush1.msra.mxu0 0.0
        %5250 = vmatprep.subr.mxu0 0.0
        %5251 = vmatpush1.msra.mxu0 0.0
        %5252 = vmatprep.subr.mxu0 0.0
        %5253 = vmatpush1.msra.mxu0 0.0
        %5254 = vmatprep.subr.mxu0 0.0
        %5255 = vmatpush1.msra.mxu0 0.0
        %5256 = vmatprep.subr.mxu0 0.0
        %5257 = vmatpush1.msra.mxu0 0.0
        %5258 = vmatprep.subr.mxu0 0.0
        %5259 = vmatpush1.msra.mxu0 0.0
        %5260 = vmatprep.subr.mxu0 0.0
        %5261 = vmatpush1.msra.mxu0 0.0
        %5262 = vmatprep.subr.mxu0 0.0
        %5263 = vmatpush1.msra.mxu0 0.0
        %5264 = vmatprep.subr.mxu0 0.0
        %5265 = vmatpush1.msra.mxu0 0.0
        %5266 = vmatprep.subr.mxu0 0.0
        %5267 = vmatpush1.msra.mxu0 0.0
        %5268 = vmatprep.subr.mxu0 0.0
        %5269 = vmatpush1.msra.mxu0 0.0
        %5270 = vmatprep.subr.mxu0 0.0
        %5271 = vmatpush1.msra.mxu0 0.0
        %5272 = vmatprep.subr.mxu0 0.0
        %5273 = vmatpush1.msra.mxu0 0.0
        %5274 = vmatprep.subr.mxu0 0.0
        %5275 = vmatpush1.msra.mxu0 0.0
        %5276 = vmatprep.subr.mxu0 0.0
        %5277 = vmatpush1.msra.mxu0 0.0
        %5278 = vmatprep.subr.mxu0 0.0
        %5279 = vmatpush1.msra.mxu0 0.0
        %5280 = vmatprep.subr.mxu0 0.0
        %5281 = vmatpush1.msra.mxu0 0.0
        %5282 = vmatprep.subr.mxu0 0.0
        %5283 = vmatpush1.msra.mxu0 0.0
        %5284 = vmatprep.mubr.f32.mxu0 0.0
        %v5285 = vand.u32 %v4869, 4294901760
        %5286 = vmatmul.mubr.f32.gmra.mrb[0].mxu0 %v5285
        %v5287 = vpop.f32.mrb[0].mxu0
        %v5288 = vadd.f32 %v5203, %v5287
        %v5289 = vpop.f32.mrb[0].mxu0
        %5290 = vmatprep.mubr.f32.mxu0 0.0
        %v5291 = vand.u32 %v4872, 4294901760
        %5292 = vmatmul.mubr.f32.gmra.mrb[0].mxu0 %v5291
        %v5293 = vpop.f32.mrb[0].mxu0
        %v5294 = vadd.f32 %v5211, %v5293
        %v5295 = vpop.f32.mrb[0].mxu0
        %5296 = vdwg.mxu0
        %5297 = vmatprep.subr.mxu0 0.0
        %v5298 = vand.u32 %v311, 4294901760
        %5299 = vmatpush1.msra.mxu0 %v5298
        %5300 = vmatprep.subr.mxu0 0.0
        %v5301 = vand.u32 %v312, 4294901760
        %5302 = vmatpush1.msra.mxu0 %v5301
        %5303 = vmatprep.subr.mxu0 0.0
        %5304 = vmatpush1.msra.mxu0 0.0
        %5305 = vmatprep.subr.mxu0 0.0
        %5306 = vmatpush1.msra.mxu0 0.0
        %5307 = vmatprep.subr.mxu0 0.0
        %5308 = vmatpush1.msra.mxu0 0.0
        %5309 = vmatprep.subr.mxu0 0.0
        %5310 = vmatpush1.msra.mxu0 0.0
        %5311 = vmatprep.subr.mxu0 0.0
        %5312 = vmatpush1.msra.mxu0 0.0
        %5313 = vmatprep.subr.mxu0 0.0
        %5314 = vmatpush1.msra.mxu0 0.0
        %5315 = vmatprep.subr.mxu0 0.0
        %5316 = vmatpush1.msra.mxu0 0.0
        %5317 = vmatprep.subr.mxu0 0.0
        %5318 = vmatpush1.msra.mxu0 0.0
        %5319 = vmatprep.subr.mxu0 0.0
        %5320 = vmatpush1.msra.mxu0 0.0
        %5321 = vmatprep.subr.mxu0 0.0
        %5322 = vmatpush1.msra.mxu0 0.0
        %5323 = vmatprep.subr.mxu0 0.0
        %5324 = vmatpush1.msra.mxu0 0.0
        %5325 = vmatprep.subr.mxu0 0.0
        %5326 = vmatpush1.msra.mxu0 0.0
        %5327 = vmatprep.subr.mxu0 0.0
        %5328 = vmatpush1.msra.mxu0 0.0
        %5329 = vmatprep.subr.mxu0 0.0
        %5330 = vmatpush1.msra.mxu0 0.0
        %5331 = vmatprep.subr.mxu0 0.0
        %5332 = vmatpush1.msra.mxu0 0.0
        %5333 = vmatprep.subr.mxu0 0.0
        %5334 = vmatpush1.msra.mxu0 0.0
        %5335 = vmatprep.subr.mxu0 0.0
        %5336 = vmatpush1.msra.mxu0 0.0
        %5337 = vmatprep.subr.mxu0 0.0
        %5338 = vmatpush1.msra.mxu0 0.0
        %5339 = vmatprep.subr.mxu0 0.0
        %5340 = vmatpush1.msra.mxu0 0.0
        %5341 = vmatprep.subr.mxu0 0.0
        %5342 = vmatpush1.msra.mxu0 0.0
        %5343 = vmatprep.subr.mxu0 0.0
        %5344 = vmatpush1.msra.mxu0 0.0
        %5345 = vmatprep.subr.mxu0 0.0
        %5346 = vmatpush1.msra.mxu0 0.0
        %5347 = vmatprep.subr.mxu0 0.0
        %5348 = vmatpush1.msra.mxu0 0.0
        %5349 = vmatprep.subr.mxu0 0.0
        %5350 = vmatpush1.msra.mxu0 0.0
        %5351 = vmatprep.subr.mxu0 0.0
        %5352 = vmatpush1.msra.mxu0 0.0
        %5353 = vmatprep.subr.mxu0 0.0
        %5354 = vmatpush1.msra.mxu0 0.0
        %5355 = vmatprep.subr.mxu0 0.0
        %5356 = vmatpush1.msra.mxu0 0.0
        %5357 = vmatprep.subr.mxu0 0.0
        %5358 = vmatpush1.msra.mxu0 0.0
        %5359 = vmatprep.subr.mxu0 0.0
        %5360 = vmatpush1.msra.mxu0 0.0
        %5361 = vmatprep.subr.mxu0 0.0
        %5362 = vmatpush1.msra.mxu0 0.0
        %5363 = vmatprep.mubr.f32.mxu0 0.0
        %v5364 = vand.u32 %v4869, 4294901760
        %5365 = vmatmul.mubr.f32.gmra.mrb[0].mxu0 %v5364
        %v5366 = vpop.f32.mrb[0].mxu0
        %v5367 = vadd.f32 %v5288, %v5366
        %v5368 = vpop.f32.mrb[0].mxu0
        %5369 = vmatprep.mubr.f32.mxu0 0.0
        %v5370 = vand.u32 %v4872, 4294901760
        %5371 = vmatmul.mubr.f32.gmra.mrb[0].mxu0 %v5370
        %v5372 = vpop.f32.mrb[0].mxu0
        %v5373 = vadd.f32 %v5294, %v5372
        %v5374 = vpop.f32.mrb[0].mxu0
        %5375 = vdwg.mxu0
        %v5376 = vmul.f32 %v1321, %v1321
        %v5377 = vmul.f32 %v1327, %v1327
        %v5378 = vmul.f32 %v2331, %v2331
        %v5379 = vmul.f32 %v2337, %v2337
        %v5380 = vmul.f32 %v1321, %v2331
        %v5381 = vmul.f32 %v1327, %v2337
        %v5382 = vsub.f32 %v3343, %v5376
        %v5383 = vsub.f32 %v3349, %v5377
        %v5384 = vsub.f32 %v4355, %v5378
        %v5385 = vsub.f32 %v4361, %v5379
        %v5386 = vsub.f32 %v5367, %v5380
        %v5387 = vsub.f32 %v5373, %v5381
        %v5388 = vmul.f32 %v5380, 2.0
        %v5389 = vmul.f32 %v5381, 2.0
        %v5390 = vadd.f32 %v5388, 0.0001
        %v5391 = vadd.f32 %v5389, 0.0001
        %v5392 = vmul.f32 %v5386, 2.0
        %v5393 = vmul.f32 %v5387, 2.0
        %v5394 = vadd.f32 %v5392, 0.0009
        %v5395 = vadd.f32 %v5393, 0.0009
        %v5396 = vmul.f32 %v5390, %v5394
        %v5397 = vmul.f32 %v5391, %v5395
        %v5398 = vadd.f32 %v5376, %v5378
        %v5399 = vadd.f32 %v5377, %v5379
        %v5400 = vadd.f32 %v5398, 0.0001
        %v5401 = vadd.f32 %v5399, 0.0001
        %v5402 = vadd.f32 %v5382, %v5384
        %v5403 = vadd.f32 %v5383, %v5385
        %v5404 = vadd.f32 %v5402, 0.0009
        %v5405 = vadd.f32 %v5403, 0.0009
        %v5406 = vmul.f32 %v5400, %v5404
        %v5407 = vmul.f32 %v5401, %v5405
        %v5408 = vrcp.pop %v5406
        %v5409 = vmul.f32 %v5396, %v5408
        %v5410 = vrcp.pop %v5407
        %v5411 = vmul.f32 %v5397, %v5410
        %p5412 = scmp.eq.s32.totalorder %s30, 0
        // Predicated region
        $region53: #{tpu_custom_call.1} parent=35 // pred_check
          %p5413 = pneg %p5412
        $region54: #{tpu_custom_call.1} parent=35 // pred_check_branch
          %5415 = sbr.rel (%p5413) target = $region56
        $region55: #{tpu_custom_call.1} parent=35 // pred_region
          %5416 = vst.msk [vmem:[%s304] sm:$0xff] %vm313, 0.0
          %5417 = vst.msk [vmem:[%s304 + $0x8] sm:$0xff] %vm313, 0.0
        $region56: #{tpu_custom_call.1} parent=35 // pred_fallthru
          _
        %v5418 = vld [vmem:[%s304] sm:$0xff]
        %v5419 = vld [vmem:[%s304 + $0x8] sm:$0xff]
        %v5420 = vadd.f32 %v5418, %v5409
        %v5421 = vadd.f32 %v5419, %v5411
        %5422 = vst.msk [vmem:[%s304] sm:$0xff] %vm313, %v5420
        %5423 = vst.msk [vmem:[%s304 + $0x8] sm:$0xff] %vm313, %v5421
        %p5424 = scmp.eq.s32.totalorder %s30, 3
        // Predicated region
        $region57: #{tpu_custom_call.1} parent=35 // pred_check
          %p5425 = pneg %p5424
        $region58: #{tpu_custom_call.1} parent=35 // pred_check_branch
          %5427 = sbr.rel (%p5425) target = $region60
        $region59: #{tpu_custom_call.1} parent=35 // pred_region
          %v5428 = vld [vmem:[%s304] sm:$0xff]
          %v5429 = vld [vmem:[%s304 + $0x8] sm:$0xff]
          %v5430 = vmul.f32 %v5428, 0.25
          %v5431 = vmul.f32 %v5429, 0.25
          %5432 = vst.msk [vmem:[%s304] sm:$0xff] %vm313, %v5430
          %5433 = vst.msk [vmem:[%s304 + $0x8] sm:$0xff] %vm313, %v5431
        $region60: #{tpu_custom_call.1} parent=35 // pred_fallthru
          _
        %s5434 = sand.u32 %s143, 1
        %s5435 = scalar_lea.sflag [#allocation4], %s5434
        %s5436 = sand.u32 %s143, 1
        %s5437 = smul.addr %s5436, 16
        %s5438 = scalar_lea.vmem [#allocation10], %s5437
        // Predicated region
        $region61: #{tpu_custom_call.1} parent=35 // pred_check
          %p5439 = pneg %p153
        $region62: #{tpu_custom_call.1} parent=35 // pred_check_branch
          %5441 = sbr.rel (%p5439) target = $region64
        $region63: #{tpu_custom_call.1} parent=35 // pred_region
          %s5443 = ssub.s32 256, 256
          %5444 = vsyncadd %s5435, %s5443
          %s5445 = smul.addr %s29, 2
          %s5446 = smul.addr %s5445, 128
          %s5447 = scalar_lea.hbm %s4, %s5446
          %s5448 = sshll.u32 %s5438, 4
          %s5449 = int_to_ptr.vmem [resolvable:$true] %s5448
          %5454 = dma.vmem_to_hbm [thread:$0]  %s5449, 256, %s5447, %s5435, 128, 128, 8
        $region64: #{tpu_custom_call.1} parent=35 // pred_fallthru
          _
      $region36: #{tpu_custom_call.1} parent=5 // pred_fallthru
        _
      %p5455 = scmp.le.s32.totalorder 2, %s20
      // Predicated region
      $region65: #{tpu_custom_call.1} parent=5 // pred_check
        %p5456 = pneg %p5455
      $region66: #{tpu_custom_call.1} parent=5 // pred_check_branch
        %5458 = sbr.rel (%p5456) target = $region68
      $region67: #{tpu_custom_call.1} parent=5 // pred_region
        %s5459 = ssub.s32 %s20, 2
        // Predicated region
        $region69: #{tpu_custom_call.1} parent=67 // pred_check
          %p5460 = pneg %p159
        $region70: #{tpu_custom_call.1} parent=67 // pred_check_branch
          %5462 = sbr.rel (%p5460) target = $region72
        $region71: #{tpu_custom_call.1} parent=67 // pred_region
          %s5463 = sand.u32 %s144, 1
          %s5464 = scalar_lea.sflag [#allocation4], %s5463
          %s5465 = sand.u32 %s144, 1
          %s5466 = smul.addr %s5465, 16
          %s5467 = scalar_lea.vmem [#allocation10], %s5466
          %5468 = dma.done %s5464, 256
        $region72: #{tpu_custom_call.1} parent=67 // pred_fallthru
          _
      $region68: #{tpu_custom_call.1} parent=5 // pred_fallthru
        _
    $region6: #{tpu_custom_call.1} parent=1 // loop_footer
      %s24 = sadd.s32 1, %s20
    $region7: #{tpu_custom_call.1} parent=1 // loop_footer_branch
      %19 = sbr.rel target = $region3
    $region8: #{tpu_custom_call.1} parent=1 // loop_exit
      _
    %5469 = vsyncpa [#allocation3], 1
    %s5470 = scalar_lea.sflag [#allocation3], 1
    %5471 = vsyncpa %s5470, 1
    %5472 = vsyncpa [#allocation6], 1
    %s5473 = scalar_lea.sflag [#allocation6], 1
    %5474 = vsyncpa %s5473, 1
    %5475 = vsyncpa [#allocation9], 1
    %5476 = vsyncpa [#allocation4], 1
    %s5477 = scalar_lea.sflag [#allocation4], 1
    %5478 = vsyncpa %s5477, 1

</llo_original>
